<compile_context>
chip_gen: v6e
topology: v6e:2x2x1
jax: 0.10.0
libtpu: 0.0.40
codegen_flags: <defaults>
</compile_context>

<pallas_src>
import functools

import jax
import jax.numpy as jnp
import numpy as np
from jax.experimental import pallas as pl
from jax.experimental.pallas import tpu as pltpu


# -----------------------------------------------------------------------------
# Fused Pallas kernel
# -----------------------------------------------------------------------------
def _bilstm_fused_kernel(x_ref, *refs, S, B, E, H, n_layers, max_fert):
    """Fused bidirectional multi-layer LSTM + linear/sigmoid head.

    ref order (after x_ref, which is the (S*B, E) embedded input):
      per layer l:  wih (D_l, 8H), whh_blk (2H, 8H), bias (1, 8H)
                    (D_0 = E, D_l = 2H for l >= 1)
      head:         w_out (1, 2H), b_out (1, 1)
      output:       o (1, S*B)
      scratch:      slab_a, slab_b  each (S*B, 2H)   (layer-parity ping-pong)

    Gate column layout everywhere: [i_f i_b | f_f f_b | g_f g_b | o_f o_b].
    """
    H2 = 2 * H
    H8 = 8 * H

    # ---- unpack refs --------------------------------------------------------
    pos = 0
    layer_refs = []
    for _ in range(n_layers):
        layer_refs.append(refs[pos:pos + 3])
        pos += 3
    wout_ref, bout_ref = refs[pos], refs[pos + 1]
    pos += 2
    o_ref = refs[pos]
    pos += 1
    slabs = (refs[pos], refs[pos + 1])

    # Lane masks over the (B, 8H) gate row, hoisted out of the time loop.
    lane = jax.lax.broadcasted_iota(jnp.int32, (B, H8), 1)
    g_mask = (lane >= 4 * H) & (lane < 6 * H)     # cell-candidate (g) block
    fwd_mask = (lane % H2) < H                     # fwd half of every gate block

    def cell(pre_t, h, c, whh_ref):
        # Single (B,2H)@(2H,8H) matmul covers both directions (block-diag Whh).
        gates = pre_t + jnp.dot(h, whh_ref[...],
                                preferred_element_type=jnp.float32)
        # One EUP sweep: tanh for g; sigmoid(x)=0.5*(1+tanh(x/2)) for i,f,o.
        th = jnp.tanh(jnp.where(g_mask, gates, 0.5 * gates))
        act = jnp.where(g_mask, th, 0.5 * (th + 1.0))
        i_g = act[:, 0 * H2:1 * H2]
        f_g = act[:, 1 * H2:2 * H2]
        g_g = act[:, 2 * H2:3 * H2]
        o_g = act[:, 3 * H2:4 * H2]
        c_new = f_g * c + i_g * g_g
        h_new = o_g * jnp.tanh(c_new)
        return h_new, c_new

    # ---- stacked bidirectional layers --------------------------------------
    for layer in range(n_layers):
        wih_ref, whh_ref, bias_ref = layer_refs[layer]
        out_slab = slabs[layer % 2]

        # Hoisted input projection for ALL timesteps and BOTH directions:
        # one (S*B, D) @ (D, 8H) matmul.
        inp = x_ref[...] if layer == 0 else slabs[(layer - 1) % 2][...]
        pre = (jnp.dot(inp, wih_ref[...], preferred_element_type=jnp.float32)
               + bias_ref[...])
        # Static per-timestep row blocks (off the recurrence critical path).
        pre_rows = [pre[t * B:(t + 1) * B, :] for t in range(S)]

        h = jnp.zeros((B, H2), jnp.float32)
        c = jnp.zeros((B, H2), jnp.float32)

        # TODO(synk): inter-layer dropout (p=0.2) is training-only; identity here.
        for t in range(S):                 # S is small & static: full unroll
            tb = S - 1 - t
            # fwd columns use time t, bwd columns use time S-1-t.
            pre_step = jnp.where(fwd_mask, pre_rows[t], pre_rows[tb])
            h, c = cell(pre_step, h, c, whh_ref)
            out_slab[t * B:(t + 1) * B, :H] = h[:, :H]     # fwd output @ t
            out_slab[tb * B:(tb + 1) * B, H:] = h[:, H:]   # bwd output @ tb

    # ---- hidden2score head (VPU/XLU reduction, lane-dense output) ----------
    feat = slabs[(n_layers - 1) % 2][...]                  # (S*B, 2H)
    z = jnp.sum(feat * wout_ref[...], axis=-1)             # (S*B,)
    o_ref[...] = max_fert * jax.nn.sigmoid(z[None, :] + bout_ref[...])


# -----------------------------------------------------------------------------
# Wrapper-side weight preparation (gate-column interleave + block-diag Whh)
# -----------------------------------------------------------------------------
def _interleave_gate_cols(wf, wb, H):
    """(4H, D), (4H, D) -> (D, 8H) with columns [i_f i_b | f_f f_b | g_f g_b | o_f o_b]."""
    cols = []
    for k in range(4):
        cols.append(wf[k * H:(k + 1) * H].T)
        cols.append(wb[k * H:(k + 1) * H].T)
    return jnp.concatenate(cols, axis=1)


def _interleave_gate_bias(bf, bb, H):
    parts = []
    for k in range(4):
        parts.append(bf[k * H:(k + 1) * H])
        parts.append(bb[k * H:(k + 1) * H])
    return jnp.concatenate(parts).reshape(1, 8 * H)


def _block_diag_whh(whh_f, whh_b, H):
    """(4H,H),(4H,H) -> (2H, 8H) block-diagonal in the interleaved gate layout."""
    wf_t = whh_f.T          # (H, 4H), gate order [i|f|g|o]
    wb_t = whh_b.T
    blk = jnp.zeros((2 * H, 8 * H), jnp.float32)
    for k in range(4):
        blk = blk.at[:H, k * 2 * H:k * 2 * H + H].set(wf_t[:, k * H:(k + 1) * H])
        blk = blk.at[H:, k * 2 * H + H:(k + 1) * 2 * H].set(wb_t[:, k * H:(k + 1) * H])
    return blk


# -----------------------------------------------------------------------------
# Model wrapper (embedding lookup + weight prep as glue)
# -----------------------------------------------------------------------------
def _bilstm_regressor_forward(params, batch_sents, max_fert, n_layers):
    B, S = batch_sents.shape
    E = params["embedding"].shape[1]
    H = params["lstm"][0]["w_hh_f"].shape[1]

    wembs = jnp.take(params["embedding"], batch_sents, axis=0)      # (B, S, E)
    # PyTorch: wembs.view(S, B, -1) is a pure reshape; flattening the first two
    # dims gives the same (S*B, E) row order either way.
    x2d = wembs.reshape(S * B, E)

    flat = [x2d]
    for lw in params["lstm"]:
        flat.append(_interleave_gate_cols(lw["w_ih_f"], lw["w_ih_b"], H))
        flat.append(_block_diag_whh(lw["w_hh_f"], lw["w_hh_b"], H))
        flat.append(_interleave_gate_bias(lw["b_ih_f"] + lw["b_hh_f"],
                                          lw["b_ih_b"] + lw["b_hh_b"], H))
    flat.append(params["w_out"].reshape(1, 2 * H))    # columns already [fwd|bwd]
    flat.append(params["b_out"].reshape(1, 1))

    kernel = functools.partial(_bilstm_fused_kernel, S=S, B=B, E=E, H=H,
                               n_layers=n_layers, max_fert=float(max_fert))

    # Advisory cost estimate for XLA scheduling around the custom call.
    flops = (2 * S * B * E * 8 * H                              # layer-0 x-proj
             + 2 * S * B * 2 * H * 8 * H * (n_layers - 1)       # layer>=1 x-proj
             + 2 * B * 2 * H * 8 * H * S * n_layers             # recurrence
             + 12 * S * B * 8 * H * n_layers)                   # elementwise
    transcendentals = S * n_layers * B * 10 * H + S * B
    bytes_accessed = (sum(int(np.prod(a.shape)) * 4 for a in flat)
                      + S * B * 4)

    vmem_spec = pl.BlockSpec(memory_space=pltpu.MemorySpace.VMEM)
    # TODO(synk): for large batch on v7x, add a parallel batch grid axis so both
    # TensorCores are used; at B=2 a single program is the right choice.
    scores = pl.pallas_call(
        kernel,
        out_shape=jax.ShapeDtypeStruct((1, S * B), jnp.float32),
        in_specs=[vmem_spec] * len(flat),
        out_specs=vmem_spec,
        scratch_shapes=[pltpu.VMEM((S * B, 2 * H), jnp.float32)
                        for _ in range(2)],
        cost_estimate=pl.CostEstimate(flops=flops,
                                      transcendentals=transcendentals,
                                      bytes_accessed=bytes_accessed),
    )(*flat)
    # PyTorch: lstm_out.view(B, S, -1) -> head -> .view(B, S) are pure reshapes
    # of the same flat (t*B + b)-ordered buffer, so reshaping the (S*B,) scores
    # to (B, S) reproduces the original semantics exactly.
    return scores.reshape(B, S)


bilstm_regressor_forward = jax.jit(_bilstm_regressor_forward,
                                   static_argnums=(2, 3))


# -----------------------------------------------------------------------------
# Pure-JAX reference (for correctness check)
# -----------------------------------------------------------------------------
def _lstm_unidir_ref(x_seq, w_ih, w_hh, b_ih, b_hh):
    S, B, D = x_seq.shape
    H = w_hh.shape[1]

    def step(carry, x_t):
        h, c = carry
        gates = x_t @ w_ih.T + h @ w_hh.T + b_ih + b_hh
        i = jax.nn.sigmoid(gates[:, 0 * H:1 * H])
        f = jax.nn.sigmoid(gates[:, 1 * H:2 * H])
        g = jnp.tanh(gates[:, 2 * H:3 * H])
        o = jax.nn.sigmoid(gates[:, 3 * H:4 * H])
        c = f * c + i * g
        h = o * jnp.tanh(c)
        return (h, c), h

    init = (jnp.zeros((B, H), jnp.float32), jnp.zeros((B, H), jnp.float32))
    _, hs = jax.lax.scan(step, init, x_seq)
    return hs


def _forward_ref(params, batch_sents, max_fert, n_layers):
    B, S = batch_sents.shape
    x = jnp.take(params["embedding"], batch_sents, axis=0).reshape(S, B, -1)
    for layer in range(n_layers):
        lw = params["lstm"][layer]
        h_f = _lstm_unidir_ref(x, lw["w_ih_f"], lw["w_hh_f"],
                               lw["b_ih_f"], lw["b_hh_f"])
        h_b = _lstm_unidir_ref(x[::-1], lw["w_ih_b"], lw["w_hh_b"],
                               lw["b_ih_b"], lw["b_hh_b"])[::-1]
        x = jnp.concatenate([h_f, h_b], axis=-1)
    feat = x.reshape(B, S, -1)
    logits = feat @ params["w_out"].reshape(-1, 1) + params["b_out"]
    return (max_fert * jax.nn.sigmoid(logits)).reshape(B, S)


# -----------------------------------------------------------------------------
# Deterministic parameter initialization (matches nn.LSTM / nn.Linear shapes)
# -----------------------------------------------------------------------------
def init_params(key, vocab_size, embedding_dim, hidden_dim, n_layers):
    H = hidden_dim
    k_emb, key = jax.random.split(key)
    params = {
        "embedding": jax.random.normal(k_emb, (vocab_size, embedding_dim),
                                       jnp.float32),
        "lstm": [],
    }
    bound = 1.0 / np.sqrt(H)
    for layer in range(n_layers):
        in_dim = embedding_dim if layer == 0 else 2 * H
        lw = {}
        for name, shape in [
            ("w_ih_f", (4 * H, in_dim)), ("w_hh_f", (4 * H, H)),
            ("b_ih_f", (4 * H,)), ("b_hh_f", (4 * H,)),
            ("w_ih_b", (4 * H, in_dim)), ("w_hh_b", (4 * H, H)),
            ("b_ih_b", (4 * H,)), ("b_hh_b", (4 * H,)),
        ]:
            key, sub = jax.random.split(key)
            lw[name] = jax.random.uniform(sub, shape, jnp.float32,
                                          -bound, bound)
        params["lstm"].append(lw)

    lin_bound = 1.0 / np.sqrt(2 * H)
    key, k_w, k_b = jax.random.split(key, 3)
    params["w_out"] = jax.random.uniform(k_w, (2 * H,), jnp.float32,
                                         -lin_bound, lin_bound)
    params["b_out"] = jax.random.uniform(k_b, (1,), jnp.float32,
                                         -lin_bound, lin_bound)
    return params


# -----------------------------------------------------------------------------
if __name__ == "__main__":
    embedding_dim = 32
    hidden_dim = 32
    vocab_size = 50
    max_fert = 3.0
    n_layers = 2
    batch_size = 2
    sent_length = 8

    key = jax.random.PRNGKey(0)
    k_params, k_sents = jax.random.split(key)
    params = init_params(k_params, vocab_size, embedding_dim, hidden_dim,
                         n_layers)
    batch_sents = jax.random.randint(k_sents, (batch_size, sent_length),
                                     0, vocab_size, dtype=jnp.int32)

    fert_scores = bilstm_regressor_forward(params, batch_sents, max_fert,
                                           n_layers)
    fert_scores = jax.block_until_ready(fert_scores)

    ref = jax.block_until_ready(
        _forward_ref(params, batch_sents, max_fert, n_layers))
    np.testing.assert_allclose(np.asarray(fert_scores), np.asarray(ref),
                               rtol=1e-4, atol=1e-4)
    assert fert_scores.shape == (batch_size, sent_length)
    print("KERNEL_OK")
</pallas_src>

<mosaic_0001>
module attributes {stable_mosaic.version = 11 : i64} {
  func.func @_bilstm_fused_kernel(%arg0: memref<16x32xf32, #tpu.memory_space<vmem>>, %arg1: memref<32x256xf32, #tpu.memory_space<vmem>>, %arg2: memref<64x256xf32, #tpu.memory_space<vmem>>, %arg3: memref<1x256xf32, #tpu.memory_space<vmem>>, %arg4: memref<64x256xf32, #tpu.memory_space<vmem>>, %arg5: memref<64x256xf32, #tpu.memory_space<vmem>>, %arg6: memref<1x256xf32, #tpu.memory_space<vmem>>, %arg7: memref<1x64xf32, #tpu.memory_space<vmem>>, %arg8: memref<1x1xf32, #tpu.memory_space<vmem>>, %arg9: memref<1x16xf32, #tpu.memory_space<vmem>>, %arg10: memref<16x64xf32, #tpu.memory_space<vmem>>, %arg11: memref<16x64xf32, #tpu.memory_space<vmem>>) attributes {dimension_semantics = [], scalar_prefetch = 0 : i64, scratch_operands = 2 : i64, tpu.core_type = #tpu.core_type<tc>} {
    %0 = tpu.iota {dimensions = array<i32: 1>} : vector<2x256xi32>
    %c128_i32 = arith.constant 128 : i32
    %1 = vector.broadcast %c128_i32 : i32 to vector<2x256xi32>
    %2 = arith.cmpi sge, %0, %1 : vector<2x256xi32>
    %c192_i32 = arith.constant 192 : i32
    %3 = vector.broadcast %c192_i32 : i32 to vector<2x256xi32>
    %4 = arith.cmpi slt, %0, %3 : vector<2x256xi32>
    %5 = arith.andi %2, %4 : vector<2x256xi1>
    %c64_i32 = arith.constant 64 : i32
    %c0_i32 = arith.constant 0 : i32
    %6 = arith.cmpi eq, %c64_i32, %c0_i32 : i32
    %c1_i32 = arith.constant 1 : i32
    %7 = arith.select %6, %c1_i32, %c64_i32 : i32
    %8 = vector.broadcast %7 : i32 to vector<2x256xi32>
    %9 = arith.remsi %0, %8 : vector<2x256xi32>
    %c0_i32_0 = arith.constant 0 : i32
    %10 = vector.broadcast %c0_i32_0 : i32 to vector<2x256xi32>
    %11 = arith.cmpi ne, %9, %10 : vector<2x256xi32>
    %c0_i32_1 = arith.constant 0 : i32
    %12 = vector.broadcast %c0_i32_1 : i32 to vector<2x256xi32>
    %13 = arith.cmpi slt, %9, %12 : vector<2x256xi32>
    %c0_i32_2 = arith.constant 0 : i32
    %14 = arith.cmpi slt, %7, %c0_i32_2 : i32
    %15 = vector.broadcast %14 : i1 to vector<2x256xi1>
    %16 = vector.broadcast %15 : vector<2x256xi1> to vector<2x256xi1>
    %17 = arith.xori %13, %16 : vector<2x256xi1>
    %18 = arith.andi %17, %11 : vector<2x256xi1>
    %19 = vector.broadcast %7 : i32 to vector<2x256xi32>
    %20 = arith.addi %9, %19 : vector<2x256xi32>
    %21 = arith.select %18, %20, %9 : vector<2x256xi1>, vector<2x256xi32>
    %c32_i32 = arith.constant 32 : i32
    %22 = vector.broadcast %c32_i32 : i32 to vector<2x256xi32>
    %23 = arith.cmpi slt, %21, %22 : vector<2x256xi32>
    %c0 = arith.constant 0 : index
    %c0_3 = arith.constant 0 : index
    %24 = vector.load %arg0[%c0, %c0_3] : memref<16x32xf32, #tpu.memory_space<vmem>>, vector<16x32xf32>
    %c0_4 = arith.constant 0 : index
    %c0_5 = arith.constant 0 : index
    %25 = vector.load %arg1[%c0_4, %c0_5] : memref<32x256xf32, #tpu.memory_space<vmem>>, vector<32x256xf32>
    %cst = arith.constant dense<0.000000e+00> : vector<16x256xf32>
    %26 = tpu.matmul %24, %25, %cst {dimension_numbers = #tpu.dot_dimension_numbers<[1], [0], [0], [1], [0, 0, 1, 1], [], []>} : vector<16x32xf32>, vector<32x256xf32>, vector<16x256xf32> -> vector<16x256xf32>
    %c0_6 = arith.constant 0 : index
    %c0_7 = arith.constant 0 : index
    %27 = vector.load %arg3[%c0_6, %c0_7] : memref<1x256xf32, #tpu.memory_space<vmem>>, vector<1x256xf32>
    %28 = vector.broadcast %27 : vector<1x256xf32> to vector<16x256xf32>
    %29 = arith.addf %26, %28 : vector<16x256xf32>
    %30 = vector.extract_strided_slice %29 {offsets = [0, 0], sizes = [2, 256], strides = [1, 1]} : vector<16x256xf32> to vector<2x256xf32>
    %31 = vector.extract_strided_slice %29 {offsets = [2, 0], sizes = [2, 256], strides = [1, 1]} : vector<16x256xf32> to vector<2x256xf32>
    %32 = vector.extract_strided_slice %29 {offsets = [4, 0], sizes = [2, 256], strides = [1, 1]} : vector<16x256xf32> to vector<2x256xf32>
    %33 = vector.extract_strided_slice %29 {offsets = [6, 0], sizes = [2, 256], strides = [1, 1]} : vector<16x256xf32> to vector<2x256xf32>
    %34 = vector.extract_strided_slice %29 {offsets = [8, 0], sizes = [2, 256], strides = [1, 1]} : vector<16x256xf32> to vector<2x256xf32>
    %35 = vector.extract_strided_slice %29 {offsets = [10, 0], sizes = [2, 256], strides = [1, 1]} : vector<16x256xf32> to vector<2x256xf32>
    %36 = vector.extract_strided_slice %29 {offsets = [12, 0], sizes = [2, 256], strides = [1, 1]} : vector<16x256xf32> to vector<2x256xf32>
    %37 = vector.extract_strided_slice %29 {offsets = [14, 0], sizes = [2, 256], strides = [1, 1]} : vector<16x256xf32> to vector<2x256xf32>
    %cst_8 = arith.constant 0.000000e+00 : f32
    %38 = vector.broadcast %cst_8 : f32 to vector<2x64xf32>
    %cst_9 = arith.constant 0.000000e+00 : f32
    %39 = vector.broadcast %cst_9 : f32 to vector<2x64xf32>
    %40 = arith.select %23, %30, %37 : vector<2x256xi1>, vector<2x256xf32>
    %c0_10 = arith.constant 0 : index
    %c0_11 = arith.constant 0 : index
    %41 = vector.load %arg2[%c0_10, %c0_11] : memref<64x256xf32, #tpu.memory_space<vmem>>, vector<64x256xf32>
    %cst_12 = arith.constant dense<0.000000e+00> : vector<2x256xf32>
    %42 = tpu.matmul %38, %41, %cst_12 {dimension_numbers = #tpu.dot_dimension_numbers<[1], [0], [0], [1], [0, 0, 1, 1], [], []>} : vector<2x64xf32>, vector<64x256xf32>, vector<2x256xf32> -> vector<2x256xf32>
    %43 = arith.addf %40, %42 : vector<2x256xf32>
    %cst_13 = arith.constant 5.000000e-01 : f32
    %44 = vector.broadcast %cst_13 : f32 to vector<2x256xf32>
    %45 = arith.mulf %44, %43 : vector<2x256xf32>
    %46 = arith.select %5, %43, %45 : vector<2x256xi1>, vector<2x256xf32>
    %47 = math.tanh %46 : vector<2x256xf32>
    %cst_14 = arith.constant 1.000000e+00 : f32
    %48 = vector.broadcast %cst_14 : f32 to vector<2x256xf32>
    %49 = arith.addf %47, %48 : vector<2x256xf32>
    %cst_15 = arith.constant 5.000000e-01 : f32
    %50 = vector.broadcast %cst_15 : f32 to vector<2x256xf32>
    %51 = arith.mulf %50, %49 : vector<2x256xf32>
    %52 = arith.select %5, %47, %51 : vector<2x256xi1>, vector<2x256xf32>
    %53 = vector.extract_strided_slice %52 {offsets = [0, 0], sizes = [2, 64], strides = [1, 1]} : vector<2x256xf32> to vector<2x64xf32>
    %54 = vector.extract_strided_slice %52 {offsets = [0, 64], sizes = [2, 64], strides = [1, 1]} : vector<2x256xf32> to vector<2x64xf32>
    %55 = vector.extract_strided_slice %52 {offsets = [0, 128], sizes = [2, 64], strides = [1, 1]} : vector<2x256xf32> to vector<2x64xf32>
    %56 = vector.extract_strided_slice %52 {offsets = [0, 192], sizes = [2, 64], strides = [1, 1]} : vector<2x256xf32> to vector<2x64xf32>
    %57 = arith.mulf %54, %39 : vector<2x64xf32>
    %58 = arith.mulf %53, %55 : vector<2x64xf32>
    %59 = arith.addf %57, %58 : vector<2x64xf32>
    %60 = math.tanh %59 : vector<2x64xf32>
    %61 = arith.mulf %56, %60 : vector<2x64xf32>
    %62 = vector.extract_strided_slice %61 {offsets = [0, 0], sizes = [2, 32], strides = [1, 1]} : vector<2x64xf32> to vector<2x32xf32>
    %c0_16 = arith.constant 0 : index
    %c0_17 = arith.constant 0 : index
    %63 = vector.load %arg10[%c0_16, %c0_17] : memref<16x64xf32, #tpu.memory_space<vmem>>, vector<2x32xf32>
    tpu.vector_store %arg10[%c0_16, %c0_17], %62 {strides = array<i32>} : memref<16x64xf32, #tpu.memory_space<vmem>>, vector<2x32xf32>,
    %64 = vector.extract_strided_slice %61 {offsets = [0, 32], sizes = [2, 32], strides = [1, 1]} : vector<2x64xf32> to vector<2x32xf32>
    %c14 = arith.constant 14 : index
    %c32 = arith.constant 32 : index
    %65 = vector.load %arg10[%c14, %c32] : memref<16x64xf32, #tpu.memory_space<vmem>>, vector<2x32xf32>
    tpu.vector_store %arg10[%c14, %c32], %64 {strides = array<i32>} : memref<16x64xf32, #tpu.memory_space<vmem>>, vector<2x32xf32>,
    %66 = arith.select %23, %31, %36 : vector<2x256xi1>, vector<2x256xf32>
    %c0_18 = arith.constant 0 : index
    %c0_19 = arith.constant 0 : index
    %67 = vector.load %arg2[%c0_18, %c0_19] : memref<64x256xf32, #tpu.memory_space<vmem>>, vector<64x256xf32>
    %cst_20 = arith.constant dense<0.000000e+00> : vector<2x256xf32>
    %68 = tpu.matmul %61, %67, %cst_20 {dimension_numbers = #tpu.dot_dimension_numbers<[1], [0], [0], [1], [0, 0, 1, 1], [], []>} : vector<2x64xf32>, vector<64x256xf32>, vector<2x256xf32> -> vector<2x256xf32>
    %69 = arith.addf %66, %68 : vector<2x256xf32>
    %cst_21 = arith.constant 5.000000e-01 : f32
    %70 = vector.broadcast %cst_21 : f32 to vector<2x256xf32>
    %71 = arith.mulf %70, %69 : vector<2x256xf32>
    %72 = arith.select %5, %69, %71 : vector<2x256xi1>, vector<2x256xf32>
    %73 = math.tanh %72 : vector<2x256xf32>
    %cst_22 = arith.constant 1.000000e+00 : f32
    %74 = vector.broadcast %cst_22 : f32 to vector<2x256xf32>
    %75 = arith.addf %73, %74 : vector<2x256xf32>
    %cst_23 = arith.constant 5.000000e-01 : f32
    %76 = vector.broadcast %cst_23 : f32 to vector<2x256xf32>
    %77 = arith.mulf %76, %75 : vector<2x256xf32>
    %78 = arith.select %5, %73, %77 : vector<2x256xi1>, vector<2x256xf32>
    %79 = vector.extract_strided_slice %78 {offsets = [0, 0], sizes = [2, 64], strides = [1, 1]} : vector<2x256xf32> to vector<2x64xf32>
    %80 = vector.extract_strided_slice %78 {offsets = [0, 64], sizes = [2, 64], strides = [1, 1]} : vector<2x256xf32> to vector<2x64xf32>
    %81 = vector.extract_strided_slice %78 {offsets = [0, 128], sizes = [2, 64], strides = [1, 1]} : vector<2x256xf32> to vector<2x64xf32>
    %82 = vector.extract_strided_slice %78 {offsets = [0, 192], sizes = [2, 64], strides = [1, 1]} : vector<2x256xf32> to vector<2x64xf32>
    %83 = arith.mulf %80, %59 : vector<2x64xf32>
    %84 = arith.mulf %79, %81 : vector<2x64xf32>
    %85 = arith.addf %83, %84 : vector<2x64xf32>
    %86 = math.tanh %85 : vector<2x64xf32>
    %87 = arith.mulf %82, %86 : vector<2x64xf32>
    %88 = vector.extract_strided_slice %87 {offsets = [0, 0], sizes = [2, 32], strides = [1, 1]} : vector<2x64xf32> to vector<2x32xf32>
    %c2 = arith.constant 2 : index
    %c0_24 = arith.constant 0 : index
    %89 = vector.load %arg10[%c2, %c0_24] : memref<16x64xf32, #tpu.memory_space<vmem>>, vector<2x32xf32>
    tpu.vector_store %arg10[%c2, %c0_24], %88 {strides = array<i32>} : memref<16x64xf32, #tpu.memory_space<vmem>>, vector<2x32xf32>,
    %90 = vector.extract_strided_slice %87 {offsets = [0, 32], sizes = [2, 32], strides = [1, 1]} : vector<2x64xf32> to vector<2x32xf32>
    %c12 = arith.constant 12 : index
    %c32_25 = arith.constant 32 : index
    %91 = vector.load %arg10[%c12, %c32_25] : memref<16x64xf32, #tpu.memory_space<vmem>>, vector<2x32xf32>
    tpu.vector_store %arg10[%c12, %c32_25], %90 {strides = array<i32>} : memref<16x64xf32, #tpu.memory_space<vmem>>, vector<2x32xf32>,
    %92 = arith.select %23, %32, %35 : vector<2x256xi1>, vector<2x256xf32>
    %c0_26 = arith.constant 0 : index
    %c0_27 = arith.constant 0 : index
    %93 = vector.load %arg2[%c0_26, %c0_27] : memref<64x256xf32, #tpu.memory_space<vmem>>, vector<64x256xf32>
    %cst_28 = arith.constant dense<0.000000e+00> : vector<2x256xf32>
    %94 = tpu.matmul %87, %93, %cst_28 {dimension_numbers = #tpu.dot_dimension_numbers<[1], [0], [0], [1], [0, 0, 1, 1], [], []>} : vector<2x64xf32>, vector<64x256xf32>, vector<2x256xf32> -> vector<2x256xf32>
    %95 = arith.addf %92, %94 : vector<2x256xf32>
    %cst_29 = arith.constant 5.000000e-01 : f32
    %96 = vector.broadcast %cst_29 : f32 to vector<2x256xf32>
    %97 = arith.mulf %96, %95 : vector<2x256xf32>
    %98 = arith.select %5, %95, %97 : vector<2x256xi1>, vector<2x256xf32>
    %99 = math.tanh %98 : vector<2x256xf32>
    %cst_30 = arith.constant 1.000000e+00 : f32
    %100 = vector.broadcast %cst_30 : f32 to vector<2x256xf32>
    %101 = arith.addf %99, %100 : vector<2x256xf32>
    %cst_31 = arith.constant 5.000000e-01 : f32
    %102 = vector.broadcast %cst_31 : f32 to vector<2x256xf32>
    %103 = arith.mulf %102, %101 : vector<2x256xf32>
    %104 = arith.select %5, %99, %103 : vector<2x256xi1>, vector<2x256xf32>
    %105 = vector.extract_strided_slice %104 {offsets = [0, 0], sizes = [2, 64], strides = [1, 1]} : vector<2x256xf32> to vector<2x64xf32>
    %106 = vector.extract_strided_slice %104 {offsets = [0, 64], sizes = [2, 64], strides = [1, 1]} : vector<2x256xf32> to vector<2x64xf32>
    %107 = vector.extract_strided_slice %104 {offsets = [0, 128], sizes = [2, 64], strides = [1, 1]} : vector<2x256xf32> to vector<2x64xf32>
    %108 = vector.extract_strided_slice %104 {offsets = [0, 192], sizes = [2, 64], strides = [1, 1]} : vector<2x256xf32> to vector<2x64xf32>
    %109 = arith.mulf %106, %85 : vector<2x64xf32>
    %110 = arith.mulf %105, %107 : vector<2x64xf32>
    %111 = arith.addf %109, %110 : vector<2x64xf32>
    %112 = math.tanh %111 : vector<2x64xf32>
    %113 = arith.mulf %108, %112 : vector<2x64xf32>
    %114 = vector.extract_strided_slice %113 {offsets = [0, 0], sizes = [2, 32], strides = [1, 1]} : vector<2x64xf32> to vector<2x32xf32>
    %c4 = arith.constant 4 : index
    %c0_32 = arith.constant 0 : index
    %115 = vector.load %arg10[%c4, %c0_32] : memref<16x64xf32, #tpu.memory_space<vmem>>, vector<2x32xf32>
    tpu.vector_store %arg10[%c4, %c0_32], %114 {strides = array<i32>} : memref<16x64xf32, #tpu.memory_space<vmem>>, vector<2x32xf32>,
    %116 = vector.extract_strided_slice %113 {offsets = [0, 32], sizes = [2, 32], strides = [1, 1]} : vector<2x64xf32> to vector<2x32xf32>
    %c10 = arith.constant 10 : index
    %c32_33 = arith.constant 32 : index
    %117 = vector.load %arg10[%c10, %c32_33] : memref<16x64xf32, #tpu.memory_space<vmem>>, vector<2x32xf32>
    tpu.vector_store %arg10[%c10, %c32_33], %116 {strides = array<i32>} : memref<16x64xf32, #tpu.memory_space<vmem>>, vector<2x32xf32>,
    %118 = arith.select %23, %33, %34 : vector<2x256xi1>, vector<2x256xf32>
    %c0_34 = arith.constant 0 : index
    %c0_35 = arith.constant 0 : index
    %119 = vector.load %arg2[%c0_34, %c0_35] : memref<64x256xf32, #tpu.memory_space<vmem>>, vector<64x256xf32>
    %cst_36 = arith.constant dense<0.000000e+00> : vector<2x256xf32>
    %120 = tpu.matmul %113, %119, %cst_36 {dimension_numbers = #tpu.dot_dimension_numbers<[1], [0], [0], [1], [0, 0, 1, 1], [], []>} : vector<2x64xf32>, vector<64x256xf32>, vector<2x256xf32> -> vector<2x256xf32>
    %121 = arith.addf %118, %120 : vector<2x256xf32>
    %cst_37 = arith.constant 5.000000e-01 : f32
    %122 = vector.broadcast %cst_37 : f32 to vector<2x256xf32>
    %123 = arith.mulf %122, %121 : vector<2x256xf32>
    %124 = arith.select %5, %121, %123 : vector<2x256xi1>, vector<2x256xf32>
    %125 = math.tanh %124 : vector<2x256xf32>
    %cst_38 = arith.constant 1.000000e+00 : f32
    %126 = vector.broadcast %cst_38 : f32 to vector<2x256xf32>
    %127 = arith.addf %125, %126 : vector<2x256xf32>
    %cst_39 = arith.constant 5.000000e-01 : f32
    %128 = vector.broadcast %cst_39 : f32 to vector<2x256xf32>
    %129 = arith.mulf %128, %127 : vector<2x256xf32>
    %130 = arith.select %5, %125, %129 : vector<2x256xi1>, vector<2x256xf32>
    %131 = vector.extract_strided_slice %130 {offsets = [0, 0], sizes = [2, 64], strides = [1, 1]} : vector<2x256xf32> to vector<2x64xf32>
    %132 = vector.extract_strided_slice %130 {offsets = [0, 64], sizes = [2, 64], strides = [1, 1]} : vector<2x256xf32> to vector<2x64xf32>
    %133 = vector.extract_strided_slice %130 {offsets = [0, 128], sizes = [2, 64], strides = [1, 1]} : vector<2x256xf32> to vector<2x64xf32>
    %134 = vector.extract_strided_slice %130 {offsets = [0, 192], sizes = [2, 64], strides = [1, 1]} : vector<2x256xf32> to vector<2x64xf32>
    %135 = arith.mulf %132, %111 : vector<2x64xf32>
    %136 = arith.mulf %131, %133 : vector<2x64xf32>
    %137 = arith.addf %135, %136 : vector<2x64xf32>
    %138 = math.tanh %137 : vector<2x64xf32>
    %139 = arith.mulf %134, %138 : vector<2x64xf32>
    %140 = vector.extract_strided_slice %139 {offsets = [0, 0], sizes = [2, 32], strides = [1, 1]} : vector<2x64xf32> to vector<2x32xf32>
    %c6 = arith.constant 6 : index
    %c0_40 = arith.constant 0 : index
    %141 = vector.load %arg10[%c6, %c0_40] : memref<16x64xf32, #tpu.memory_space<vmem>>, vector<2x32xf32>
    tpu.vector_store %arg10[%c6, %c0_40], %140 {strides = array<i32>} : memref<16x64xf32, #tpu.memory_space<vmem>>, vector<2x32xf32>,
    %142 = vector.extract_strided_slice %139 {offsets = [0, 32], sizes = [2, 32], strides = [1, 1]} : vector<2x64xf32> to vector<2x32xf32>
    %c8 = arith.constant 8 : index
    %c32_41 = arith.constant 32 : index
    %143 = vector.load %arg10[%c8, %c32_41] : memref<16x64xf32, #tpu.memory_space<vmem>>, vector<2x32xf32>
    tpu.vector_store %arg10[%c8, %c32_41], %142 {strides = array<i32>} : memref<16x64xf32, #tpu.memory_space<vmem>>, vector<2x32xf32>,
    %144 = arith.select %23, %34, %33 : vector<2x256xi1>, vector<2x256xf32>
    %c0_42 = arith.constant 0 : index
    %c0_43 = arith.constant 0 : index
    %145 = vector.load %arg2[%c0_42, %c0_43] : memref<64x256xf32, #tpu.memory_space<vmem>>, vector<64x256xf32>
    %cst_44 = arith.constant dense<0.000000e+00> : vector<2x256xf32>
    %146 = tpu.matmul %139, %145, %cst_44 {dimension_numbers = #tpu.dot_dimension_numbers<[1], [0], [0], [1], [0, 0, 1, 1], [], []>} : vector<2x64xf32>, vector<64x256xf32>, vector<2x256xf32> -> vector<2x256xf32>
    %147 = arith.addf %144, %146 : vector<2x256xf32>
    %cst_45 = arith.constant 5.000000e-01 : f32
    %148 = vector.broadcast %cst_45 : f32 to vector<2x256xf32>
    %149 = arith.mulf %148, %147 : vector<2x256xf32>
    %150 = arith.select %5, %147, %149 : vector<2x256xi1>, vector<2x256xf32>
    %151 = math.tanh %150 : vector<2x256xf32>
    %cst_46 = arith.constant 1.000000e+00 : f32
    %152 = vector.broadcast %cst_46 : f32 to vector<2x256xf32>
    %153 = arith.addf %151, %152 : vector<2x256xf32>
    %cst_47 = arith.constant 5.000000e-01 : f32
    %154 = vector.broadcast %cst_47 : f32 to vector<2x256xf32>
    %155 = arith.mulf %154, %153 : vector<2x256xf32>
    %156 = arith.select %5, %151, %155 : vector<2x256xi1>, vector<2x256xf32>
    %157 = vector.extract_strided_slice %156 {offsets = [0, 0], sizes = [2, 64], strides = [1, 1]} : vector<2x256xf32> to vector<2x64xf32>
    %158 = vector.extract_strided_slice %156 {offsets = [0, 64], sizes = [2, 64], strides = [1, 1]} : vector<2x256xf32> to vector<2x64xf32>
    %159 = vector.extract_strided_slice %156 {offsets = [0, 128], sizes = [2, 64], strides = [1, 1]} : vector<2x256xf32> to vector<2x64xf32>
    %160 = vector.extract_strided_slice %156 {offsets = [0, 192], sizes = [2, 64], strides = [1, 1]} : vector<2x256xf32> to vector<2x64xf32>
    %161 = arith.mulf %158, %137 : vector<2x64xf32>
    %162 = arith.mulf %157, %159 : vector<2x64xf32>
    %163 = arith.addf %161, %162 : vector<2x64xf32>
    %164 = math.tanh %163 : vector<2x64xf32>
    %165 = arith.mulf %160, %164 : vector<2x64xf32>
    %166 = vector.extract_strided_slice %165 {offsets = [0, 0], sizes = [2, 32], strides = [1, 1]} : vector<2x64xf32> to vector<2x32xf32>
    %c8_48 = arith.constant 8 : index
    %c0_49 = arith.constant 0 : index
    %167 = vector.load %arg10[%c8_48, %c0_49] : memref<16x64xf32, #tpu.memory_space<vmem>>, vector<2x32xf32>
    tpu.vector_store %arg10[%c8_48, %c0_49], %166 {strides = array<i32>} : memref<16x64xf32, #tpu.memory_space<vmem>>, vector<2x32xf32>,
    %168 = vector.extract_strided_slice %165 {offsets = [0, 32], sizes = [2, 32], strides = [1, 1]} : vector<2x64xf32> to vector<2x32xf32>
    %c6_50 = arith.constant 6 : index
    %c32_51 = arith.constant 32 : index
    %169 = vector.load %arg10[%c6_50, %c32_51] : memref<16x64xf32, #tpu.memory_space<vmem>>, vector<2x32xf32>
    tpu.vector_store %arg10[%c6_50, %c32_51], %168 {strides = array<i32>} : memref<16x64xf32, #tpu.memory_space<vmem>>, vector<2x32xf32>,
    %170 = arith.select %23, %35, %32 : vector<2x256xi1>, vector<2x256xf32>
    %c0_52 = arith.constant 0 : index
    %c0_53 = arith.constant 0 : index
    %171 = vector.load %arg2[%c0_52, %c0_53] : memref<64x256xf32, #tpu.memory_space<vmem>>, vector<64x256xf32>
    %cst_54 = arith.constant dense<0.000000e+00> : vector<2x256xf32>
    %172 = tpu.matmul %165, %171, %cst_54 {dimension_numbers = #tpu.dot_dimension_numbers<[1], [0], [0], [1], [0, 0, 1, 1], [], []>} : vector<2x64xf32>, vector<64x256xf32>, vector<2x256xf32> -> vector<2x256xf32>
    %173 = arith.addf %170, %172 : vector<2x256xf32>
    %cst_55 = arith.constant 5.000000e-01 : f32
    %174 = vector.broadcast %cst_55 : f32 to vector<2x256xf32>
    %175 = arith.mulf %174, %173 : vector<2x256xf32>
    %176 = arith.select %5, %173, %175 : vector<2x256xi1>, vector<2x256xf32>
    %177 = math.tanh %176 : vector<2x256xf32>
    %cst_56 = arith.constant 1.000000e+00 : f32
    %178 = vector.broadcast %cst_56 : f32 to vector<2x256xf32>
    %179 = arith.addf %177, %178 : vector<2x256xf32>
    %cst_57 = arith.constant 5.000000e-01 : f32
    %180 = vector.broadcast %cst_57 : f32 to vector<2x256xf32>
    %181 = arith.mulf %180, %179 : vector<2x256xf32>
    %182 = arith.select %5, %177, %181 : vector<2x256xi1>, vector<2x256xf32>
    %183 = vector.extract_strided_slice %182 {offsets = [0, 0], sizes = [2, 64], strides = [1, 1]} : vector<2x256xf32> to vector<2x64xf32>
    %184 = vector.extract_strided_slice %182 {offsets = [0, 64], sizes = [2, 64], strides = [1, 1]} : vector<2x256xf32> to vector<2x64xf32>
    %185 = vector.extract_strided_slice %182 {offsets = [0, 128], sizes = [2, 64], strides = [1, 1]} : vector<2x256xf32> to vector<2x64xf32>
    %186 = vector.extract_strided_slice %182 {offsets = [0, 192], sizes = [2, 64], strides = [1, 1]} : vector<2x256xf32> to vector<2x64xf32>
    %187 = arith.mulf %184, %163 : vector<2x64xf32>
    %188 = arith.mulf %183, %185 : vector<2x64xf32>
    %189 = arith.addf %187, %188 : vector<2x64xf32>
    %190 = math.tanh %189 : vector<2x64xf32>
    %191 = arith.mulf %186, %190 : vector<2x64xf32>
    %192 = vector.extract_strided_slice %191 {offsets = [0, 0], sizes = [2, 32], strides = [1, 1]} : vector<2x64xf32> to vector<2x32xf32>
    %c10_58 = arith.constant 10 : index
    %c0_59 = arith.constant 0 : index
    %193 = vector.load %arg10[%c10_58, %c0_59] : memref<16x64xf32, #tpu.memory_space<vmem>>, vector<2x32xf32>
    tpu.vector_store %arg10[%c10_58, %c0_59], %192 {strides = array<i32>} : memref<16x64xf32, #tpu.memory_space<vmem>>, vector<2x32xf32>,
    %194 = vector.extract_strided_slice %191 {offsets = [0, 32], sizes = [2, 32], strides = [1, 1]} : vector<2x64xf32> to vector<2x32xf32>
    %c4_60 = arith.constant 4 : index
    %c32_61 = arith.constant 32 : index
    %195 = vector.load %arg10[%c4_60, %c32_61] : memref<16x64xf32, #tpu.memory_space<vmem>>, vector<2x32xf32>
    tpu.vector_store %arg10[%c4_60, %c32_61], %194 {strides = array<i32>} : memref<16x64xf32, #tpu.memory_space<vmem>>, vector<2x32xf32>,
    %196 = arith.select %23, %36, %31 : vector<2x256xi1>, vector<2x256xf32>
    %c0_62 = arith.constant 0 : index
    %c0_63 = arith.constant 0 : index
    %197 = vector.load %arg2[%c0_62, %c0_63] : memref<64x256xf32, #tpu.memory_space<vmem>>, vector<64x256xf32>
    %cst_64 = arith.constant dense<0.000000e+00> : vector<2x256xf32>
    %198 = tpu.matmul %191, %197, %cst_64 {dimension_numbers = #tpu.dot_dimension_numbers<[1], [0], [0], [1], [0, 0, 1, 1], [], []>} : vector<2x64xf32>, vector<64x256xf32>, vector<2x256xf32> -> vector<2x256xf32>
    %199 = arith.addf %196, %198 : vector<2x256xf32>
    %cst_65 = arith.constant 5.000000e-01 : f32
    %200 = vector.broadcast %cst_65 : f32 to vector<2x256xf32>
    %201 = arith.mulf %200, %199 : vector<2x256xf32>
    %202 = arith.select %5, %199, %201 : vector<2x256xi1>, vector<2x256xf32>
    %203 = math.tanh %202 : vector<2x256xf32>
    %cst_66 = arith.constant 1.000000e+00 : f32
    %204 = vector.broadcast %cst_66 : f32 to vector<2x256xf32>
    %205 = arith.addf %203, %204 : vector<2x256xf32>
    %cst_67 = arith.constant 5.000000e-01 : f32
    %206 = vector.broadcast %cst_67 : f32 to vector<2x256xf32>
    %207 = arith.mulf %206, %205 : vector<2x256xf32>
    %208 = arith.select %5, %203, %207 : vector<2x256xi1>, vector<2x256xf32>
    %209 = vector.extract_strided_slice %208 {offsets = [0, 0], sizes = [2, 64], strides = [1, 1]} : vector<2x256xf32> to vector<2x64xf32>
    %210 = vector.extract_strided_slice %208 {offsets = [0, 64], sizes = [2, 64], strides = [1, 1]} : vector<2x256xf32> to vector<2x64xf32>
    %211 = vector.extract_strided_slice %208 {offsets = [0, 128], sizes = [2, 64], strides = [1, 1]} : vector<2x256xf32> to vector<2x64xf32>
    %212 = vector.extract_strided_slice %208 {offsets = [0, 192], sizes = [2, 64], strides = [1, 1]} : vector<2x256xf32> to vector<2x64xf32>
    %213 = arith.mulf %210, %189 : vector<2x64xf32>
    %214 = arith.mulf %209, %211 : vector<2x64xf32>
    %215 = arith.addf %213, %214 : vector<2x64xf32>
    %216 = math.tanh %215 : vector<2x64xf32>
    %217 = arith.mulf %212, %216 : vector<2x64xf32>
    %218 = vector.extract_strided_slice %217 {offsets = [0, 0], sizes = [2, 32], strides = [1, 1]} : vector<2x64xf32> to vector<2x32xf32>
    %c12_68 = arith.constant 12 : index
    %c0_69 = arith.constant 0 : index
    %219 = vector.load %arg10[%c12_68, %c0_69] : memref<16x64xf32, #tpu.memory_space<vmem>>, vector<2x32xf32>
    tpu.vector_store %arg10[%c12_68, %c0_69], %218 {strides = array<i32>} : memref<16x64xf32, #tpu.memory_space<vmem>>, vector<2x32xf32>,
    %220 = vector.extract_strided_slice %217 {offsets = [0, 32], sizes = [2, 32], strides = [1, 1]} : vector<2x64xf32> to vector<2x32xf32>
    %c2_70 = arith.constant 2 : index
    %c32_71 = arith.constant 32 : index
    %221 = vector.load %arg10[%c2_70, %c32_71] : memref<16x64xf32, #tpu.memory_space<vmem>>, vector<2x32xf32>
    tpu.vector_store %arg10[%c2_70, %c32_71], %220 {strides = array<i32>} : memref<16x64xf32, #tpu.memory_space<vmem>>, vector<2x32xf32>,
    %222 = arith.select %23, %37, %30 : vector<2x256xi1>, vector<2x256xf32>
    %c0_72 = arith.constant 0 : index
    %c0_73 = arith.constant 0 : index
    %223 = vector.load %arg2[%c0_72, %c0_73] : memref<64x256xf32, #tpu.memory_space<vmem>>, vector<64x256xf32>
    %cst_74 = arith.constant dense<0.000000e+00> : vector<2x256xf32>
    %224 = tpu.matmul %217, %223, %cst_74 {dimension_numbers = #tpu.dot_dimension_numbers<[1], [0], [0], [1], [0, 0, 1, 1], [], []>} : vector<2x64xf32>, vector<64x256xf32>, vector<2x256xf32> -> vector<2x256xf32>
    %225 = arith.addf %222, %224 : vector<2x256xf32>
    %cst_75 = arith.constant 5.000000e-01 : f32
    %226 = vector.broadcast %cst_75 : f32 to vector<2x256xf32>
    %227 = arith.mulf %226, %225 : vector<2x256xf32>
    %228 = arith.select %5, %225, %227 : vector<2x256xi1>, vector<2x256xf32>
    %229 = math.tanh %228 : vector<2x256xf32>
    %cst_76 = arith.constant 1.000000e+00 : f32
    %230 = vector.broadcast %cst_76 : f32 to vector<2x256xf32>
    %231 = arith.addf %229, %230 : vector<2x256xf32>
    %cst_77 = arith.constant 5.000000e-01 : f32
    %232 = vector.broadcast %cst_77 : f32 to vector<2x256xf32>
    %233 = arith.mulf %232, %231 : vector<2x256xf32>
    %234 = arith.select %5, %229, %233 : vector<2x256xi1>, vector<2x256xf32>
    %235 = vector.extract_strided_slice %234 {offsets = [0, 0], sizes = [2, 64], strides = [1, 1]} : vector<2x256xf32> to vector<2x64xf32>
    %236 = vector.extract_strided_slice %234 {offsets = [0, 64], sizes = [2, 64], strides = [1, 1]} : vector<2x256xf32> to vector<2x64xf32>
    %237 = vector.extract_strided_slice %234 {offsets = [0, 128], sizes = [2, 64], strides = [1, 1]} : vector<2x256xf32> to vector<2x64xf32>
    %238 = vector.extract_strided_slice %234 {offsets = [0, 192], sizes = [2, 64], strides = [1, 1]} : vector<2x256xf32> to vector<2x64xf32>
    %239 = arith.mulf %236, %215 : vector<2x64xf32>
    %240 = arith.mulf %235, %237 : vector<2x64xf32>
    %241 = arith.addf %239, %240 : vector<2x64xf32>
    %242 = math.tanh %241 : vector<2x64xf32>
    %243 = arith.mulf %238, %242 : vector<2x64xf32>
    %244 = vector.extract_strided_slice %243 {offsets = [0, 0], sizes = [2, 32], strides = [1, 1]} : vector<2x64xf32> to vector<2x32xf32>
    %c14_78 = arith.constant 14 : index
    %c0_79 = arith.constant 0 : index
    %245 = vector.load %arg10[%c14_78, %c0_79] : memref<16x64xf32, #tpu.memory_space<vmem>>, vector<2x32xf32>
    tpu.vector_store %arg10[%c14_78, %c0_79], %244 {strides = array<i32>} : memref<16x64xf32, #tpu.memory_space<vmem>>, vector<2x32xf32>,
    %246 = vector.extract_strided_slice %243 {offsets = [0, 32], sizes = [2, 32], strides = [1, 1]} : vector<2x64xf32> to vector<2x32xf32>
    %c0_80 = arith.constant 0 : index
    %c32_81 = arith.constant 32 : index
    %247 = vector.load %arg10[%c0_80, %c32_81] : memref<16x64xf32, #tpu.memory_space<vmem>>, vector<2x32xf32>
    tpu.vector_store %arg10[%c0_80, %c32_81], %246 {strides = array<i32>} : memref<16x64xf32, #tpu.memory_space<vmem>>, vector<2x32xf32>,
    %c0_82 = arith.constant 0 : index
    %c0_83 = arith.constant 0 : index
    %248 = vector.load %arg10[%c0_82, %c0_83] : memref<16x64xf32, #tpu.memory_space<vmem>>, vector<16x64xf32>
    %c0_84 = arith.constant 0 : index
    %c0_85 = arith.constant 0 : index
    %249 = vector.load %arg4[%c0_84, %c0_85] : memref<64x256xf32, #tpu.memory_space<vmem>>, vector<64x256xf32>
    %cst_86 = arith.constant dense<0.000000e+00> : vector<16x256xf32>
    %250 = tpu.matmul %248, %249, %cst_86 {dimension_numbers = #tpu.dot_dimension_numbers<[1], [0], [0], [1], [0, 0, 1, 1], [], []>} : vector<16x64xf32>, vector<64x256xf32>, vector<16x256xf32> -> vector<16x256xf32>
    %c0_87 = arith.constant 0 : index
    %c0_88 = arith.constant 0 : index
    %251 = vector.load %arg6[%c0_87, %c0_88] : memref<1x256xf32, #tpu.memory_space<vmem>>, vector<1x256xf32>
    %252 = vector.broadcast %251 : vector<1x256xf32> to vector<16x256xf32>
    %253 = arith.addf %250, %252 : vector<16x256xf32>
    %254 = vector.extract_strided_slice %253 {offsets = [0, 0], sizes = [2, 256], strides = [1, 1]} : vector<16x256xf32> to vector<2x256xf32>
    %255 = vector.extract_strided_slice %253 {offsets = [2, 0], sizes = [2, 256], strides = [1, 1]} : vector<16x256xf32> to vector<2x256xf32>
    %256 = vector.extract_strided_slice %253 {offsets = [4, 0], sizes = [2, 256], strides = [1, 1]} : vector<16x256xf32> to vector<2x256xf32>
    %257 = vector.extract_strided_slice %253 {offsets = [6, 0], sizes = [2, 256], strides = [1, 1]} : vector<16x256xf32> to vector<2x256xf32>
    %258 = vector.extract_strided_slice %253 {offsets = [8, 0], sizes = [2, 256], strides = [1, 1]} : vector<16x256xf32> to vector<2x256xf32>
    %259 = vector.extract_strided_slice %253 {offsets = [10, 0], sizes = [2, 256], strides = [1, 1]} : vector<16x256xf32> to vector<2x256xf32>
    %260 = vector.extract_strided_slice %253 {offsets = [12, 0], sizes = [2, 256], strides = [1, 1]} : vector<16x256xf32> to vector<2x256xf32>
    %261 = vector.extract_strided_slice %253 {offsets = [14, 0], sizes = [2, 256], strides = [1, 1]} : vector<16x256xf32> to vector<2x256xf32>
    %cst_89 = arith.constant 0.000000e+00 : f32
    %262 = vector.broadcast %cst_89 : f32 to vector<2x64xf32>
    %cst_90 = arith.constant 0.000000e+00 : f32
    %263 = vector.broadcast %cst_90 : f32 to vector<2x64xf32>
    %264 = arith.select %23, %254, %261 : vector<2x256xi1>, vector<2x256xf32>
    %c0_91 = arith.constant 0 : index
    %c0_92 = arith.constant 0 : index
    %265 = vector.load %arg5[%c0_91, %c0_92] : memref<64x256xf32, #tpu.memory_space<vmem>>, vector<64x256xf32>
    %cst_93 = arith.constant dense<0.000000e+00> : vector<2x256xf32>
    %266 = tpu.matmul %262, %265, %cst_93 {dimension_numbers = #tpu.dot_dimension_numbers<[1], [0], [0], [1], [0, 0, 1, 1], [], []>} : vector<2x64xf32>, vector<64x256xf32>, vector<2x256xf32> -> vector<2x256xf32>
    %267 = arith.addf %264, %266 : vector<2x256xf32>
    %cst_94 = arith.constant 5.000000e-01 : f32
    %268 = vector.broadcast %cst_94 : f32 to vector<2x256xf32>
    %269 = arith.mulf %268, %267 : vector<2x256xf32>
    %270 = arith.select %5, %267, %269 : vector<2x256xi1>, vector<2x256xf32>
    %271 = math.tanh %270 : vector<2x256xf32>
    %cst_95 = arith.constant 1.000000e+00 : f32
    %272 = vector.broadcast %cst_95 : f32 to vector<2x256xf32>
    %273 = arith.addf %271, %272 : vector<2x256xf32>
    %cst_96 = arith.constant 5.000000e-01 : f32
    %274 = vector.broadcast %cst_96 : f32 to vector<2x256xf32>
    %275 = arith.mulf %274, %273 : vector<2x256xf32>
    %276 = arith.select %5, %271, %275 : vector<2x256xi1>, vector<2x256xf32>
    %277 = vector.extract_strided_slice %276 {offsets = [0, 0], sizes = [2, 64], strides = [1, 1]} : vector<2x256xf32> to vector<2x64xf32>
    %278 = vector.extract_strided_slice %276 {offsets = [0, 64], sizes = [2, 64], strides = [1, 1]} : vector<2x256xf32> to vector<2x64xf32>
    %279 = vector.extract_strided_slice %276 {offsets = [0, 128], sizes = [2, 64], strides = [1, 1]} : vector<2x256xf32> to vector<2x64xf32>
    %280 = vector.extract_strided_slice %276 {offsets = [0, 192], sizes = [2, 64], strides = [1, 1]} : vector<2x256xf32> to vector<2x64xf32>
    %281 = arith.mulf %278, %263 : vector<2x64xf32>
    %282 = arith.mulf %277, %279 : vector<2x64xf32>
    %283 = arith.addf %281, %282 : vector<2x64xf32>
    %284 = math.tanh %283 : vector<2x64xf32>
    %285 = arith.mulf %280, %284 : vector<2x64xf32>
    %286 = vector.extract_strided_slice %285 {offsets = [0, 0], sizes = [2, 32], strides = [1, 1]} : vector<2x64xf32> to vector<2x32xf32>
    %c0_97 = arith.constant 0 : index
    %c0_98 = arith.constant 0 : index
    %287 = vector.load %arg11[%c0_97, %c0_98] : memref<16x64xf32, #tpu.memory_space<vmem>>, vector<2x32xf32>
    tpu.vector_store %arg11[%c0_97, %c0_98], %286 {strides = array<i32>} : memref<16x64xf32, #tpu.memory_space<vmem>>, vector<2x32xf32>,
    %288 = vector.extract_strided_slice %285 {offsets = [0, 32], sizes = [2, 32], strides = [1, 1]} : vector<2x64xf32> to vector<2x32xf32>
    %c14_99 = arith.constant 14 : index
    %c32_100 = arith.constant 32 : index
    %289 = vector.load %arg11[%c14_99, %c32_100] : memref<16x64xf32, #tpu.memory_space<vmem>>, vector<2x32xf32>
    tpu.vector_store %arg11[%c14_99, %c32_100], %288 {strides = array<i32>} : memref<16x64xf32, #tpu.memory_space<vmem>>, vector<2x32xf32>,
    %290 = arith.select %23, %255, %260 : vector<2x256xi1>, vector<2x256xf32>
    %c0_101 = arith.constant 0 : index
    %c0_102 = arith.constant 0 : index
    %291 = vector.load %arg5[%c0_101, %c0_102] : memref<64x256xf32, #tpu.memory_space<vmem>>, vector<64x256xf32>
    %cst_103 = arith.constant dense<0.000000e+00> : vector<2x256xf32>
    %292 = tpu.matmul %285, %291, %cst_103 {dimension_numbers = #tpu.dot_dimension_numbers<[1], [0], [0], [1], [0, 0, 1, 1], [], []>} : vector<2x64xf32>, vector<64x256xf32>, vector<2x256xf32> -> vector<2x256xf32>
    %293 = arith.addf %290, %292 : vector<2x256xf32>
    %cst_104 = arith.constant 5.000000e-01 : f32
    %294 = vector.broadcast %cst_104 : f32 to vector<2x256xf32>
    %295 = arith.mulf %294, %293 : vector<2x256xf32>
    %296 = arith.select %5, %293, %295 : vector<2x256xi1>, vector<2x256xf32>
    %297 = math.tanh %296 : vector<2x256xf32>
    %cst_105 = arith.constant 1.000000e+00 : f32
    %298 = vector.broadcast %cst_105 : f32 to vector<2x256xf32>
    %299 = arith.addf %297, %298 : vector<2x256xf32>
    %cst_106 = arith.constant 5.000000e-01 : f32
    %300 = vector.broadcast %cst_106 : f32 to vector<2x256xf32>
    %301 = arith.mulf %300, %299 : vector<2x256xf32>
    %302 = arith.select %5, %297, %301 : vector<2x256xi1>, vector<2x256xf32>
    %303 = vector.extract_strided_slice %302 {offsets = [0, 0], sizes = [2, 64], strides = [1, 1]} : vector<2x256xf32> to vector<2x64xf32>
    %304 = vector.extract_strided_slice %302 {offsets = [0, 64], sizes = [2, 64], strides = [1, 1]} : vector<2x256xf32> to vector<2x64xf32>
    %305 = vector.extract_strided_slice %302 {offsets = [0, 128], sizes = [2, 64], strides = [1, 1]} : vector<2x256xf32> to vector<2x64xf32>
    %306 = vector.extract_strided_slice %302 {offsets = [0, 192], sizes = [2, 64], strides = [1, 1]} : vector<2x256xf32> to vector<2x64xf32>
    %307 = arith.mulf %304, %283 : vector<2x64xf32>
    %308 = arith.mulf %303, %305 : vector<2x64xf32>
    %309 = arith.addf %307, %308 : vector<2x64xf32>
    %310 = math.tanh %309 : vector<2x64xf32>
    %311 = arith.mulf %306, %310 : vector<2x64xf32>
    %312 = vector.extract_strided_slice %311 {offsets = [0, 0], sizes = [2, 32], strides = [1, 1]} : vector<2x64xf32> to vector<2x32xf32>
    %c2_107 = arith.constant 2 : index
    %c0_108 = arith.constant 0 : index
    %313 = vector.load %arg11[%c2_107, %c0_108] : memref<16x64xf32, #tpu.memory_space<vmem>>, vector<2x32xf32>
    tpu.vector_store %arg11[%c2_107, %c0_108], %312 {strides = array<i32>} : memref<16x64xf32, #tpu.memory_space<vmem>>, vector<2x32xf32>,
    %314 = vector.extract_strided_slice %311 {offsets = [0, 32], sizes = [2, 32], strides = [1, 1]} : vector<2x64xf32> to vector<2x32xf32>
    %c12_109 = arith.constant 12 : index
    %c32_110 = arith.constant 32 : index
    %315 = vector.load %arg11[%c12_109, %c32_110] : memref<16x64xf32, #tpu.memory_space<vmem>>, vector<2x32xf32>
    tpu.vector_store %arg11[%c12_109, %c32_110], %314 {strides = array<i32>} : memref<16x64xf32, #tpu.memory_space<vmem>>, vector<2x32xf32>,
    %316 = arith.select %23, %256, %259 : vector<2x256xi1>, vector<2x256xf32>
    %c0_111 = arith.constant 0 : index
    %c0_112 = arith.constant 0 : index
    %317 = vector.load %arg5[%c0_111, %c0_112] : memref<64x256xf32, #tpu.memory_space<vmem>>, vector<64x256xf32>
    %cst_113 = arith.constant dense<0.000000e+00> : vector<2x256xf32>
    %318 = tpu.matmul %311, %317, %cst_113 {dimension_numbers = #tpu.dot_dimension_numbers<[1], [0], [0], [1], [0, 0, 1, 1], [], []>} : vector<2x64xf32>, vector<64x256xf32>, vector<2x256xf32> -> vector<2x256xf32>
    %319 = arith.addf %316, %318 : vector<2x256xf32>
    %cst_114 = arith.constant 5.000000e-01 : f32
    %320 = vector.broadcast %cst_114 : f32 to vector<2x256xf32>
    %321 = arith.mulf %320, %319 : vector<2x256xf32>
    %322 = arith.select %5, %319, %321 : vector<2x256xi1>, vector<2x256xf32>
    %323 = math.tanh %322 : vector<2x256xf32>
    %cst_115 = arith.constant 1.000000e+00 : f32
    %324 = vector.broadcast %cst_115 : f32 to vector<2x256xf32>
    %325 = arith.addf %323, %324 : vector<2x256xf32>
    %cst_116 = arith.constant 5.000000e-01 : f32
    %326 = vector.broadcast %cst_116 : f32 to vector<2x256xf32>
    %327 = arith.mulf %326, %325 : vector<2x256xf32>
    %328 = arith.select %5, %323, %327 : vector<2x256xi1>, vector<2x256xf32>
    %329 = vector.extract_strided_slice %328 {offsets = [0, 0], sizes = [2, 64], strides = [1, 1]} : vector<2x256xf32> to vector<2x64xf32>
    %330 = vector.extract_strided_slice %328 {offsets = [0, 64], sizes = [2, 64], strides = [1, 1]} : vector<2x256xf32> to vector<2x64xf32>
    %331 = vector.extract_strided_slice %328 {offsets = [0, 128], sizes = [2, 64], strides = [1, 1]} : vector<2x256xf32> to vector<2x64xf32>
    %332 = vector.extract_strided_slice %328 {offsets = [0, 192], sizes = [2, 64], strides = [1, 1]} : vector<2x256xf32> to vector<2x64xf32>
    %333 = arith.mulf %330, %309 : vector<2x64xf32>
    %334 = arith.mulf %329, %331 : vector<2x64xf32>
    %335 = arith.addf %333, %334 : vector<2x64xf32>
    %336 = math.tanh %335 : vector<2x64xf32>
    %337 = arith.mulf %332, %336 : vector<2x64xf32>
    %338 = vector.extract_strided_slice %337 {offsets = [0, 0], sizes = [2, 32], strides = [1, 1]} : vector<2x64xf32> to vector<2x32xf32>
    %c4_117 = arith.constant 4 : index
    %c0_118 = arith.constant 0 : index
    %339 = vector.load %arg11[%c4_117, %c0_118] : memref<16x64xf32, #tpu.memory_space<vmem>>, vector<2x32xf32>
    tpu.vector_store %arg11[%c4_117, %c0_118], %338 {strides = array<i32>} : memref<16x64xf32, #tpu.memory_space<vmem>>, vector<2x32xf32>,
    %340 = vector.extract_strided_slice %337 {offsets = [0, 32], sizes = [2, 32], strides = [1, 1]} : vector<2x64xf32> to vector<2x32xf32>
    %c10_119 = arith.constant 10 : index
    %c32_120 = arith.constant 32 : index
    %341 = vector.load %arg11[%c10_119, %c32_120] : memref<16x64xf32, #tpu.memory_space<vmem>>, vector<2x32xf32>
    tpu.vector_store %arg11[%c10_119, %c32_120], %340 {strides = array<i32>} : memref<16x64xf32, #tpu.memory_space<vmem>>, vector<2x32xf32>,
    %342 = arith.select %23, %257, %258 : vector<2x256xi1>, vector<2x256xf32>
    %c0_121 = arith.constant 0 : index
    %c0_122 = arith.constant 0 : index
    %343 = vector.load %arg5[%c0_121, %c0_122] : memref<64x256xf32, #tpu.memory_space<vmem>>, vector<64x256xf32>
    %cst_123 = arith.constant dense<0.000000e+00> : vector<2x256xf32>
    %344 = tpu.matmul %337, %343, %cst_123 {dimension_numbers = #tpu.dot_dimension_numbers<[1], [0], [0], [1], [0, 0, 1, 1], [], []>} : vector<2x64xf32>, vector<64x256xf32>, vector<2x256xf32> -> vector<2x256xf32>
    %345 = arith.addf %342, %344 : vector<2x256xf32>
    %cst_124 = arith.constant 5.000000e-01 : f32
    %346 = vector.broadcast %cst_124 : f32 to vector<2x256xf32>
    %347 = arith.mulf %346, %345 : vector<2x256xf32>
    %348 = arith.select %5, %345, %347 : vector<2x256xi1>, vector<2x256xf32>
    %349 = math.tanh %348 : vector<2x256xf32>
    %cst_125 = arith.constant 1.000000e+00 : f32
    %350 = vector.broadcast %cst_125 : f32 to vector<2x256xf32>
    %351 = arith.addf %349, %350 : vector<2x256xf32>
    %cst_126 = arith.constant 5.000000e-01 : f32
    %352 = vector.broadcast %cst_126 : f32 to vector<2x256xf32>
    %353 = arith.mulf %352, %351 : vector<2x256xf32>
    %354 = arith.select %5, %349, %353 : vector<2x256xi1>, vector<2x256xf32>
    %355 = vector.extract_strided_slice %354 {offsets = [0, 0], sizes = [2, 64], strides = [1, 1]} : vector<2x256xf32> to vector<2x64xf32>
    %356 = vector.extract_strided_slice %354 {offsets = [0, 64], sizes = [2, 64], strides = [1, 1]} : vector<2x256xf32> to vector<2x64xf32>
    %357 = vector.extract_strided_slice %354 {offsets = [0, 128], sizes = [2, 64], strides = [1, 1]} : vector<2x256xf32> to vector<2x64xf32>
    %358 = vector.extract_strided_slice %354 {offsets = [0, 192], sizes = [2, 64], strides = [1, 1]} : vector<2x256xf32> to vector<2x64xf32>
    %359 = arith.mulf %356, %335 : vector<2x64xf32>
    %360 = arith.mulf %355, %357 : vector<2x64xf32>
    %361 = arith.addf %359, %360 : vector<2x64xf32>
    %362 = math.tanh %361 : vector<2x64xf32>
    %363 = arith.mulf %358, %362 : vector<2x64xf32>
    %364 = vector.extract_strided_slice %363 {offsets = [0, 0], sizes = [2, 32], strides = [1, 1]} : vector<2x64xf32> to vector<2x32xf32>
    %c6_127 = arith.constant 6 : index
    %c0_128 = arith.constant 0 : index
    %365 = vector.load %arg11[%c6_127, %c0_128] : memref<16x64xf32, #tpu.memory_space<vmem>>, vector<2x32xf32>
    tpu.vector_store %arg11[%c6_127, %c0_128], %364 {strides = array<i32>} : memref<16x64xf32, #tpu.memory_space<vmem>>, vector<2x32xf32>,
    %366 = vector.extract_strided_slice %363 {offsets = [0, 32], sizes = [2, 32], strides = [1, 1]} : vector<2x64xf32> to vector<2x32xf32>
    %c8_129 = arith.constant 8 : index
    %c32_130 = arith.constant 32 : index
    %367 = vector.load %arg11[%c8_129, %c32_130] : memref<16x64xf32, #tpu.memory_space<vmem>>, vector<2x32xf32>
    tpu.vector_store %arg11[%c8_129, %c32_130], %366 {strides = array<i32>} : memref<16x64xf32, #tpu.memory_space<vmem>>, vector<2x32xf32>,
    %368 = arith.select %23, %258, %257 : vector<2x256xi1>, vector<2x256xf32>
    %c0_131 = arith.constant 0 : index
    %c0_132 = arith.constant 0 : index
    %369 = vector.load %arg5[%c0_131, %c0_132] : memref<64x256xf32, #tpu.memory_space<vmem>>, vector<64x256xf32>
    %cst_133 = arith.constant dense<0.000000e+00> : vector<2x256xf32>
    %370 = tpu.matmul %363, %369, %cst_133 {dimension_numbers = #tpu.dot_dimension_numbers<[1], [0], [0], [1], [0, 0, 1, 1], [], []>} : vector<2x64xf32>, vector<64x256xf32>, vector<2x256xf32> -> vector<2x256xf32>
    %371 = arith.addf %368, %370 : vector<2x256xf32>
    %cst_134 = arith.constant 5.000000e-01 : f32
    %372 = vector.broadcast %cst_134 : f32 to vector<2x256xf32>
    %373 = arith.mulf %372, %371 : vector<2x256xf32>
    %374 = arith.select %5, %371, %373 : vector<2x256xi1>, vector<2x256xf32>
    %375 = math.tanh %374 : vector<2x256xf32>
    %cst_135 = arith.constant 1.000000e+00 : f32
    %376 = vector.broadcast %cst_135 : f32 to vector<2x256xf32>
    %377 = arith.addf %375, %376 : vector<2x256xf32>
    %cst_136 = arith.constant 5.000000e-01 : f32
    %378 = vector.broadcast %cst_136 : f32 to vector<2x256xf32>
    %379 = arith.mulf %378, %377 : vector<2x256xf32>
    %380 = arith.select %5, %375, %379 : vector<2x256xi1>, vector<2x256xf32>
    %381 = vector.extract_strided_slice %380 {offsets = [0, 0], sizes = [2, 64], strides = [1, 1]} : vector<2x256xf32> to vector<2x64xf32>
    %382 = vector.extract_strided_slice %380 {offsets = [0, 64], sizes = [2, 64], strides = [1, 1]} : vector<2x256xf32> to vector<2x64xf32>
    %383 = vector.extract_strided_slice %380 {offsets = [0, 128], sizes = [2, 64], strides = [1, 1]} : vector<2x256xf32> to vector<2x64xf32>
    %384 = vector.extract_strided_slice %380 {offsets = [0, 192], sizes = [2, 64], strides = [1, 1]} : vector<2x256xf32> to vector<2x64xf32>
    %385 = arith.mulf %382, %361 : vector<2x64xf32>
    %386 = arith.mulf %381, %383 : vector<2x64xf32>
    %387 = arith.addf %385, %386 : vector<2x64xf32>
    %388 = math.tanh %387 : vector<2x64xf32>
    %389 = arith.mulf %384, %388 : vector<2x64xf32>
    %390 = vector.extract_strided_slice %389 {offsets = [0, 0], sizes = [2, 32], strides = [1, 1]} : vector<2x64xf32> to vector<2x32xf32>
    %c8_137 = arith.constant 8 : index
    %c0_138 = arith.constant 0 : index
    %391 = vector.load %arg11[%c8_137, %c0_138] : memref<16x64xf32, #tpu.memory_space<vmem>>, vector<2x32xf32>
    tpu.vector_store %arg11[%c8_137, %c0_138], %390 {strides = array<i32>} : memref<16x64xf32, #tpu.memory_space<vmem>>, vector<2x32xf32>,
    %392 = vector.extract_strided_slice %389 {offsets = [0, 32], sizes = [2, 32], strides = [1, 1]} : vector<2x64xf32> to vector<2x32xf32>
    %c6_139 = arith.constant 6 : index
    %c32_140 = arith.constant 32 : index
    %393 = vector.load %arg11[%c6_139, %c32_140] : memref<16x64xf32, #tpu.memory_space<vmem>>, vector<2x32xf32>
    tpu.vector_store %arg11[%c6_139, %c32_140], %392 {strides = array<i32>} : memref<16x64xf32, #tpu.memory_space<vmem>>, vector<2x32xf32>,
    %394 = arith.select %23, %259, %256 : vector<2x256xi1>, vector<2x256xf32>
    %c0_141 = arith.constant 0 : index
    %c0_142 = arith.constant 0 : index
    %395 = vector.load %arg5[%c0_141, %c0_142] : memref<64x256xf32, #tpu.memory_space<vmem>>, vector<64x256xf32>
    %cst_143 = arith.constant dense<0.000000e+00> : vector<2x256xf32>
    %396 = tpu.matmul %389, %395, %cst_143 {dimension_numbers = #tpu.dot_dimension_numbers<[1], [0], [0], [1], [0, 0, 1, 1], [], []>} : vector<2x64xf32>, vector<64x256xf32>, vector<2x256xf32> -> vector<2x256xf32>
    %397 = arith.addf %394, %396 : vector<2x256xf32>
    %cst_144 = arith.constant 5.000000e-01 : f32
    %398 = vector.broadcast %cst_144 : f32 to vector<2x256xf32>
    %399 = arith.mulf %398, %397 : vector<2x256xf32>
    %400 = arith.select %5, %397, %399 : vector<2x256xi1>, vector<2x256xf32>
    %401 = math.tanh %400 : vector<2x256xf32>
    %cst_145 = arith.constant 1.000000e+00 : f32
    %402 = vector.broadcast %cst_145 : f32 to vector<2x256xf32>
    %403 = arith.addf %401, %402 : vector<2x256xf32>
    %cst_146 = arith.constant 5.000000e-01 : f32
    %404 = vector.broadcast %cst_146 : f32 to vector<2x256xf32>
    %405 = arith.mulf %404, %403 : vector<2x256xf32>
    %406 = arith.select %5, %401, %405 : vector<2x256xi1>, vector<2x256xf32>
    %407 = vector.extract_strided_slice %406 {offsets = [0, 0], sizes = [2, 64], strides = [1, 1]} : vector<2x256xf32> to vector<2x64xf32>
    %408 = vector.extract_strided_slice %406 {offsets = [0, 64], sizes = [2, 64], strides = [1, 1]} : vector<2x256xf32> to vector<2x64xf32>
    %409 = vector.extract_strided_slice %406 {offsets = [0, 128], sizes = [2, 64], strides = [1, 1]} : vector<2x256xf32> to vector<2x64xf32>
    %410 = vector.extract_strided_slice %406 {offsets = [0, 192], sizes = [2, 64], strides = [1, 1]} : vector<2x256xf32> to vector<2x64xf32>
    %411 = arith.mulf %408, %387 : vector<2x64xf32>
    %412 = arith.mulf %407, %409 : vector<2x64xf32>
    %413 = arith.addf %411, %412 : vector<2x64xf32>
    %414 = math.tanh %413 : vector<2x64xf32>
    %415 = arith.mulf %410, %414 : vector<2x64xf32>
    %416 = vector.extract_strided_slice %415 {offsets = [0, 0], sizes = [2, 32], strides = [1, 1]} : vector<2x64xf32> to vector<2x32xf32>
    %c10_147 = arith.constant 10 : index
    %c0_148 = arith.constant 0 : index
    %417 = vector.load %arg11[%c10_147, %c0_148] : memref<16x64xf32, #tpu.memory_space<vmem>>, vector<2x32xf32>
    tpu.vector_store %arg11[%c10_147, %c0_148], %416 {strides = array<i32>} : memref<16x64xf32, #tpu.memory_space<vmem>>, vector<2x32xf32>,
    %418 = vector.extract_strided_slice %415 {offsets = [0, 32], sizes = [2, 32], strides = [1, 1]} : vector<2x64xf32> to vector<2x32xf32>
    %c4_149 = arith.constant 4 : index
    %c32_150 = arith.constant 32 : index
    %419 = vector.load %arg11[%c4_149, %c32_150] : memref<16x64xf32, #tpu.memory_space<vmem>>, vector<2x32xf32>
    tpu.vector_store %arg11[%c4_149, %c32_150], %418 {strides = array<i32>} : memref<16x64xf32, #tpu.memory_space<vmem>>, vector<2x32xf32>,
    %420 = arith.select %23, %260, %255 : vector<2x256xi1>, vector<2x256xf32>
    %c0_151 = arith.constant 0 : index
    %c0_152 = arith.constant 0 : index
    %421 = vector.load %arg5[%c0_151, %c0_152] : memref<64x256xf32, #tpu.memory_space<vmem>>, vector<64x256xf32>
    %cst_153 = arith.constant dense<0.000000e+00> : vector<2x256xf32>
    %422 = tpu.matmul %415, %421, %cst_153 {dimension_numbers = #tpu.dot_dimension_numbers<[1], [0], [0], [1], [0, 0, 1, 1], [], []>} : vector<2x64xf32>, vector<64x256xf32>, vector<2x256xf32> -> vector<2x256xf32>
    %423 = arith.addf %420, %422 : vector<2x256xf32>
    %cst_154 = arith.constant 5.000000e-01 : f32
    %424 = vector.broadcast %cst_154 : f32 to vector<2x256xf32>
    %425 = arith.mulf %424, %423 : vector<2x256xf32>
    %426 = arith.select %5, %423, %425 : vector<2x256xi1>, vector<2x256xf32>
    %427 = math.tanh %426 : vector<2x256xf32>
    %cst_155 = arith.constant 1.000000e+00 : f32
    %428 = vector.broadcast %cst_155 : f32 to vector<2x256xf32>
    %429 = arith.addf %427, %428 : vector<2x256xf32>
    %cst_156 = arith.constant 5.000000e-01 : f32
    %430 = vector.broadcast %cst_156 : f32 to vector<2x256xf32>
    %431 = arith.mulf %430, %429 : vector<2x256xf32>
    %432 = arith.select %5, %427, %431 : vector<2x256xi1>, vector<2x256xf32>
    %433 = vector.extract_strided_slice %432 {offsets = [0, 0], sizes = [2, 64], strides = [1, 1]} : vector<2x256xf32> to vector<2x64xf32>
    %434 = vector.extract_strided_slice %432 {offsets = [0, 64], sizes = [2, 64], strides = [1, 1]} : vector<2x256xf32> to vector<2x64xf32>
    %435 = vector.extract_strided_slice %432 {offsets = [0, 128], sizes = [2, 64], strides = [1, 1]} : vector<2x256xf32> to vector<2x64xf32>
    %436 = vector.extract_strided_slice %432 {offsets = [0, 192], sizes = [2, 64], strides = [1, 1]} : vector<2x256xf32> to vector<2x64xf32>
    %437 = arith.mulf %434, %413 : vector<2x64xf32>
    %438 = arith.mulf %433, %435 : vector<2x64xf32>
    %439 = arith.addf %437, %438 : vector<2x64xf32>
    %440 = math.tanh %439 : vector<2x64xf32>
    %441 = arith.mulf %436, %440 : vector<2x64xf32>
    %442 = vector.extract_strided_slice %441 {offsets = [0, 0], sizes = [2, 32], strides = [1, 1]} : vector<2x64xf32> to vector<2x32xf32>
    %c12_157 = arith.constant 12 : index
    %c0_158 = arith.constant 0 : index
    %443 = vector.load %arg11[%c12_157, %c0_158] : memref<16x64xf32, #tpu.memory_space<vmem>>, vector<2x32xf32>
    tpu.vector_store %arg11[%c12_157, %c0_158], %442 {strides = array<i32>} : memref<16x64xf32, #tpu.memory_space<vmem>>, vector<2x32xf32>,
    %444 = vector.extract_strided_slice %441 {offsets = [0, 32], sizes = [2, 32], strides = [1, 1]} : vector<2x64xf32> to vector<2x32xf32>
    %c2_159 = arith.constant 2 : index
    %c32_160 = arith.constant 32 : index
    %445 = vector.load %arg11[%c2_159, %c32_160] : memref<16x64xf32, #tpu.memory_space<vmem>>, vector<2x32xf32>
    tpu.vector_store %arg11[%c2_159, %c32_160], %444 {strides = array<i32>} : memref<16x64xf32, #tpu.memory_space<vmem>>, vector<2x32xf32>,
    %446 = arith.select %23, %261, %254 : vector<2x256xi1>, vector<2x256xf32>
    %c0_161 = arith.constant 0 : index
    %c0_162 = arith.constant 0 : index
    %447 = vector.load %arg5[%c0_161, %c0_162] : memref<64x256xf32, #tpu.memory_space<vmem>>, vector<64x256xf32>
    %cst_163 = arith.constant dense<0.000000e+00> : vector<2x256xf32>
    %448 = tpu.matmul %441, %447, %cst_163 {dimension_numbers = #tpu.dot_dimension_numbers<[1], [0], [0], [1], [0, 0, 1, 1], [], []>} : vector<2x64xf32>, vector<64x256xf32>, vector<2x256xf32> -> vector<2x256xf32>
    %449 = arith.addf %446, %448 : vector<2x256xf32>
    %cst_164 = arith.constant 5.000000e-01 : f32
    %450 = vector.broadcast %cst_164 : f32 to vector<2x256xf32>
    %451 = arith.mulf %450, %449 : vector<2x256xf32>
    %452 = arith.select %5, %449, %451 : vector<2x256xi1>, vector<2x256xf32>
    %453 = math.tanh %452 : vector<2x256xf32>
    %cst_165 = arith.constant 1.000000e+00 : f32
    %454 = vector.broadcast %cst_165 : f32 to vector<2x256xf32>
    %455 = arith.addf %453, %454 : vector<2x256xf32>
    %cst_166 = arith.constant 5.000000e-01 : f32
    %456 = vector.broadcast %cst_166 : f32 to vector<2x256xf32>
    %457 = arith.mulf %456, %455 : vector<2x256xf32>
    %458 = arith.select %5, %453, %457 : vector<2x256xi1>, vector<2x256xf32>
    %459 = vector.extract_strided_slice %458 {offsets = [0, 0], sizes = [2, 64], strides = [1, 1]} : vector<2x256xf32> to vector<2x64xf32>
    %460 = vector.extract_strided_slice %458 {offsets = [0, 64], sizes = [2, 64], strides = [1, 1]} : vector<2x256xf32> to vector<2x64xf32>
    %461 = vector.extract_strided_slice %458 {offsets = [0, 128], sizes = [2, 64], strides = [1, 1]} : vector<2x256xf32> to vector<2x64xf32>
    %462 = vector.extract_strided_slice %458 {offsets = [0, 192], sizes = [2, 64], strides = [1, 1]} : vector<2x256xf32> to vector<2x64xf32>
    %463 = arith.mulf %460, %439 : vector<2x64xf32>
    %464 = arith.mulf %459, %461 : vector<2x64xf32>
    %465 = arith.addf %463, %464 : vector<2x64xf32>
    %466 = math.tanh %465 : vector<2x64xf32>
    %467 = arith.mulf %462, %466 : vector<2x64xf32>
    %468 = vector.extract_strided_slice %467 {offsets = [0, 0], sizes = [2, 32], strides = [1, 1]} : vector<2x64xf32> to vector<2x32xf32>
    %c14_167 = arith.constant 14 : index
    %c0_168 = arith.constant 0 : index
    %469 = vector.load %arg11[%c14_167, %c0_168] : memref<16x64xf32, #tpu.memory_space<vmem>>, vector<2x32xf32>
    tpu.vector_store %arg11[%c14_167, %c0_168], %468 {strides = array<i32>} : memref<16x64xf32, #tpu.memory_space<vmem>>, vector<2x32xf32>,
    %470 = vector.extract_strided_slice %467 {offsets = [0, 32], sizes = [2, 32], strides = [1, 1]} : vector<2x64xf32> to vector<2x32xf32>
    %c0_169 = arith.constant 0 : index
    %c32_170 = arith.constant 32 : index
    %471 = vector.load %arg11[%c0_169, %c32_170] : memref<16x64xf32, #tpu.memory_space<vmem>>, vector<2x32xf32>
    tpu.vector_store %arg11[%c0_169, %c32_170], %470 {strides = array<i32>} : memref<16x64xf32, #tpu.memory_space<vmem>>, vector<2x32xf32>,
    %c0_171 = arith.constant 0 : index
    %c0_172 = arith.constant 0 : index
    %472 = vector.load %arg11[%c0_171, %c0_172] : memref<16x64xf32, #tpu.memory_space<vmem>>, vector<16x64xf32>
    %c0_173 = arith.constant 0 : index
    %c0_174 = arith.constant 0 : index
    %473 = vector.load %arg7[%c0_173, %c0_174] : memref<1x64xf32, #tpu.memory_space<vmem>>, vector<1x64xf32>
    %474 = vector.broadcast %473 : vector<1x64xf32> to vector<16x64xf32>
    %475 = arith.mulf %472, %474 : vector<16x64xf32>
    %cst_175 = arith.constant dense<0.000000e+00> : vector<16xf32>
    %476 = vector.multi_reduction <add>, %475, %cst_175 [1] : vector<16x64xf32> to vector<16xf32>
    %477 = vector.shape_cast %476 : vector<16xf32> to vector<1x16xf32>
    %c0_176 = arith.constant 0 : index
    %c0_177 = arith.constant 0 : index
    %478 = vector.load %arg8[%c0_176, %c0_177] : memref<1x1xf32, #tpu.memory_space<vmem>>, vector<1x1xf32>
    %479 = vector.broadcast %478 : vector<1x1xf32> to vector<1x16xf32>
    %480 = arith.addf %477, %479 : vector<1x16xf32>
    %481 = arith.negf %480 : vector<1x16xf32>
    %482 = math.exp %481 : vector<1x16xf32>
    %cst_178 = arith.constant 1.000000e+00 : f32
    %483 = vector.broadcast %cst_178 : f32 to vector<1x16xf32>
    %484 = arith.addf %483, %482 : vector<1x16xf32>
    %485 = arith.divf %483, %484 : vector<1x16xf32>
    %cst_179 = arith.constant 3.000000e+00 : f32
    %486 = vector.broadcast %cst_179 : f32 to vector<1x16xf32>
    %487 = arith.mulf %486, %485 : vector<1x16xf32>
    %c0_180 = arith.constant 0 : index
    %c0_181 = arith.constant 0 : index
    %488 = vector.load %arg9[%c0_180, %c0_181] : memref<1x16xf32, #tpu.memory_space<vmem>>, vector<1x16xf32>
    tpu.vector_store %arg9[%c0_180, %c0_181], %487 {strides = array<i32>} : memref<1x16xf32, #tpu.memory_space<vmem>>, vector<1x16xf32>,
    return
  }
}

</mosaic_0001>

<llo_original>
// kernel: _bilstm_regressor_forward.1
$region0: #{_bilstm_regressor_forward.1}
  #allocation0 [shape = 'u32[]', space=smem, size = 0x4, offset = 0x4, fixed_abs, tag = 'smem constant byte address 0x4 - core index']
  #allocation1 [shape = 'u32[144,128]{1,0:T(1,128)}', space=vmem, size = 0x12000, scoped, tag = 'internal scratch']
  #allocation2 [shape = 'f32[16,64]{1,0:T(8,128)}', space=vmem, size = 0x2000, scoped, tag = 'scratch operand']
  #allocation3 [shape = 'f32[16,64]{1,0:T(8,128)}', space=vmem, size = 0x2000, scoped, tag = 'scratch operand']
  #allocation4 [shape = 'f32[1,1]{1,0:T(1,128)S(1)}', space=vmem, size = 0x200, scoped, tag = 'scoped memory for _bilstm_regressor_forward.1']
  %s0 = inlined_call_operand.vmem [shape: f32[16,32], index: 0, kind: input, shape index: {}]
  %s1 = inlined_call_operand.vmem [shape: f32[32,256], index: 1, kind: input, shape index: {}]
  %s2 = inlined_call_operand.vmem [shape: f32[64,256], index: 2, kind: input, shape index: {}]
  %s3 = inlined_call_operand.vmem [shape: f32[1,256], index: 3, kind: input, shape index: {}]
  %s4 = inlined_call_operand.vmem [shape: f32[64,256], index: 4, kind: input, shape index: {}]
  %s5 = inlined_call_operand.vmem [shape: f32[64,256], index: 5, kind: input, shape index: {}]
  %s6 = inlined_call_operand.vmem [shape: f32[1,256], index: 6, kind: input, shape index: {}]
  %s7 = inlined_call_operand.vmem [shape: f32[1,64], index: 7, kind: input, shape index: {}]
  %s8 = inlined_call_operand.<no memory space> [shape: f32[1,1], index: 8, kind: input, shape index: {}]
  %s9 = inlined_call_operand.vmem [shape: f32[1,16], index: 9, kind: output, shape index: {}]
  %s10 = sld [smem:[#allocation0]]
  $region46: #{_bilstm_regressor_forward.1} parent=0
    _
  %s12 = ssub.s32 1, %s10
  %s13 = scalar_select 0, %s12, %s10
  %v14 = vstv %s8
  %15 = vst [vmem:[#allocation4] sm:$0x1] %v14
  // Predicated region
  $region2: #{_bilstm_regressor_forward.1} parent=0 // pred_check
    _
  $region3: #{_bilstm_regressor_forward.1} parent=0 // pred_check_branch
    %17 = sbr.rel (0) target = $region5
  $region4: #{_bilstm_regressor_forward.1} parent=0 // pred_region
    _
  $region5: #{_bilstm_regressor_forward.1} parent=0 // pred_fallthru
    _
  // Predicated region
  $region6: #{_bilstm_regressor_forward.1} parent=0 // pred_check
    _
  $region7: #{_bilstm_regressor_forward.1} parent=0 // pred_check_branch
    %19 = sbr.rel (0) target = $region9
  $region8: #{_bilstm_regressor_forward.1} parent=0 // pred_region
    _
  $region9: #{_bilstm_regressor_forward.1} parent=0 // pred_fallthru
    _
  // Predicated region
  $region10: #{_bilstm_regressor_forward.1} parent=0 // pred_check
    _
  $region11: #{_bilstm_regressor_forward.1} parent=0 // pred_check_branch
    %21 = sbr.rel (0) target = $region13
  $region12: #{_bilstm_regressor_forward.1} parent=0 // pred_region
    _
  $region13: #{_bilstm_regressor_forward.1} parent=0 // pred_fallthru
    _
  // Predicated region
  $region14: #{_bilstm_regressor_forward.1} parent=0 // pred_check
    _
  $region15: #{_bilstm_regressor_forward.1} parent=0 // pred_check_branch
    %23 = sbr.rel (0) target = $region17
  $region16: #{_bilstm_regressor_forward.1} parent=0 // pred_region
    _
  $region17: #{_bilstm_regressor_forward.1} parent=0 // pred_fallthru
    _
  // Predicated region
  $region18: #{_bilstm_regressor_forward.1} parent=0 // pred_check
    _
  $region19: #{_bilstm_regressor_forward.1} parent=0 // pred_check_branch
    %25 = sbr.rel (0) target = $region21
  $region20: #{_bilstm_regressor_forward.1} parent=0 // pred_region
    _
  $region21: #{_bilstm_regressor_forward.1} parent=0 // pred_fallthru
    _
  // Predicated region
  $region22: #{_bilstm_regressor_forward.1} parent=0 // pred_check
    _
  $region23: #{_bilstm_regressor_forward.1} parent=0 // pred_check_branch
    %27 = sbr.rel (0) target = $region25
  $region24: #{_bilstm_regressor_forward.1} parent=0 // pred_region
    _
  $region25: #{_bilstm_regressor_forward.1} parent=0 // pred_fallthru
    _
  // Predicated region
  $region26: #{_bilstm_regressor_forward.1} parent=0 // pred_check
    _
  $region27: #{_bilstm_regressor_forward.1} parent=0 // pred_check_branch
    %29 = sbr.rel (0) target = $region29
  $region28: #{_bilstm_regressor_forward.1} parent=0 // pred_region
    _
  $region29: #{_bilstm_regressor_forward.1} parent=0 // pred_fallthru
    _
  // Predicated region
  $region30: #{_bilstm_regressor_forward.1} parent=0 // pred_check
    _
  $region31: #{_bilstm_regressor_forward.1} parent=0 // pred_check_branch
    %31 = sbr.rel (0) target = $region33
  $region32: #{_bilstm_regressor_forward.1} parent=0 // pred_region
    _
  $region33: #{_bilstm_regressor_forward.1} parent=0 // pred_fallthru
    _
  // Predicated region
  $region34: #{_bilstm_regressor_forward.1} parent=0 // pred_check
    _
  $region35: #{_bilstm_regressor_forward.1} parent=0 // pred_check_branch
    %33 = sbr.rel (0) target = $region37
  $region36: #{_bilstm_regressor_forward.1} parent=0 // pred_region
    _
  $region37: #{_bilstm_regressor_forward.1} parent=0 // pred_fallthru
    _
  %v34 = vlaneseq
  %v35 = vand.u32 %v34, 127
  %v36 = vadd.s32 %v35, 128
  %vm37 = vcmp.ge.s32.totalorder %v35, 128
  %vm38 = vcmp.ge.s32.totalorder %v36, 128
  %vm39 = vcmp.lt.s32.totalorder %v35, 192
  %vm40 = vcmp.lt.s32.totalorder %v36, 192
  %vm41 = vmand %vm37, %vm39
  %vm42 = vmand %vm38, %vm40
  %vm43 = vcmp.lt.s32.totalorder %v35, 0
  %v44 = vsub.s32 0, %v35
  %v45 = vsel %vm43, %v44, %v35
  %v46 = vshrl.u32 %v45, 6
  %v47 = vand.u32 %v45, 63
  %v48 = vsub.s32 0, %v47
  %v49 = vsel %vm43, %v48, %v47
  %vm50 = vcmp.lt.s32.totalorder %v36, 0
  %v51 = vsub.s32 0, %v36
  %v52 = vsel %vm50, %v51, %v36
  %v53 = vshrl.u32 %v52, 6
  %v54 = vand.u32 %v52, 63
  %v55 = vsub.s32 0, %v54
  %v56 = vsel %vm50, %v55, %v54
  %vm57 = vcmp.ne.s32.totalorder %v49, 0
  %vm58 = vcmp.ne.s32.totalorder %v56, 0
  %vm59 = vcmp.lt.s32.totalorder %v49, 0
  %vm60 = vcmp.lt.s32.totalorder %v56, 0
  %vm61 = vmand %vm59, %vm57
  %vm62 = vmand %vm60, %vm58
  %v63 = vadd.s32 %v49, 64
  %v64 = vadd.s32 %v56, 64
  %v65 = vsel %vm61, %v63, %v49
  %v66 = vsel %vm62, %v64, %v56
  %vm67 = vcmp.lt.s32.totalorder %v65, 32
  %vm68 = vcmp.lt.s32.totalorder %v66, 32
  %v69 = vld [vmem:[%s0] sm:$0xff]
  %v70 = vld [vmem:[%s0 + $0x8] sm:$0xff]
  %v71 = vld [vmem:[%s1] sm:$0xff]
  %v72 = vld [vmem:[%s1 + $0x8] sm:$0xff]
  %v73 = vld [vmem:[%s1 + $0x10] sm:$0xff]
  %v74 = vld [vmem:[%s1 + $0x18] sm:$0xff]
  %v75 = vld [vmem:[%s1 + $0x20] sm:$0xff]
  %v76 = vld [vmem:[%s1 + $0x28] sm:$0xff]
  %v77 = vld [vmem:[%s1 + $0x30] sm:$0xff]
  %v78 = vld [vmem:[%s1 + $0x38] sm:$0xff]
  %v79 = vld [vmem:[%s3] sm:$0x3]
  %v81 = vlaneseq
  %v82 = vshrl.u32 %v81, 7
  %v83 = vsub.s32 0, %v82
  %v84 = vrot.slane %v79, %v83
  %v85 = vlaneseq
  %v86 = vshrl.u32 %v85, 7
  %v87 = vsub.s32 1, %v86
  %v88 = vrot.slane %v79, %v87
  %vm91 = vcmask 261120
  %v93 = vsel %vm91, %v69, 0
  %v96 = vsel %vm91, %v70, 0
  %98 = vmatprep.subr.mxu0 0.0
  %99 = vmatpush1.msra.mxu0 0.0
  %100 = vmatprep.subr.mxu0 0.0
  %101 = vmatpush1.msra.mxu0 0.0
  %102 = vmatprep.subr.mxu0 0.0
  %103 = vmatpush1.msra.mxu0 0.0
  %104 = vmatprep.subr.mxu0 0.0
  %105 = vmatpush1.msra.mxu0 0.0
  %106 = vmatprep.subr.mxu0 0.0
  %107 = vmatpush1.msra.mxu0 0.0
  %108 = vmatprep.subr.mxu0 0.0
  %109 = vmatpush1.msra.mxu0 0.0
  %110 = vmatprep.subr.mxu0 0.0
  %111 = vmatpush1.msra.mxu0 0.0
  %112 = vmatprep.subr.mxu0 0.0
  %113 = vmatpush1.msra.mxu0 0.0
  %114 = vmatprep.subr.mxu0 0.0
  %115 = vmatpush1.msra.mxu0 0.0
  %116 = vmatprep.subr.mxu0 0.0
  %117 = vmatpush1.msra.mxu0 0.0
  %118 = vmatprep.subr.mxu0 0.0
  %119 = vmatpush1.msra.mxu0 0.0
  %120 = vmatprep.subr.mxu0 0.0
  %121 = vmatpush1.msra.mxu0 0.0
  %122 = vmatprep.subr.mxu0 %v78
  %123 = vmatpush1.msra.mxu0 %v77
  %124 = vmatprep.subr.mxu0 %v76
  %125 = vmatpush1.msra.mxu0 %v75
  %126 = vmatprep.subr.mxu0 %v74
  %127 = vmatpush1.msra.mxu0 %v73
  %128 = vmatprep.subr.mxu0 %v72
  %129 = vmatpush1.msra.mxu0 %v71
  %130 = vmatprep.subr.mxu0 0.0
  %131 = vmatpush2.msra.mxu0 0.0
  %132 = vmatprep.subr.mxu0 0.0
  %133 = vmatpush2.msra.mxu0 0.0
  %134 = vmatprep.subr.mxu0 0.0
  %135 = vmatpush2.msra.mxu0 0.0
  %136 = vmatprep.subr.mxu0 0.0
  %137 = vmatpush2.msra.mxu0 0.0
  %138 = vmatprep.subr.mxu0 0.0
  %139 = vmatpush2.msra.mxu0 0.0
  %140 = vmatprep.subr.mxu0 0.0
  %141 = vmatpush2.msra.mxu0 0.0
  %142 = vmatprep.subr.mxu0 0.0
  %143 = vmatpush2.msra.mxu0 0.0
  %144 = vmatprep.subr.mxu0 0.0
  %145 = vmatpush2.msra.mxu0 0.0
  %146 = vmatprep.subr.mxu0 0.0
  %147 = vmatpush2.msra.mxu0 0.0
  %148 = vmatprep.subr.mxu0 0.0
  %149 = vmatpush2.msra.mxu0 0.0
  %150 = vmatprep.subr.mxu0 0.0
  %151 = vmatpush2.msra.mxu0 0.0
  %152 = vmatprep.subr.mxu0 0.0
  %153 = vmatpush2.msra.mxu0 0.0
  %154 = vmatprep.subr.mxu0 0.0
  %155 = vmatpush2.msra.mxu0 0.0
  %156 = vmatprep.subr.mxu0 0.0
  %157 = vmatpush2.msra.mxu0 0.0
  %158 = vmatprep.subr.mxu0 0.0
  %159 = vmatpush2.msra.mxu0 0.0
  %160 = vmatprep.subr.mxu0 0.0
  %161 = vmatpush2.msra.mxu0 0.0
  %162 = vmatprep.mubr.f32.mxu0 0.0
  %163 = vmatmul.mubr.f32.gmra.mxu0 %v93
  %v164 = vpop.f32.mrf.mxu0
  %v165 = vadd.f32 %v84, %v164
  %v166 = vpop.f32.mrf.mxu0
  %v167 = vadd.f32 %v88, %v166
  %168 = vmatprep.mubr.f32.mxu0 0.0
  %169 = vmatmul.mubr.f32.gmra.mxu0 %v96
  %v170 = vpop.f32.mrf.mxu0
  %v171 = vadd.f32 %v84, %v170
  %v172 = vpop.f32.mrf.mxu0
  %v173 = vadd.f32 %v88, %v172
  %174 = vdwg.mxu0
  %v177 = vrot.slane %v171, 6
  %v178 = vrot.slane %v173, 6
  %v181 = vsel %vm67, %v165, %v177
  %v182 = vsel %vm68, %v167, %v178
  %v183 = vld [vmem:[%s2] sm:$0xff]
  %v184 = vld [vmem:[%s2 + $0x8] sm:$0xff]
  %v185 = vld [vmem:[%s2 + $0x10] sm:$0xff]
  %v186 = vld [vmem:[%s2 + $0x18] sm:$0xff]
  %v187 = vld [vmem:[%s2 + $0x20] sm:$0xff]
  %v188 = vld [vmem:[%s2 + $0x28] sm:$0xff]
  %v189 = vld [vmem:[%s2 + $0x30] sm:$0xff]
  %v190 = vld [vmem:[%s2 + $0x38] sm:$0xff]
  %v191 = vld [vmem:[%s2 + $0x40] sm:$0xff]
  %v192 = vld [vmem:[%s2 + $0x48] sm:$0xff]
  %v193 = vld [vmem:[%s2 + $0x50] sm:$0xff]
  %v194 = vld [vmem:[%s2 + $0x58] sm:$0xff]
  %v195 = vld [vmem:[%s2 + $0x60] sm:$0xff]
  %v196 = vld [vmem:[%s2 + $0x68] sm:$0xff]
  %v197 = vld [vmem:[%s2 + $0x70] sm:$0xff]
  %v198 = vld [vmem:[%s2 + $0x78] sm:$0xff]
  %vm199 = vcmask 523264
  %v201 = vsel %vm199, 0.0, 0
  %203 = vmatprep.subr.mxu0 0.0
  %204 = vmatpush1.msra.mxu0 0.0
  %205 = vmatprep.subr.mxu0 0.0
  %206 = vmatpush1.msra.mxu0 0.0
  %207 = vmatprep.subr.mxu0 0.0
  %208 = vmatpush1.msra.mxu0 0.0
  %209 = vmatprep.subr.mxu0 0.0
  %210 = vmatpush1.msra.mxu0 0.0
  %211 = vmatprep.subr.mxu0 0.0
  %212 = vmatpush1.msra.mxu0 0.0
  %213 = vmatprep.subr.mxu0 0.0
  %214 = vmatpush1.msra.mxu0 0.0
  %215 = vmatprep.subr.mxu0 0.0
  %216 = vmatpush1.msra.mxu0 0.0
  %217 = vmatprep.subr.mxu0 0.0
  %218 = vmatpush1.msra.mxu0 0.0
  %219 = vmatprep.subr.mxu0 %v198
  %220 = vmatpush1.msra.mxu0 %v197
  %221 = vmatprep.subr.mxu0 %v196
  %222 = vmatpush1.msra.mxu0 %v195
  %223 = vmatprep.subr.mxu0 %v194
  %224 = vmatpush1.msra.mxu0 %v193
  %225 = vmatprep.subr.mxu0 %v192
  %226 = vmatpush1.msra.mxu0 %v191
  %227 = vmatprep.subr.mxu0 %v190
  %228 = vmatpush1.msra.mxu0 %v189
  %229 = vmatprep.subr.mxu0 %v188
  %230 = vmatpush1.msra.mxu0 %v187
  %231 = vmatprep.subr.mxu0 %v186
  %232 = vmatpush1.msra.mxu0 %v185
  %233 = vmatprep.subr.mxu0 %v184
  %234 = vmatpush1.msra.mxu0 %v183
  %235 = vmatprep.subr.mxu0 0.0
  %236 = vmatpush2.msra.mxu0 0.0
  %237 = vmatprep.subr.mxu0 0.0
  %238 = vmatpush2.msra.mxu0 0.0
  %239 = vmatprep.subr.mxu0 0.0
  %240 = vmatpush2.msra.mxu0 0.0
  %241 = vmatprep.subr.mxu0 0.0
  %242 = vmatpush2.msra.mxu0 0.0
  %243 = vmatprep.subr.mxu0 0.0
  %244 = vmatpush2.msra.mxu0 0.0
  %245 = vmatprep.subr.mxu0 0.0
  %246 = vmatpush2.msra.mxu0 0.0
  %247 = vmatprep.subr.mxu0 0.0
  %248 = vmatpush2.msra.mxu0 0.0
  %249 = vmatprep.subr.mxu0 0.0
  %250 = vmatpush2.msra.mxu0 0.0
  %251 = vmatprep.subr.mxu0 0.0
  %252 = vmatpush2.msra.mxu0 0.0
  %253 = vmatprep.subr.mxu0 0.0
  %254 = vmatpush2.msra.mxu0 0.0
  %255 = vmatprep.subr.mxu0 0.0
  %256 = vmatpush2.msra.mxu0 0.0
  %257 = vmatprep.subr.mxu0 0.0
  %258 = vmatpush2.msra.mxu0 0.0
  %259 = vmatprep.subr.mxu0 0.0
  %260 = vmatpush2.msra.mxu0 0.0
  %261 = vmatprep.subr.mxu0 0.0
  %262 = vmatpush2.msra.mxu0 0.0
  %263 = vmatprep.subr.mxu0 0.0
  %264 = vmatpush2.msra.mxu0 0.0
  %265 = vmatprep.subr.mxu0 0.0
  %266 = vmatpush2.msra.mxu0 0.0
  %267 = vmatprep.mubr.f32.mxu0 0.0
  %268 = vmatmul.mubr.f32.gmra.mxu0 %v201
  %v269 = vpop.f32.mrf.mxu0
  %v270 = vadd.f32 0.0, %v269
  %v271 = vpop.f32.mrf.mxu0
  %v272 = vadd.f32 0.0, %v271
  %273 = vdwg.mxu0
  %v274 = vadd.f32 %v181, %v270
  %v275 = vadd.f32 %v182, %v272
  %v276 = vmul.f32 %v274, 0.5
  %v277 = vmul.f32 %v275, 0.5
  %v278 = vsel %vm41, %v274, %v276
  %v279 = vsel %vm42, %v275, %v277
  %v280 = vtanh.pop %v278
  %v281 = vtanh.pop %v279
  %v282 = vadd.f32 %v280, 1.0
  %v283 = vadd.f32 %v281, 1.0
  %v284 = vmul.f32 %v282, 0.5
  %v285 = vmul.f32 %v283, 0.5
  %v286 = vsel %vm41, %v280, %v284
  %v287 = vsel %vm42, %v281, %v285
  %v288 = vmul.f32 %v286, 0.0
  %v289 = vmul.f32 %v286, %v287
  %291 = vrot.lane.b32.xlu0 %v289, 64
  %v292 = vpop.permute.xlu0 %291
  %v294 = vadd.f32 %v288, %v292
  %v295 = vtanh.pop %v294
  %v296 = vmul.f32 %v287, %v295
  %298 = vrot.lane.b32.xlu0 %v296, 64
  %v299 = vpop.permute.xlu0 %298
  %vm301 = vcmask 254976
  %302 = vst.msk [vmem:[#allocation2] sm:$0x3] %vm301, %v299
  %vm303 = vcmask 517376
  %304 = vst.msk [vmem:[#allocation2 + $0xe] sm:$0x3] %vm303, %v299
  %v305 = vrot.slane %v171, 2
  %v306 = vrot.slane %v173, 2
  %v309 = vsel %vm67, %v165, %v305
  %v310 = vsel %vm68, %v167, %v306
  %v311 = vld [vmem:[%s2] sm:$0xff]
  %v312 = vld [vmem:[%s2 + $0x8] sm:$0xff]
  %v313 = vld [vmem:[%s2 + $0x10] sm:$0xff]
  %v314 = vld [vmem:[%s2 + $0x18] sm:$0xff]
  %v315 = vld [vmem:[%s2 + $0x20] sm:$0xff]
  %v316 = vld [vmem:[%s2 + $0x28] sm:$0xff]
  %v317 = vld [vmem:[%s2 + $0x30] sm:$0xff]
  %v318 = vld [vmem:[%s2 + $0x38] sm:$0xff]
  %v319 = vld [vmem:[%s2 + $0x40] sm:$0xff]
  %v320 = vld [vmem:[%s2 + $0x48] sm:$0xff]
  %v321 = vld [vmem:[%s2 + $0x50] sm:$0xff]
  %v322 = vld [vmem:[%s2 + $0x58] sm:$0xff]
  %v323 = vld [vmem:[%s2 + $0x60] sm:$0xff]
  %v324 = vld [vmem:[%s2 + $0x68] sm:$0xff]
  %v325 = vld [vmem:[%s2 + $0x70] sm:$0xff]
  %v326 = vld [vmem:[%s2 + $0x78] sm:$0xff]
  %v327 = vsel %vm199, %v299, 0
  %329 = vmatprep.subr.mxu0 0.0
  %330 = vmatpush1.msra.mxu0 0.0
  %331 = vmatprep.subr.mxu0 0.0
  %332 = vmatpush1.msra.mxu0 0.0
  %333 = vmatprep.subr.mxu0 0.0
  %334 = vmatpush1.msra.mxu0 0.0
  %335 = vmatprep.subr.mxu0 0.0
  %336 = vmatpush1.msra.mxu0 0.0
  %337 = vmatprep.subr.mxu0 0.0
  %338 = vmatpush1.msra.mxu0 0.0
  %339 = vmatprep.subr.mxu0 0.0
  %340 = vmatpush1.msra.mxu0 0.0
  %341 = vmatprep.subr.mxu0 0.0
  %342 = vmatpush1.msra.mxu0 0.0
  %343 = vmatprep.subr.mxu0 0.0
  %344 = vmatpush1.msra.mxu0 0.0
  %345 = vmatprep.subr.mxu0 %v326
  %346 = vmatpush1.msra.mxu0 %v325
  %347 = vmatprep.subr.mxu0 %v324
  %348 = vmatpush1.msra.mxu0 %v323
  %349 = vmatprep.subr.mxu0 %v322
  %350 = vmatpush1.msra.mxu0 %v321
  %351 = vmatprep.subr.mxu0 %v320
  %352 = vmatpush1.msra.mxu0 %v319
  %353 = vmatprep.subr.mxu0 %v318
  %354 = vmatpush1.msra.mxu0 %v317
  %355 = vmatprep.subr.mxu0 %v316
  %356 = vmatpush1.msra.mxu0 %v315
  %357 = vmatprep.subr.mxu0 %v314
  %358 = vmatpush1.msra.mxu0 %v313
  %359 = vmatprep.subr.mxu0 %v312
  %360 = vmatpush1.msra.mxu0 %v311
  %361 = vmatprep.subr.mxu0 0.0
  %362 = vmatpush2.msra.mxu0 0.0
  %363 = vmatprep.subr.mxu0 0.0
  %364 = vmatpush2.msra.mxu0 0.0
  %365 = vmatprep.subr.mxu0 0.0
  %366 = vmatpush2.msra.mxu0 0.0
  %367 = vmatprep.subr.mxu0 0.0
  %368 = vmatpush2.msra.mxu0 0.0
  %369 = vmatprep.subr.mxu0 0.0
  %370 = vmatpush2.msra.mxu0 0.0
  %371 = vmatprep.subr.mxu0 0.0
  %372 = vmatpush2.msra.mxu0 0.0
  %373 = vmatprep.subr.mxu0 0.0
  %374 = vmatpush2.msra.mxu0 0.0
  %375 = vmatprep.subr.mxu0 0.0
  %376 = vmatpush2.msra.mxu0 0.0
  %377 = vmatprep.subr.mxu0 0.0
  %378 = vmatpush2.msra.mxu0 0.0
  %379 = vmatprep.subr.mxu0 0.0
  %380 = vmatpush2.msra.mxu0 0.0
  %381 = vmatprep.subr.mxu0 0.0
  %382 = vmatpush2.msra.mxu0 0.0
  %383 = vmatprep.subr.mxu0 0.0
  %384 = vmatpush2.msra.mxu0 0.0
  %385 = vmatprep.subr.mxu0 0.0
  %386 = vmatpush2.msra.mxu0 0.0
  %387 = vmatprep.subr.mxu0 0.0
  %388 = vmatpush2.msra.mxu0 0.0
  %389 = vmatprep.subr.mxu0 0.0
  %390 = vmatpush2.msra.mxu0 0.0
  %391 = vmatprep.subr.mxu0 0.0
  %392 = vmatpush2.msra.mxu0 0.0
  %393 = vmatprep.mubr.f32.mxu0 0.0
  %394 = vmatmul.mubr.f32.gmra.mxu0 %v327
  %v395 = vpop.f32.mrf.mxu0
  %v396 = vadd.f32 0.0, %v395
  %v397 = vpop.f32.mrf.mxu0
  %v398 = vadd.f32 0.0, %v397
  %399 = vdwg.mxu0
  %v402 = vrot.slane %v396, 6
  %v403 = vrot.slane %v398, 6
  %v406 = vadd.f32 %v309, %v402
  %v407 = vadd.f32 %v310, %v403
  %v408 = vmul.f32 %v406, 0.5
  %v409 = vmul.f32 %v407, 0.5
  %v410 = vsel %vm41, %v406, %v408
  %v411 = vsel %vm42, %v407, %v409
  %v412 = vtanh.pop %v410
  %v413 = vtanh.pop %v411
  %v414 = vadd.f32 %v412, 1.0
  %v415 = vadd.f32 %v413, 1.0
  %v416 = vmul.f32 %v414, 0.5
  %v417 = vmul.f32 %v415, 0.5
  %v418 = vsel %vm41, %v412, %v416
  %v419 = vsel %vm42, %v413, %v417
  %v421 = vrot.slane %v294, 6
  %v423 = vmul.f32 %v418, %v421
  %v424 = vmul.f32 %v418, %v419
  %426 = vrot.lane.b32.xlu0 %v424, 64
  %v427 = vpop.permute.xlu0 %426
  %v429 = vadd.f32 %v423, %v427
  %v430 = vtanh.pop %v429
  %v431 = vmul.f32 %v419, %v430
  %433 = vrot.lane.b32.xlu0 %v431, 64
  %v434 = vpop.permute.xlu0 %433
  %vm436 = vcmask 257026
  %437 = vst.msk [vmem:[#allocation2] sm:$0xc] %vm436, %v434
  %vm438 = vcmask 519426
  %439 = vst.msk [vmem:[#allocation2 + $0xa] sm:$0xc] %vm438, %v434
  %v440 = vld [vmem:[%s2] sm:$0xff]
  %v441 = vld [vmem:[%s2 + $0x8] sm:$0xff]
  %v442 = vld [vmem:[%s2 + $0x10] sm:$0xff]
  %v443 = vld [vmem:[%s2 + $0x18] sm:$0xff]
  %v444 = vld [vmem:[%s2 + $0x20] sm:$0xff]
  %v445 = vld [vmem:[%s2 + $0x28] sm:$0xff]
  %v446 = vld [vmem:[%s2 + $0x30] sm:$0xff]
  %v447 = vld [vmem:[%s2 + $0x38] sm:$0xff]
  %v448 = vld [vmem:[%s2 + $0x40] sm:$0xff]
  %v449 = vld [vmem:[%s2 + $0x48] sm:$0xff]
  %v450 = vld [vmem:[%s2 + $0x50] sm:$0xff]
  %v451 = vld [vmem:[%s2 + $0x58] sm:$0xff]
  %v452 = vld [vmem:[%s2 + $0x60] sm:$0xff]
  %v453 = vld [vmem:[%s2 + $0x68] sm:$0xff]
  %v454 = vld [vmem:[%s2 + $0x70] sm:$0xff]
  %v455 = vld [vmem:[%s2 + $0x78] sm:$0xff]
  %v456 = vrot.slane %v431, 2
  %457 = vrot.lane.b32.xlu0 %v456, 64
  %v458 = vpop.permute.xlu0 %457
  %v459 = vsel %vm199, %v458, 0
  %461 = vmatprep.subr.mxu0 0.0
  %462 = vmatpush1.msra.mxu0 0.0
  %463 = vmatprep.subr.mxu0 0.0
  %464 = vmatpush1.msra.mxu0 0.0
  %465 = vmatprep.subr.mxu0 0.0
  %466 = vmatpush1.msra.mxu0 0.0
  %467 = vmatprep.subr.mxu0 0.0
  %468 = vmatpush1.msra.mxu0 0.0
  %469 = vmatprep.subr.mxu0 0.0
  %470 = vmatpush1.msra.mxu0 0.0
  %471 = vmatprep.subr.mxu0 0.0
  %472 = vmatpush1.msra.mxu0 0.0
  %473 = vmatprep.subr.mxu0 0.0
  %474 = vmatpush1.msra.mxu0 0.0
  %475 = vmatprep.subr.mxu0 0.0
  %476 = vmatpush1.msra.mxu0 0.0
  %477 = vmatprep.subr.mxu0 %v455
  %478 = vmatpush1.msra.mxu0 %v454
  %479 = vmatprep.subr.mxu0 %v453
  %480 = vmatpush1.msra.mxu0 %v452
  %481 = vmatprep.subr.mxu0 %v451
  %482 = vmatpush1.msra.mxu0 %v450
  %483 = vmatprep.subr.mxu0 %v449
  %484 = vmatpush1.msra.mxu0 %v448
  %485 = vmatprep.subr.mxu0 %v447
  %486 = vmatpush1.msra.mxu0 %v446
  %487 = vmatprep.subr.mxu0 %v445
  %488 = vmatpush1.msra.mxu0 %v444
  %489 = vmatprep.subr.mxu0 %v443
  %490 = vmatpush1.msra.mxu0 %v442
  %491 = vmatprep.subr.mxu0 %v441
  %492 = vmatpush1.msra.mxu0 %v440
  %493 = vmatprep.subr.mxu0 0.0
  %494 = vmatpush2.msra.mxu0 0.0
  %495 = vmatprep.subr.mxu0 0.0
  %496 = vmatpush2.msra.mxu0 0.0
  %497 = vmatprep.subr.mxu0 0.0
  %498 = vmatpush2.msra.mxu0 0.0
  %499 = vmatprep.subr.mxu0 0.0
  %500 = vmatpush2.msra.mxu0 0.0
  %501 = vmatprep.subr.mxu0 0.0
  %502 = vmatpush2.msra.mxu0 0.0
  %503 = vmatprep.subr.mxu0 0.0
  %504 = vmatpush2.msra.mxu0 0.0
  %505 = vmatprep.subr.mxu0 0.0
  %506 = vmatpush2.msra.mxu0 0.0
  %507 = vmatprep.subr.mxu0 0.0
  %508 = vmatpush2.msra.mxu0 0.0
  %509 = vmatprep.subr.mxu0 0.0
  %510 = vmatpush2.msra.mxu0 0.0
  %511 = vmatprep.subr.mxu0 0.0
  %512 = vmatpush2.msra.mxu0 0.0
  %513 = vmatprep.subr.mxu0 0.0
  %514 = vmatpush2.msra.mxu0 0.0
  %515 = vmatprep.subr.mxu0 0.0
  %516 = vmatpush2.msra.mxu0 0.0
  %517 = vmatprep.subr.mxu0 0.0
  %518 = vmatpush2.msra.mxu0 0.0
  %519 = vmatprep.subr.mxu0 0.0
  %520 = vmatpush2.msra.mxu0 0.0
  %521 = vmatprep.subr.mxu0 0.0
  %522 = vmatpush2.msra.mxu0 0.0
  %523 = vmatprep.subr.mxu0 0.0
  %524 = vmatpush2.msra.mxu0 0.0
  %525 = vmatprep.mubr.f32.mxu0 0.0
  %526 = vmatmul.mubr.f32.gmra.mxu0 %v459
  %v527 = vpop.f32.mrf.mxu0
  %v528 = vadd.f32 0.0, %v527
  %v529 = vpop.f32.mrf.mxu0
  %v530 = vadd.f32 0.0, %v529
  %531 = vdwg.mxu0
  %v534 = vrot.slane %v528, 4
  %v535 = vrot.slane %v530, 4
  %v538 = vadd.f32 %v181, %v534
  %v539 = vadd.f32 %v182, %v535
  %v540 = vmul.f32 %v538, 0.5
  %v541 = vmul.f32 %v539, 0.5
  %v542 = vsel %vm41, %v538, %v540
  %v543 = vsel %vm42, %v539, %v541
  %v544 = vtanh.pop %v542
  %v545 = vtanh.pop %v543
  %v546 = vadd.f32 %v544, 1.0
  %v547 = vadd.f32 %v545, 1.0
  %v548 = vmul.f32 %v546, 0.5
  %v549 = vmul.f32 %v547, 0.5
  %v550 = vsel %vm41, %v544, %v548
  %v551 = vsel %vm42, %v545, %v549
  %v553 = vrot.slane %v429, 6
  %v555 = vmul.f32 %v550, %v553
  %v556 = vmul.f32 %v550, %v551
  %558 = vrot.lane.b32.xlu0 %v556, 64
  %v559 = vpop.permute.xlu0 %558
  %v561 = vadd.f32 %v555, %v559
  %v562 = vtanh.pop %v561
  %v563 = vmul.f32 %v551, %v562
  %565 = vrot.lane.b32.xlu0 %v563, 64
  %v566 = vpop.permute.xlu0 %565
  %vm568 = vcmask 259076
  %569 = vst.msk [vmem:[#allocation2] sm:$0x30] %vm568, %v566
  %vm570 = vcmask 521476
  %571 = vst.msk [vmem:[#allocation2 + $0x6] sm:$0x30] %vm570, %v566
  %v572 = vld [vmem:[%s2] sm:$0xff]
  %v573 = vld [vmem:[%s2 + $0x8] sm:$0xff]
  %v574 = vld [vmem:[%s2 + $0x10] sm:$0xff]
  %v575 = vld [vmem:[%s2 + $0x18] sm:$0xff]
  %v576 = vld [vmem:[%s2 + $0x20] sm:$0xff]
  %v577 = vld [vmem:[%s2 + $0x28] sm:$0xff]
  %v578 = vld [vmem:[%s2 + $0x30] sm:$0xff]
  %v579 = vld [vmem:[%s2 + $0x38] sm:$0xff]
  %v580 = vld [vmem:[%s2 + $0x40] sm:$0xff]
  %v581 = vld [vmem:[%s2 + $0x48] sm:$0xff]
  %v582 = vld [vmem:[%s2 + $0x50] sm:$0xff]
  %v583 = vld [vmem:[%s2 + $0x58] sm:$0xff]
  %v584 = vld [vmem:[%s2 + $0x60] sm:$0xff]
  %v585 = vld [vmem:[%s2 + $0x68] sm:$0xff]
  %v586 = vld [vmem:[%s2 + $0x70] sm:$0xff]
  %v587 = vld [vmem:[%s2 + $0x78] sm:$0xff]
  %v588 = vrot.slane %v563, 4
  %589 = vrot.lane.b32.xlu0 %v588, 64
  %v590 = vpop.permute.xlu0 %589
  %v591 = vsel %vm199, %v590, 0
  %593 = vmatprep.subr.mxu0 0.0
  %594 = vmatpush1.msra.mxu0 0.0
  %595 = vmatprep.subr.mxu0 0.0
  %596 = vmatpush1.msra.mxu0 0.0
  %597 = vmatprep.subr.mxu0 0.0
  %598 = vmatpush1.msra.mxu0 0.0
  %599 = vmatprep.subr.mxu0 0.0
  %600 = vmatpush1.msra.mxu0 0.0
  %601 = vmatprep.subr.mxu0 0.0
  %602 = vmatpush1.msra.mxu0 0.0
  %603 = vmatprep.subr.mxu0 0.0
  %604 = vmatpush1.msra.mxu0 0.0
  %605 = vmatprep.subr.mxu0 0.0
  %606 = vmatpush1.msra.mxu0 0.0
  %607 = vmatprep.subr.mxu0 0.0
  %608 = vmatpush1.msra.mxu0 0.0
  %609 = vmatprep.subr.mxu0 %v587
  %610 = vmatpush1.msra.mxu0 %v586
  %611 = vmatprep.subr.mxu0 %v585
  %612 = vmatpush1.msra.mxu0 %v584
  %613 = vmatprep.subr.mxu0 %v583
  %614 = vmatpush1.msra.mxu0 %v582
  %615 = vmatprep.subr.mxu0 %v581
  %616 = vmatpush1.msra.mxu0 %v580
  %617 = vmatprep.subr.mxu0 %v579
  %618 = vmatpush1.msra.mxu0 %v578
  %619 = vmatprep.subr.mxu0 %v577
  %620 = vmatpush1.msra.mxu0 %v576
  %621 = vmatprep.subr.mxu0 %v575
  %622 = vmatpush1.msra.mxu0 %v574
  %623 = vmatprep.subr.mxu0 %v573
  %624 = vmatpush1.msra.mxu0 %v572
  %625 = vmatprep.subr.mxu0 0.0
  %626 = vmatpush2.msra.mxu0 0.0
  %627 = vmatprep.subr.mxu0 0.0
  %628 = vmatpush2.msra.mxu0 0.0
  %629 = vmatprep.subr.mxu0 0.0
  %630 = vmatpush2.msra.mxu0 0.0
  %631 = vmatprep.subr.mxu0 0.0
  %632 = vmatpush2.msra.mxu0 0.0
  %633 = vmatprep.subr.mxu0 0.0
  %634 = vmatpush2.msra.mxu0 0.0
  %635 = vmatprep.subr.mxu0 0.0
  %636 = vmatpush2.msra.mxu0 0.0
  %637 = vmatprep.subr.mxu0 0.0
  %638 = vmatpush2.msra.mxu0 0.0
  %639 = vmatprep.subr.mxu0 0.0
  %640 = vmatpush2.msra.mxu0 0.0
  %641 = vmatprep.subr.mxu0 0.0
  %642 = vmatpush2.msra.mxu0 0.0
  %643 = vmatprep.subr.mxu0 0.0
  %644 = vmatpush2.msra.mxu0 0.0
  %645 = vmatprep.subr.mxu0 0.0
  %646 = vmatpush2.msra.mxu0 0.0
  %647 = vmatprep.subr.mxu0 0.0
  %648 = vmatpush2.msra.mxu0 0.0
  %649 = vmatprep.subr.mxu0 0.0
  %650 = vmatpush2.msra.mxu0 0.0
  %651 = vmatprep.subr.mxu0 0.0
  %652 = vmatpush2.msra.mxu0 0.0
  %653 = vmatprep.subr.mxu0 0.0
  %654 = vmatpush2.msra.mxu0 0.0
  %655 = vmatprep.subr.mxu0 0.0
  %656 = vmatpush2.msra.mxu0 0.0
  %657 = vmatprep.mubr.f32.mxu0 0.0
  %658 = vmatmul.mubr.f32.gmra.mxu0 %v591
  %v659 = vpop.f32.mrf.mxu0
  %v660 = vadd.f32 0.0, %v659
  %v661 = vpop.f32.mrf.mxu0
  %v662 = vadd.f32 0.0, %v661
  %663 = vdwg.mxu0
  %v666 = vrot.slane %v660, 2
  %v667 = vrot.slane %v662, 2
  %v670 = vadd.f32 %v309, %v666
  %v671 = vadd.f32 %v310, %v667
  %v672 = vmul.f32 %v670, 0.5
  %v673 = vmul.f32 %v671, 0.5
  %v674 = vsel %vm41, %v670, %v672
  %v675 = vsel %vm42, %v671, %v673
  %v676 = vtanh.pop %v674
  %v677 = vtanh.pop %v675
  %v678 = vadd.f32 %v676, 1.0
  %v679 = vadd.f32 %v677, 1.0
  %v680 = vmul.f32 %v678, 0.5
  %v681 = vmul.f32 %v679, 0.5
  %v682 = vsel %vm41, %v676, %v680
  %v683 = vsel %vm42, %v677, %v681
  %v685 = vrot.slane %v561, 6
  %v687 = vmul.f32 %v682, %v685
  %v688 = vmul.f32 %v682, %v683
  %690 = vrot.lane.b32.xlu0 %v688, 64
  %v691 = vpop.permute.xlu0 %690
  %v693 = vadd.f32 %v687, %v691
  %v694 = vtanh.pop %v693
  %v695 = vmul.f32 %v683, %v694
  %697 = vrot.lane.b32.xlu0 %v695, 64
  %v698 = vpop.permute.xlu0 %697
  %vm700 = vcmask 261126
  %701 = vst.msk [vmem:[#allocation2] sm:$0xc0] %vm700, %v698
  %vm702 = vcmask 523526
  %703 = vst.msk [vmem:[#allocation2 + $0x2] sm:$0xc0] %vm702, %v698
  %v706 = vrot.slane %v165, 6
  %v707 = vrot.slane %v167, 6
  %v710 = vsel %vm67, %v171, %v706
  %v711 = vsel %vm68, %v173, %v707
  %v712 = vld [vmem:[%s2] sm:$0xff]
  %v713 = vld [vmem:[%s2 + $0x8] sm:$0xff]
  %v714 = vld [vmem:[%s2 + $0x10] sm:$0xff]
  %v715 = vld [vmem:[%s2 + $0x18] sm:$0xff]
  %v716 = vld [vmem:[%s2 + $0x20] sm:$0xff]
  %v717 = vld [vmem:[%s2 + $0x28] sm:$0xff]
  %v718 = vld [vmem:[%s2 + $0x30] sm:$0xff]
  %v719 = vld [vmem:[%s2 + $0x38] sm:$0xff]
  %v720 = vld [vmem:[%s2 + $0x40] sm:$0xff]
  %v721 = vld [vmem:[%s2 + $0x48] sm:$0xff]
  %v722 = vld [vmem:[%s2 + $0x50] sm:$0xff]
  %v723 = vld [vmem:[%s2 + $0x58] sm:$0xff]
  %v724 = vld [vmem:[%s2 + $0x60] sm:$0xff]
  %v725 = vld [vmem:[%s2 + $0x68] sm:$0xff]
  %v726 = vld [vmem:[%s2 + $0x70] sm:$0xff]
  %v727 = vld [vmem:[%s2 + $0x78] sm:$0xff]
  %v728 = vrot.slane %v695, 6
  %729 = vrot.lane.b32.xlu0 %v728, 64
  %v730 = vpop.permute.xlu0 %729
  %v731 = vsel %vm199, %v730, 0
  %733 = vmatprep.subr.mxu0 0.0
  %734 = vmatpush1.msra.mxu0 0.0
  %735 = vmatprep.subr.mxu0 0.0
  %736 = vmatpush1.msra.mxu0 0.0
  %737 = vmatprep.subr.mxu0 0.0
  %738 = vmatpush1.msra.mxu0 0.0
  %739 = vmatprep.subr.mxu0 0.0
  %740 = vmatpush1.msra.mxu0 0.0
  %741 = vmatprep.subr.mxu0 0.0
  %742 = vmatpush1.msra.mxu0 0.0
  %743 = vmatprep.subr.mxu0 0.0
  %744 = vmatpush1.msra.mxu0 0.0
  %745 = vmatprep.subr.mxu0 0.0
  %746 = vmatpush1.msra.mxu0 0.0
  %747 = vmatprep.subr.mxu0 0.0
  %748 = vmatpush1.msra.mxu0 0.0
  %749 = vmatprep.subr.mxu0 %v727
  %750 = vmatpush1.msra.mxu0 %v726
  %751 = vmatprep.subr.mxu0 %v725
  %752 = vmatpush1.msra.mxu0 %v724
  %753 = vmatprep.subr.mxu0 %v723
  %754 = vmatpush1.msra.mxu0 %v722
  %755 = vmatprep.subr.mxu0 %v721
  %756 = vmatpush1.msra.mxu0 %v720
  %757 = vmatprep.subr.mxu0 %v719
  %758 = vmatpush1.msra.mxu0 %v718
  %759 = vmatprep.subr.mxu0 %v717
  %760 = vmatpush1.msra.mxu0 %v716
  %761 = vmatprep.subr.mxu0 %v715
  %762 = vmatpush1.msra.mxu0 %v714
  %763 = vmatprep.subr.mxu0 %v713
  %764 = vmatpush1.msra.mxu0 %v712
  %765 = vmatprep.subr.mxu0 0.0
  %766 = vmatpush2.msra.mxu0 0.0
  %767 = vmatprep.subr.mxu0 0.0
  %768 = vmatpush2.msra.mxu0 0.0
  %769 = vmatprep.subr.mxu0 0.0
  %770 = vmatpush2.msra.mxu0 0.0
  %771 = vmatprep.subr.mxu0 0.0
  %772 = vmatpush2.msra.mxu0 0.0
  %773 = vmatprep.subr.mxu0 0.0
  %774 = vmatpush2.msra.mxu0 0.0
  %775 = vmatprep.subr.mxu0 0.0
  %776 = vmatpush2.msra.mxu0 0.0
  %777 = vmatprep.subr.mxu0 0.0
  %778 = vmatpush2.msra.mxu0 0.0
  %779 = vmatprep.subr.mxu0 0.0
  %780 = vmatpush2.msra.mxu0 0.0
  %781 = vmatprep.subr.mxu0 0.0
  %782 = vmatpush2.msra.mxu0 0.0
  %783 = vmatprep.subr.mxu0 0.0
  %784 = vmatpush2.msra.mxu0 0.0
  %785 = vmatprep.subr.mxu0 0.0
  %786 = vmatpush2.msra.mxu0 0.0
  %787 = vmatprep.subr.mxu0 0.0
  %788 = vmatpush2.msra.mxu0 0.0
  %789 = vmatprep.subr.mxu0 0.0
  %790 = vmatpush2.msra.mxu0 0.0
  %791 = vmatprep.subr.mxu0 0.0
  %792 = vmatpush2.msra.mxu0 0.0
  %793 = vmatprep.subr.mxu0 0.0
  %794 = vmatpush2.msra.mxu0 0.0
  %795 = vmatprep.subr.mxu0 0.0
  %796 = vmatpush2.msra.mxu0 0.0
  %797 = vmatprep.mubr.f32.mxu0 0.0
  %798 = vmatmul.mubr.f32.gmra.mxu0 %v731
  %v799 = vpop.f32.mrf.mxu0
  %v800 = vadd.f32 0.0, %v799
  %v801 = vpop.f32.mrf.mxu0
  %v802 = vadd.f32 0.0, %v801
  %803 = vdwg.mxu0
  %v804 = vadd.f32 %v710, %v800
  %v805 = vadd.f32 %v711, %v802
  %v806 = vmul.f32 %v804, 0.5
  %v807 = vmul.f32 %v805, 0.5
  %v808 = vsel %vm41, %v804, %v806
  %v809 = vsel %vm42, %v805, %v807
  %v810 = vtanh.pop %v808
  %v811 = vtanh.pop %v809
  %v812 = vadd.f32 %v810, 1.0
  %v813 = vadd.f32 %v811, 1.0
  %v814 = vmul.f32 %v812, 0.5
  %v815 = vmul.f32 %v813, 0.5
  %v816 = vsel %vm41, %v810, %v814
  %v817 = vsel %vm42, %v811, %v815
  %v819 = vrot.slane %v693, 6
  %v821 = vmul.f32 %v816, %v819
  %v822 = vmul.f32 %v816, %v817
  %824 = vrot.lane.b32.xlu0 %v822, 64
  %v825 = vpop.permute.xlu0 %824
  %v827 = vadd.f32 %v821, %v825
  %v828 = vtanh.pop %v827
  %v829 = vmul.f32 %v817, %v828
  %831 = vrot.lane.b32.xlu0 %v829, 64
  %v832 = vpop.permute.xlu0 %831
  %834 = vst.msk [vmem:[#allocation2 + $0x8] sm:$0x3] %vm301, %v832
  %835 = vst.msk [vmem:[#allocation2 + $0x6] sm:$0x3] %vm303, %v832
  %v836 = vrot.slane %v165, 2
  %v837 = vrot.slane %v167, 2
  %v840 = vsel %vm67, %v171, %v836
  %v841 = vsel %vm68, %v173, %v837
  %v842 = vld [vmem:[%s2] sm:$0xff]
  %v843 = vld [vmem:[%s2 + $0x8] sm:$0xff]
  %v844 = vld [vmem:[%s2 + $0x10] sm:$0xff]
  %v845 = vld [vmem:[%s2 + $0x18] sm:$0xff]
  %v846 = vld [vmem:[%s2 + $0x20] sm:$0xff]
  %v847 = vld [vmem:[%s2 + $0x28] sm:$0xff]
  %v848 = vld [vmem:[%s2 + $0x30] sm:$0xff]
  %v849 = vld [vmem:[%s2 + $0x38] sm:$0xff]
  %v850 = vld [vmem:[%s2 + $0x40] sm:$0xff]
  %v851 = vld [vmem:[%s2 + $0x48] sm:$0xff]
  %v852 = vld [vmem:[%s2 + $0x50] sm:$0xff]
  %v853 = vld [vmem:[%s2 + $0x58] sm:$0xff]
  %v854 = vld [vmem:[%s2 + $0x60] sm:$0xff]
  %v855 = vld [vmem:[%s2 + $0x68] sm:$0xff]
  %v856 = vld [vmem:[%s2 + $0x70] sm:$0xff]
  %v857 = vld [vmem:[%s2 + $0x78] sm:$0xff]
  %v858 = vsel %vm199, %v832, 0
  %860 = vmatprep.subr.mxu0 0.0
  %861 = vmatpush1.msra.mxu0 0.0
  %862 = vmatprep.subr.mxu0 0.0
  %863 = vmatpush1.msra.mxu0 0.0
  %864 = vmatprep.subr.mxu0 0.0
  %865 = vmatpush1.msra.mxu0 0.0
  %866 = vmatprep.subr.mxu0 0.0
  %867 = vmatpush1.msra.mxu0 0.0
  %868 = vmatprep.subr.mxu0 0.0
  %869 = vmatpush1.msra.mxu0 0.0
  %870 = vmatprep.subr.mxu0 0.0
  %871 = vmatpush1.msra.mxu0 0.0
  %872 = vmatprep.subr.mxu0 0.0
  %873 = vmatpush1.msra.mxu0 0.0
  %874 = vmatprep.subr.mxu0 0.0
  %875 = vmatpush1.msra.mxu0 0.0
  %876 = vmatprep.subr.mxu0 %v857
  %877 = vmatpush1.msra.mxu0 %v856
  %878 = vmatprep.subr.mxu0 %v855
  %879 = vmatpush1.msra.mxu0 %v854
  %880 = vmatprep.subr.mxu0 %v853
  %881 = vmatpush1.msra.mxu0 %v852
  %882 = vmatprep.subr.mxu0 %v851
  %883 = vmatpush1.msra.mxu0 %v850
  %884 = vmatprep.subr.mxu0 %v849
  %885 = vmatpush1.msra.mxu0 %v848
  %886 = vmatprep.subr.mxu0 %v847
  %887 = vmatpush1.msra.mxu0 %v846
  %888 = vmatprep.subr.mxu0 %v845
  %889 = vmatpush1.msra.mxu0 %v844
  %890 = vmatprep.subr.mxu0 %v843
  %891 = vmatpush1.msra.mxu0 %v842
  %892 = vmatprep.subr.mxu0 0.0
  %893 = vmatpush2.msra.mxu0 0.0
  %894 = vmatprep.subr.mxu0 0.0
  %895 = vmatpush2.msra.mxu0 0.0
  %896 = vmatprep.subr.mxu0 0.0
  %897 = vmatpush2.msra.mxu0 0.0
  %898 = vmatprep.subr.mxu0 0.0
  %899 = vmatpush2.msra.mxu0 0.0
  %900 = vmatprep.subr.mxu0 0.0
  %901 = vmatpush2.msra.mxu0 0.0
  %902 = vmatprep.subr.mxu0 0.0
  %903 = vmatpush2.msra.mxu0 0.0
  %904 = vmatprep.subr.mxu0 0.0
  %905 = vmatpush2.msra.mxu0 0.0
  %906 = vmatprep.subr.mxu0 0.0
  %907 = vmatpush2.msra.mxu0 0.0
  %908 = vmatprep.subr.mxu0 0.0
  %909 = vmatpush2.msra.mxu0 0.0
  %910 = vmatprep.subr.mxu0 0.0
  %911 = vmatpush2.msra.mxu0 0.0
  %912 = vmatprep.subr.mxu0 0.0
  %913 = vmatpush2.msra.mxu0 0.0
  %914 = vmatprep.subr.mxu0 0.0
  %915 = vmatpush2.msra.mxu0 0.0
  %916 = vmatprep.subr.mxu0 0.0
  %917 = vmatpush2.msra.mxu0 0.0
  %918 = vmatprep.subr.mxu0 0.0
  %919 = vmatpush2.msra.mxu0 0.0
  %920 = vmatprep.subr.mxu0 0.0
  %921 = vmatpush2.msra.mxu0 0.0
  %922 = vmatprep.subr.mxu0 0.0
  %923 = vmatpush2.msra.mxu0 0.0
  %924 = vmatprep.mubr.f32.mxu0 0.0
  %925 = vmatmul.mubr.f32.gmra.mxu0 %v858
  %v926 = vpop.f32.mrf.mxu0
  %v927 = vadd.f32 0.0, %v926
  %v928 = vpop.f32.mrf.mxu0
  %v929 = vadd.f32 0.0, %v928
  %930 = vdwg.mxu0
  %v933 = vrot.slane %v927, 6
  %v934 = vrot.slane %v929, 6
  %v937 = vadd.f32 %v840, %v933
  %v938 = vadd.f32 %v841, %v934
  %v939 = vmul.f32 %v937, 0.5
  %v940 = vmul.f32 %v938, 0.5
  %v941 = vsel %vm41, %v937, %v939
  %v942 = vsel %vm42, %v938, %v940
  %v943 = vtanh.pop %v941
  %v944 = vtanh.pop %v942
  %v945 = vadd.f32 %v943, 1.0
  %v946 = vadd.f32 %v944, 1.0
  %v947 = vmul.f32 %v945, 0.5
  %v948 = vmul.f32 %v946, 0.5
  %v949 = vsel %vm41, %v943, %v947
  %v950 = vsel %vm42, %v944, %v948
  %v952 = vrot.slane %v827, 6
  %v954 = vmul.f32 %v949, %v952
  %v955 = vmul.f32 %v949, %v950
  %957 = vrot.lane.b32.xlu0 %v955, 64
  %v958 = vpop.permute.xlu0 %957
  %v960 = vadd.f32 %v954, %v958
  %v961 = vtanh.pop %v960
  %v962 = vmul.f32 %v950, %v961
  %964 = vrot.lane.b32.xlu0 %v962, 64
  %v965 = vpop.permute.xlu0 %964
  %967 = vst.msk [vmem:[#allocation2 + $0x8] sm:$0xc] %vm436, %v965
  %968 = vst.msk [vmem:[#allocation2 + $0x2] sm:$0xc] %vm438, %v965
  %v969 = vld [vmem:[%s2] sm:$0xff]
  %v970 = vld [vmem:[%s2 + $0x8] sm:$0xff]
  %v971 = vld [vmem:[%s2 + $0x10] sm:$0xff]
  %v972 = vld [vmem:[%s2 + $0x18] sm:$0xff]
  %v973 = vld [vmem:[%s2 + $0x20] sm:$0xff]
  %v974 = vld [vmem:[%s2 + $0x28] sm:$0xff]
  %v975 = vld [vmem:[%s2 + $0x30] sm:$0xff]
  %v976 = vld [vmem:[%s2 + $0x38] sm:$0xff]
  %v977 = vld [vmem:[%s2 + $0x40] sm:$0xff]
  %v978 = vld [vmem:[%s2 + $0x48] sm:$0xff]
  %v979 = vld [vmem:[%s2 + $0x50] sm:$0xff]
  %v980 = vld [vmem:[%s2 + $0x58] sm:$0xff]
  %v981 = vld [vmem:[%s2 + $0x60] sm:$0xff]
  %v982 = vld [vmem:[%s2 + $0x68] sm:$0xff]
  %v983 = vld [vmem:[%s2 + $0x70] sm:$0xff]
  %v984 = vld [vmem:[%s2 + $0x78] sm:$0xff]
  %v985 = vrot.slane %v962, 2
  %986 = vrot.lane.b32.xlu0 %v985, 64
  %v987 = vpop.permute.xlu0 %986
  %v988 = vsel %vm199, %v987, 0
  %990 = vmatprep.subr.mxu0 0.0
  %991 = vmatpush1.msra.mxu0 0.0
  %992 = vmatprep.subr.mxu0 0.0
  %993 = vmatpush1.msra.mxu0 0.0
  %994 = vmatprep.subr.mxu0 0.0
  %995 = vmatpush1.msra.mxu0 0.0
  %996 = vmatprep.subr.mxu0 0.0
  %997 = vmatpush1.msra.mxu0 0.0
  %998 = vmatprep.subr.mxu0 0.0
  %999 = vmatpush1.msra.mxu0 0.0
  %1000 = vmatprep.subr.mxu0 0.0
  %1001 = vmatpush1.msra.mxu0 0.0
  %1002 = vmatprep.subr.mxu0 0.0
  %1003 = vmatpush1.msra.mxu0 0.0
  %1004 = vmatprep.subr.mxu0 0.0
  %1005 = vmatpush1.msra.mxu0 0.0
  %1006 = vmatprep.subr.mxu0 %v984
  %1007 = vmatpush1.msra.mxu0 %v983
  %1008 = vmatprep.subr.mxu0 %v982
  %1009 = vmatpush1.msra.mxu0 %v981
  %1010 = vmatprep.subr.mxu0 %v980
  %1011 = vmatpush1.msra.mxu0 %v979
  %1012 = vmatprep.subr.mxu0 %v978
  %1013 = vmatpush1.msra.mxu0 %v977
  %1014 = vmatprep.subr.mxu0 %v976
  %1015 = vmatpush1.msra.mxu0 %v975
  %1016 = vmatprep.subr.mxu0 %v974
  %1017 = vmatpush1.msra.mxu0 %v973
  %1018 = vmatprep.subr.mxu0 %v972
  %1019 = vmatpush1.msra.mxu0 %v971
  %1020 = vmatprep.subr.mxu0 %v970
  %1021 = vmatpush1.msra.mxu0 %v969
  %1022 = vmatprep.subr.mxu0 0.0
  %1023 = vmatpush2.msra.mxu0 0.0
  %1024 = vmatprep.subr.mxu0 0.0
  %1025 = vmatpush2.msra.mxu0 0.0
  %1026 = vmatprep.subr.mxu0 0.0
  %1027 = vmatpush2.msra.mxu0 0.0
  %1028 = vmatprep.subr.mxu0 0.0
  %1029 = vmatpush2.msra.mxu0 0.0
  %1030 = vmatprep.subr.mxu0 0.0
  %1031 = vmatpush2.msra.mxu0 0.0
  %1032 = vmatprep.subr.mxu0 0.0
  %1033 = vmatpush2.msra.mxu0 0.0
  %1034 = vmatprep.subr.mxu0 0.0
  %1035 = vmatpush2.msra.mxu0 0.0
  %1036 = vmatprep.subr.mxu0 0.0
  %1037 = vmatpush2.msra.mxu0 0.0
  %1038 = vmatprep.subr.mxu0 0.0
  %1039 = vmatpush2.msra.mxu0 0.0
  %1040 = vmatprep.subr.mxu0 0.0
  %1041 = vmatpush2.msra.mxu0 0.0
  %1042 = vmatprep.subr.mxu0 0.0
  %1043 = vmatpush2.msra.mxu0 0.0
  %1044 = vmatprep.subr.mxu0 0.0
  %1045 = vmatpush2.msra.mxu0 0.0
  %1046 = vmatprep.subr.mxu0 0.0
  %1047 = vmatpush2.msra.mxu0 0.0
  %1048 = vmatprep.subr.mxu0 0.0
  %1049 = vmatpush2.msra.mxu0 0.0
  %1050 = vmatprep.subr.mxu0 0.0
  %1051 = vmatpush2.msra.mxu0 0.0
  %1052 = vmatprep.subr.mxu0 0.0
  %1053 = vmatpush2.msra.mxu0 0.0
  %1054 = vmatprep.mubr.f32.mxu0 0.0
  %1055 = vmatmul.mubr.f32.gmra.mxu0 %v988
  %v1056 = vpop.f32.mrf.mxu0
  %v1057 = vadd.f32 0.0, %v1056
  %v1058 = vpop.f32.mrf.mxu0
  %v1059 = vadd.f32 0.0, %v1058
  %1060 = vdwg.mxu0
  %v1063 = vrot.slane %v1057, 4
  %v1064 = vrot.slane %v1059, 4
  %v1067 = vadd.f32 %v710, %v1063
  %v1068 = vadd.f32 %v711, %v1064
  %v1069 = vmul.f32 %v1067, 0.5
  %v1070 = vmul.f32 %v1068, 0.5
  %v1071 = vsel %vm41, %v1067, %v1069
  %v1072 = vsel %vm42, %v1068, %v1070
  %v1073 = vtanh.pop %v1071
  %v1074 = vtanh.pop %v1072
  %v1075 = vadd.f32 %v1073, 1.0
  %v1076 = vadd.f32 %v1074, 1.0
  %v1077 = vmul.f32 %v1075, 0.5
  %v1078 = vmul.f32 %v1076, 0.5
  %v1079 = vsel %vm41, %v1073, %v1077
  %v1080 = vsel %vm42, %v1074, %v1078
  %v1082 = vrot.slane %v960, 6
  %v1084 = vmul.f32 %v1079, %v1082
  %v1085 = vmul.f32 %v1079, %v1080
  %1087 = vrot.lane.b32.xlu0 %v1085, 64
  %v1088 = vpop.permute.xlu0 %1087
  %v1090 = vadd.f32 %v1084, %v1088
  %v1091 = vtanh.pop %v1090
  %v1092 = vmul.f32 %v1080, %v1091
  %1094 = vrot.lane.b32.xlu0 %v1092, 64
  %v1095 = vpop.permute.xlu0 %1094
  %1097 = vst.msk [vmem:[#allocation2 + $0x8] sm:$0x30] %vm568, %v1095
  %1098 = vst.msk [vmem:[#allocation2 - $0x2] sm:$0x30] %vm570, %v1095
  %v1099 = vld [vmem:[%s2] sm:$0xff]
  %v1100 = vld [vmem:[%s2 + $0x8] sm:$0xff]
  %v1101 = vld [vmem:[%s2 + $0x10] sm:$0xff]
  %v1102 = vld [vmem:[%s2 + $0x18] sm:$0xff]
  %v1103 = vld [vmem:[%s2 + $0x20] sm:$0xff]
  %v1104 = vld [vmem:[%s2 + $0x28] sm:$0xff]
  %v1105 = vld [vmem:[%s2 + $0x30] sm:$0xff]
  %v1106 = vld [vmem:[%s2 + $0x38] sm:$0xff]
  %v1107 = vld [vmem:[%s2 + $0x40] sm:$0xff]
  %v1108 = vld [vmem:[%s2 + $0x48] sm:$0xff]
  %v1109 = vld [vmem:[%s2 + $0x50] sm:$0xff]
  %v1110 = vld [vmem:[%s2 + $0x58] sm:$0xff]
  %v1111 = vld [vmem:[%s2 + $0x60] sm:$0xff]
  %v1112 = vld [vmem:[%s2 + $0x68] sm:$0xff]
  %v1113 = vld [vmem:[%s2 + $0x70] sm:$0xff]
  %v1114 = vld [vmem:[%s2 + $0x78] sm:$0xff]
  %v1115 = vrot.slane %v1092, 4
  %1116 = vrot.lane.b32.xlu0 %v1115, 64
  %v1117 = vpop.permute.xlu0 %1116
  %v1118 = vsel %vm199, %v1117, 0
  %1120 = vmatprep.subr.mxu0 0.0
  %1121 = vmatpush1.msra.mxu0 0.0
  %1122 = vmatprep.subr.mxu0 0.0
  %1123 = vmatpush1.msra.mxu0 0.0
  %1124 = vmatprep.subr.mxu0 0.0
  %1125 = vmatpush1.msra.mxu0 0.0
  %1126 = vmatprep.subr.mxu0 0.0
  %1127 = vmatpush1.msra.mxu0 0.0
  %1128 = vmatprep.subr.mxu0 0.0
  %1129 = vmatpush1.msra.mxu0 0.0
  %1130 = vmatprep.subr.mxu0 0.0
  %1131 = vmatpush1.msra.mxu0 0.0
  %1132 = vmatprep.subr.mxu0 0.0
  %1133 = vmatpush1.msra.mxu0 0.0
  %1134 = vmatprep.subr.mxu0 0.0
  %1135 = vmatpush1.msra.mxu0 0.0
  %1136 = vmatprep.subr.mxu0 %v1114
  %1137 = vmatpush1.msra.mxu0 %v1113
  %1138 = vmatprep.subr.mxu0 %v1112
  %1139 = vmatpush1.msra.mxu0 %v1111
  %1140 = vmatprep.subr.mxu0 %v1110
  %1141 = vmatpush1.msra.mxu0 %v1109
  %1142 = vmatprep.subr.mxu0 %v1108
  %1143 = vmatpush1.msra.mxu0 %v1107
  %1144 = vmatprep.subr.mxu0 %v1106
  %1145 = vmatpush1.msra.mxu0 %v1105
  %1146 = vmatprep.subr.mxu0 %v1104
  %1147 = vmatpush1.msra.mxu0 %v1103
  %1148 = vmatprep.subr.mxu0 %v1102
  %1149 = vmatpush1.msra.mxu0 %v1101
  %1150 = vmatprep.subr.mxu0 %v1100
  %1151 = vmatpush1.msra.mxu0 %v1099
  %1152 = vmatprep.subr.mxu0 0.0
  %1153 = vmatpush2.msra.mxu0 0.0
  %1154 = vmatprep.subr.mxu0 0.0
  %1155 = vmatpush2.msra.mxu0 0.0
  %1156 = vmatprep.subr.mxu0 0.0
  %1157 = vmatpush2.msra.mxu0 0.0
  %1158 = vmatprep.subr.mxu0 0.0
  %1159 = vmatpush2.msra.mxu0 0.0
  %1160 = vmatprep.subr.mxu0 0.0
  %1161 = vmatpush2.msra.mxu0 0.0
  %1162 = vmatprep.subr.mxu0 0.0
  %1163 = vmatpush2.msra.mxu0 0.0
  %1164 = vmatprep.subr.mxu0 0.0
  %1165 = vmatpush2.msra.mxu0 0.0
  %1166 = vmatprep.subr.mxu0 0.0
  %1167 = vmatpush2.msra.mxu0 0.0
  %1168 = vmatprep.subr.mxu0 0.0
  %1169 = vmatpush2.msra.mxu0 0.0
  %1170 = vmatprep.subr.mxu0 0.0
  %1171 = vmatpush2.msra.mxu0 0.0
  %1172 = vmatprep.subr.mxu0 0.0
  %1173 = vmatpush2.msra.mxu0 0.0
  %1174 = vmatprep.subr.mxu0 0.0
  %1175 = vmatpush2.msra.mxu0 0.0
  %1176 = vmatprep.subr.mxu0 0.0
  %1177 = vmatpush2.msra.mxu0 0.0
  %1178 = vmatprep.subr.mxu0 0.0
  %1179 = vmatpush2.msra.mxu0 0.0
  %1180 = vmatprep.subr.mxu0 0.0
  %1181 = vmatpush2.msra.mxu0 0.0
  %1182 = vmatprep.subr.mxu0 0.0
  %1183 = vmatpush2.msra.mxu0 0.0
  %1184 = vmatprep.mubr.f32.mxu0 0.0
  %1185 = vmatmul.mubr.f32.gmra.mxu0 %v1118
  %v1186 = vpop.f32.mrf.mxu0
  %v1187 = vadd.f32 0.0, %v1186
  %v1188 = vpop.f32.mrf.mxu0
  %v1189 = vadd.f32 0.0, %v1188
  %1190 = vdwg.mxu0
  %v1193 = vrot.slane %v1187, 2
  %v1194 = vrot.slane %v1189, 2
  %v1197 = vadd.f32 %v840, %v1193
  %v1198 = vadd.f32 %v841, %v1194
  %v1199 = vmul.f32 %v1197, 0.5
  %v1200 = vmul.f32 %v1198, 0.5
  %v1201 = vsel %vm41, %v1197, %v1199
  %v1202 = vsel %vm42, %v1198, %v1200
  %v1203 = vtanh.pop %v1201
  %v1204 = vtanh.pop %v1202
  %v1205 = vadd.f32 %v1203, 1.0
  %v1206 = vadd.f32 %v1204, 1.0
  %v1207 = vmul.f32 %v1205, 0.5
  %v1208 = vmul.f32 %v1206, 0.5
  %v1209 = vsel %vm41, %v1203, %v1207
  %v1210 = vsel %vm42, %v1204, %v1208
  %v1212 = vrot.slane %v1090, 6
  %v1214 = vmul.f32 %v1209, %v1212
  %v1215 = vmul.f32 %v1209, %v1210
  %1217 = vrot.lane.b32.xlu0 %v1215, 64
  %v1218 = vpop.permute.xlu0 %1217
  %v1220 = vadd.f32 %v1214, %v1218
  %v1221 = vtanh.pop %v1220
  %v1222 = vmul.f32 %v1210, %v1221
  %1224 = vrot.lane.b32.xlu0 %v1222, 64
  %v1225 = vpop.permute.xlu0 %1224
  %1227 = vst.msk [vmem:[#allocation2 + $0x8] sm:$0xc0] %vm700, %v1225
  %1228 = vst.msk [vmem:[#allocation2 - $0x6] sm:$0xc0] %vm702, %v1225
  %v1229 = vld [vmem:[#allocation2] sm:$0xff]
  %v1230 = vld [vmem:[#allocation2 + $0x8] sm:$0xff]
  %v1231 = vld [vmem:[%s4] sm:$0xff]
  %v1232 = vld [vmem:[%s4 + $0x8] sm:$0xff]
  %v1233 = vld [vmem:[%s4 + $0x10] sm:$0xff]
  %v1234 = vld [vmem:[%s4 + $0x18] sm:$0xff]
  %v1235 = vld [vmem:[%s4 + $0x20] sm:$0xff]
  %v1236 = vld [vmem:[%s4 + $0x28] sm:$0xff]
  %v1237 = vld [vmem:[%s4 + $0x30] sm:$0xff]
  %v1238 = vld [vmem:[%s4 + $0x38] sm:$0xff]
  %v1239 = vld [vmem:[%s4 + $0x40] sm:$0xff]
  %v1240 = vld [vmem:[%s4 + $0x48] sm:$0xff]
  %v1241 = vld [vmem:[%s4 + $0x50] sm:$0xff]
  %v1242 = vld [vmem:[%s4 + $0x58] sm:$0xff]
  %v1243 = vld [vmem:[%s4 + $0x60] sm:$0xff]
  %v1244 = vld [vmem:[%s4 + $0x68] sm:$0xff]
  %v1245 = vld [vmem:[%s4 + $0x70] sm:$0xff]
  %v1246 = vld [vmem:[%s4 + $0x78] sm:$0xff]
  %v1247 = vld [vmem:[%s6] sm:$0x3]
  %v1249 = vlaneseq
  %v1250 = vshrl.u32 %v1249, 7
  %v1251 = vsub.s32 0, %v1250
  %v1252 = vrot.slane %v1247, %v1251
  %v1253 = vlaneseq
  %v1254 = vshrl.u32 %v1253, 7
  %v1255 = vsub.s32 1, %v1254
  %v1256 = vrot.slane %v1247, %v1255
  %v1260 = vsel %vm199, %v1229, 0
  %v1263 = vsel %vm199, %v1230, 0
  %1265 = vmatprep.subr.mxu0 0.0
  %1266 = vmatpush1.msra.mxu0 0.0
  %1267 = vmatprep.subr.mxu0 0.0
  %1268 = vmatpush1.msra.mxu0 0.0
  %1269 = vmatprep.subr.mxu0 0.0
  %1270 = vmatpush1.msra.mxu0 0.0
  %1271 = vmatprep.subr.mxu0 0.0
  %1272 = vmatpush1.msra.mxu0 0.0
  %1273 = vmatprep.subr.mxu0 0.0
  %1274 = vmatpush1.msra.mxu0 0.0
  %1275 = vmatprep.subr.mxu0 0.0
  %1276 = vmatpush1.msra.mxu0 0.0
  %1277 = vmatprep.subr.mxu0 0.0
  %1278 = vmatpush1.msra.mxu0 0.0
  %1279 = vmatprep.subr.mxu0 0.0
  %1280 = vmatpush1.msra.mxu0 0.0
  %1281 = vmatprep.subr.mxu0 %v1246
  %1282 = vmatpush1.msra.mxu0 %v1245
  %1283 = vmatprep.subr.mxu0 %v1244
  %1284 = vmatpush1.msra.mxu0 %v1243
  %1285 = vmatprep.subr.mxu0 %v1242
  %1286 = vmatpush1.msra.mxu0 %v1241
  %1287 = vmatprep.subr.mxu0 %v1240
  %1288 = vmatpush1.msra.mxu0 %v1239
  %1289 = vmatprep.subr.mxu0 %v1238
  %1290 = vmatpush1.msra.mxu0 %v1237
  %1291 = vmatprep.subr.mxu0 %v1236
  %1292 = vmatpush1.msra.mxu0 %v1235
  %1293 = vmatprep.subr.mxu0 %v1234
  %1294 = vmatpush1.msra.mxu0 %v1233
  %1295 = vmatprep.subr.mxu0 %v1232
  %1296 = vmatpush1.msra.mxu0 %v1231
  %1297 = vmatprep.subr.mxu0 0.0
  %1298 = vmatpush2.msra.mxu0 0.0
  %1299 = vmatprep.subr.mxu0 0.0
  %1300 = vmatpush2.msra.mxu0 0.0
  %1301 = vmatprep.subr.mxu0 0.0
  %1302 = vmatpush2.msra.mxu0 0.0
  %1303 = vmatprep.subr.mxu0 0.0
  %1304 = vmatpush2.msra.mxu0 0.0
  %1305 = vmatprep.subr.mxu0 0.0
  %1306 = vmatpush2.msra.mxu0 0.0
  %1307 = vmatprep.subr.mxu0 0.0
  %1308 = vmatpush2.msra.mxu0 0.0
  %1309 = vmatprep.subr.mxu0 0.0
  %1310 = vmatpush2.msra.mxu0 0.0
  %1311 = vmatprep.subr.mxu0 0.0
  %1312 = vmatpush2.msra.mxu0 0.0
  %1313 = vmatprep.subr.mxu0 0.0
  %1314 = vmatpush2.msra.mxu0 0.0
  %1315 = vmatprep.subr.mxu0 0.0
  %1316 = vmatpush2.msra.mxu0 0.0
  %1317 = vmatprep.subr.mxu0 0.0
  %1318 = vmatpush2.msra.mxu0 0.0
  %1319 = vmatprep.subr.mxu0 0.0
  %1320 = vmatpush2.msra.mxu0 0.0
  %1321 = vmatprep.subr.mxu0 0.0
  %1322 = vmatpush2.msra.mxu0 0.0
  %1323 = vmatprep.subr.mxu0 0.0
  %1324 = vmatpush2.msra.mxu0 0.0
  %1325 = vmatprep.subr.mxu0 0.0
  %1326 = vmatpush2.msra.mxu0 0.0
  %1327 = vmatprep.subr.mxu0 0.0
  %1328 = vmatpush2.msra.mxu0 0.0
  %1329 = vmatprep.mubr.f32.mxu0 0.0
  %1330 = vmatmul.mubr.f32.gmra.mxu0 %v1260
  %v1331 = vpop.f32.mrf.mxu0
  %v1332 = vadd.f32 %v1252, %v1331
  %v1333 = vpop.f32.mrf.mxu0
  %v1334 = vadd.f32 %v1256, %v1333
  %1335 = vmatprep.mubr.f32.mxu0 0.0
  %1336 = vmatmul.mubr.f32.gmra.mxu0 %v1263
  %v1337 = vpop.f32.mrf.mxu0
  %v1338 = vadd.f32 %v1252, %v1337
  %v1339 = vpop.f32.mrf.mxu0
  %v1340 = vadd.f32 %v1256, %v1339
  %1341 = vdwg.mxu0
  %v1344 = vrot.slane %v1338, 6
  %v1345 = vrot.slane %v1340, 6
  %v1348 = vsel %vm67, %v1332, %v1344
  %v1349 = vsel %vm68, %v1334, %v1345
  %v1350 = vld [vmem:[%s5] sm:$0xff]
  %v1351 = vld [vmem:[%s5 + $0x8] sm:$0xff]
  %v1352 = vld [vmem:[%s5 + $0x10] sm:$0xff]
  %v1353 = vld [vmem:[%s5 + $0x18] sm:$0xff]
  %v1354 = vld [vmem:[%s5 + $0x20] sm:$0xff]
  %v1355 = vld [vmem:[%s5 + $0x28] sm:$0xff]
  %v1356 = vld [vmem:[%s5 + $0x30] sm:$0xff]
  %v1357 = vld [vmem:[%s5 + $0x38] sm:$0xff]
  %v1358 = vld [vmem:[%s5 + $0x40] sm:$0xff]
  %v1359 = vld [vmem:[%s5 + $0x48] sm:$0xff]
  %v1360 = vld [vmem:[%s5 + $0x50] sm:$0xff]
  %v1361 = vld [vmem:[%s5 + $0x58] sm:$0xff]
  %v1362 = vld [vmem:[%s5 + $0x60] sm:$0xff]
  %v1363 = vld [vmem:[%s5 + $0x68] sm:$0xff]
  %v1364 = vld [vmem:[%s5 + $0x70] sm:$0xff]
  %v1365 = vld [vmem:[%s5 + $0x78] sm:$0xff]
  %1366 = vmatprep.subr.mxu0 0.0
  %1367 = vmatpush1.msra.mxu0 0.0
  %1368 = vmatprep.subr.mxu0 0.0
  %1369 = vmatpush1.msra.mxu0 0.0
  %1370 = vmatprep.subr.mxu0 0.0
  %1371 = vmatpush1.msra.mxu0 0.0
  %1372 = vmatprep.subr.mxu0 0.0
  %1373 = vmatpush1.msra.mxu0 0.0
  %1374 = vmatprep.subr.mxu0 0.0
  %1375 = vmatpush1.msra.mxu0 0.0
  %1376 = vmatprep.subr.mxu0 0.0
  %1377 = vmatpush1.msra.mxu0 0.0
  %1378 = vmatprep.subr.mxu0 0.0
  %1379 = vmatpush1.msra.mxu0 0.0
  %1380 = vmatprep.subr.mxu0 0.0
  %1381 = vmatpush1.msra.mxu0 0.0
  %1382 = vmatprep.subr.mxu0 %v1365
  %1383 = vmatpush1.msra.mxu0 %v1364
  %1384 = vmatprep.subr.mxu0 %v1363
  %1385 = vmatpush1.msra.mxu0 %v1362
  %1386 = vmatprep.subr.mxu0 %v1361
  %1387 = vmatpush1.msra.mxu0 %v1360
  %1388 = vmatprep.subr.mxu0 %v1359
  %1389 = vmatpush1.msra.mxu0 %v1358
  %1390 = vmatprep.subr.mxu0 %v1357
  %1391 = vmatpush1.msra.mxu0 %v1356
  %1392 = vmatprep.subr.mxu0 %v1355
  %1393 = vmatpush1.msra.mxu0 %v1354
  %1394 = vmatprep.subr.mxu0 %v1353
  %1395 = vmatpush1.msra.mxu0 %v1352
  %1396 = vmatprep.subr.mxu0 %v1351
  %1397 = vmatpush1.msra.mxu0 %v1350
  %1398 = vmatprep.subr.mxu0 0.0
  %1399 = vmatpush2.msra.mxu0 0.0
  %1400 = vmatprep.subr.mxu0 0.0
  %1401 = vmatpush2.msra.mxu0 0.0
  %1402 = vmatprep.subr.mxu0 0.0
  %1403 = vmatpush2.msra.mxu0 0.0
  %1404 = vmatprep.subr.mxu0 0.0
  %1405 = vmatpush2.msra.mxu0 0.0
  %1406 = vmatprep.subr.mxu0 0.0
  %1407 = vmatpush2.msra.mxu0 0.0
  %1408 = vmatprep.subr.mxu0 0.0
  %1409 = vmatpush2.msra.mxu0 0.0
  %1410 = vmatprep.subr.mxu0 0.0
  %1411 = vmatpush2.msra.mxu0 0.0
  %1412 = vmatprep.subr.mxu0 0.0
  %1413 = vmatpush2.msra.mxu0 0.0
  %1414 = vmatprep.subr.mxu0 0.0
  %1415 = vmatpush2.msra.mxu0 0.0
  %1416 = vmatprep.subr.mxu0 0.0
  %1417 = vmatpush2.msra.mxu0 0.0
  %1418 = vmatprep.subr.mxu0 0.0
  %1419 = vmatpush2.msra.mxu0 0.0
  %1420 = vmatprep.subr.mxu0 0.0
  %1421 = vmatpush2.msra.mxu0 0.0
  %1422 = vmatprep.subr.mxu0 0.0
  %1423 = vmatpush2.msra.mxu0 0.0
  %1424 = vmatprep.subr.mxu0 0.0
  %1425 = vmatpush2.msra.mxu0 0.0
  %1426 = vmatprep.subr.mxu0 0.0
  %1427 = vmatpush2.msra.mxu0 0.0
  %1428 = vmatprep.subr.mxu0 0.0
  %1429 = vmatpush2.msra.mxu0 0.0
  %1430 = vmatprep.mubr.f32.mxu0 0.0
  %1431 = vmatmul.mubr.f32.gmra.mxu0 %v201
  %v1432 = vpop.f32.mrf.mxu0
  %v1433 = vadd.f32 0.0, %v1432
  %v1434 = vpop.f32.mrf.mxu0
  %v1435 = vadd.f32 0.0, %v1434
  %1436 = vdwg.mxu0
  %v1437 = vadd.f32 %v1348, %v1433
  %v1438 = vadd.f32 %v1349, %v1435
  %v1439 = vmul.f32 %v1437, 0.5
  %v1440 = vmul.f32 %v1438, 0.5
  %v1441 = vsel %vm41, %v1437, %v1439
  %v1442 = vsel %vm42, %v1438, %v1440
  %v1443 = vtanh.pop %v1441
  %v1444 = vtanh.pop %v1442
  %v1445 = vadd.f32 %v1443, 1.0
  %v1446 = vadd.f32 %v1444, 1.0
  %v1447 = vmul.f32 %v1445, 0.5
  %v1448 = vmul.f32 %v1446, 0.5
  %v1449 = vsel %vm41, %v1443, %v1447
  %v1450 = vsel %vm42, %v1444, %v1448
  %v1451 = vmul.f32 %v1449, 0.0
  %v1452 = vmul.f32 %v1449, %v1450
  %1454 = vrot.lane.b32.xlu0 %v1452, 64
  %v1455 = vpop.permute.xlu0 %1454
  %v1457 = vadd.f32 %v1451, %v1455
  %v1458 = vtanh.pop %v1457
  %v1459 = vmul.f32 %v1450, %v1458
  %1461 = vrot.lane.b32.xlu0 %v1459, 64
  %v1462 = vpop.permute.xlu0 %1461
  %1464 = vst.msk [vmem:[#allocation3] sm:$0x3] %vm301, %v1462
  %1465 = vst.msk [vmem:[#allocation3 + $0xe] sm:$0x3] %vm303, %v1462
  %v1466 = vrot.slane %v1338, 2
  %v1467 = vrot.slane %v1340, 2
  %v1470 = vsel %vm67, %v1332, %v1466
  %v1471 = vsel %vm68, %v1334, %v1467
  %v1472 = vld [vmem:[%s5] sm:$0xff]
  %v1473 = vld [vmem:[%s5 + $0x8] sm:$0xff]
  %v1474 = vld [vmem:[%s5 + $0x10] sm:$0xff]
  %v1475 = vld [vmem:[%s5 + $0x18] sm:$0xff]
  %v1476 = vld [vmem:[%s5 + $0x20] sm:$0xff]
  %v1477 = vld [vmem:[%s5 + $0x28] sm:$0xff]
  %v1478 = vld [vmem:[%s5 + $0x30] sm:$0xff]
  %v1479 = vld [vmem:[%s5 + $0x38] sm:$0xff]
  %v1480 = vld [vmem:[%s5 + $0x40] sm:$0xff]
  %v1481 = vld [vmem:[%s5 + $0x48] sm:$0xff]
  %v1482 = vld [vmem:[%s5 + $0x50] sm:$0xff]
  %v1483 = vld [vmem:[%s5 + $0x58] sm:$0xff]
  %v1484 = vld [vmem:[%s5 + $0x60] sm:$0xff]
  %v1485 = vld [vmem:[%s5 + $0x68] sm:$0xff]
  %v1486 = vld [vmem:[%s5 + $0x70] sm:$0xff]
  %v1487 = vld [vmem:[%s5 + $0x78] sm:$0xff]
  %v1488 = vsel %vm199, %v1462, 0
  %1490 = vmatprep.subr.mxu0 0.0
  %1491 = vmatpush1.msra.mxu0 0.0
  %1492 = vmatprep.subr.mxu0 0.0
  %1493 = vmatpush1.msra.mxu0 0.0
  %1494 = vmatprep.subr.mxu0 0.0
  %1495 = vmatpush1.msra.mxu0 0.0
  %1496 = vmatprep.subr.mxu0 0.0
  %1497 = vmatpush1.msra.mxu0 0.0
  %1498 = vmatprep.subr.mxu0 0.0
  %1499 = vmatpush1.msra.mxu0 0.0
  %1500 = vmatprep.subr.mxu0 0.0
  %1501 = vmatpush1.msra.mxu0 0.0
  %1502 = vmatprep.subr.mxu0 0.0
  %1503 = vmatpush1.msra.mxu0 0.0
  %1504 = vmatprep.subr.mxu0 0.0
  %1505 = vmatpush1.msra.mxu0 0.0
  %1506 = vmatprep.subr.mxu0 %v1487
  %1507 = vmatpush1.msra.mxu0 %v1486
  %1508 = vmatprep.subr.mxu0 %v1485
  %1509 = vmatpush1.msra.mxu0 %v1484
  %1510 = vmatprep.subr.mxu0 %v1483
  %1511 = vmatpush1.msra.mxu0 %v1482
  %1512 = vmatprep.subr.mxu0 %v1481
  %1513 = vmatpush1.msra.mxu0 %v1480
  %1514 = vmatprep.subr.mxu0 %v1479
  %1515 = vmatpush1.msra.mxu0 %v1478
  %1516 = vmatprep.subr.mxu0 %v1477
  %1517 = vmatpush1.msra.mxu0 %v1476
  %1518 = vmatprep.subr.mxu0 %v1475
  %1519 = vmatpush1.msra.mxu0 %v1474
  %1520 = vmatprep.subr.mxu0 %v1473
  %1521 = vmatpush1.msra.mxu0 %v1472
  %1522 = vmatprep.subr.mxu0 0.0
  %1523 = vmatpush2.msra.mxu0 0.0
  %1524 = vmatprep.subr.mxu0 0.0
  %1525 = vmatpush2.msra.mxu0 0.0
  %1526 = vmatprep.subr.mxu0 0.0
  %1527 = vmatpush2.msra.mxu0 0.0
  %1528 = vmatprep.subr.mxu0 0.0
  %1529 = vmatpush2.msra.mxu0 0.0
  %1530 = vmatprep.subr.mxu0 0.0
  %1531 = vmatpush2.msra.mxu0 0.0
  %1532 = vmatprep.subr.mxu0 0.0
  %1533 = vmatpush2.msra.mxu0 0.0
  %1534 = vmatprep.subr.mxu0 0.0
  %1535 = vmatpush2.msra.mxu0 0.0
  %1536 = vmatprep.subr.mxu0 0.0
  %1537 = vmatpush2.msra.mxu0 0.0
  %1538 = vmatprep.subr.mxu0 0.0
  %1539 = vmatpush2.msra.mxu0 0.0
  %1540 = vmatprep.subr.mxu0 0.0
  %1541 = vmatpush2.msra.mxu0 0.0
  %1542 = vmatprep.subr.mxu0 0.0
  %1543 = vmatpush2.msra.mxu0 0.0
  %1544 = vmatprep.subr.mxu0 0.0
  %1545 = vmatpush2.msra.mxu0 0.0
  %1546 = vmatprep.subr.mxu0 0.0
  %1547 = vmatpush2.msra.mxu0 0.0
  %1548 = vmatprep.subr.mxu0 0.0
  %1549 = vmatpush2.msra.mxu0 0.0
  %1550 = vmatprep.subr.mxu0 0.0
  %1551 = vmatpush2.msra.mxu0 0.0
  %1552 = vmatprep.subr.mxu0 0.0
  %1553 = vmatpush2.msra.mxu0 0.0
  %1554 = vmatprep.mubr.f32.mxu0 0.0
  %1555 = vmatmul.mubr.f32.gmra.mxu0 %v1488
  %v1556 = vpop.f32.mrf.mxu0
  %v1557 = vadd.f32 0.0, %v1556
  %v1558 = vpop.f32.mrf.mxu0
  %v1559 = vadd.f32 0.0, %v1558
  %1560 = vdwg.mxu0
  %v1563 = vrot.slane %v1557, 6
  %v1564 = vrot.slane %v1559, 6
  %v1567 = vadd.f32 %v1470, %v1563
  %v1568 = vadd.f32 %v1471, %v1564
  %v1569 = vmul.f32 %v1567, 0.5
  %v1570 = vmul.f32 %v1568, 0.5
  %v1571 = vsel %vm41, %v1567, %v1569
  %v1572 = vsel %vm42, %v1568, %v1570
  %v1573 = vtanh.pop %v1571
  %v1574 = vtanh.pop %v1572
  %v1575 = vadd.f32 %v1573, 1.0
  %v1576 = vadd.f32 %v1574, 1.0
  %v1577 = vmul.f32 %v1575, 0.5
  %v1578 = vmul.f32 %v1576, 0.5
  %v1579 = vsel %vm41, %v1573, %v1577
  %v1580 = vsel %vm42, %v1574, %v1578
  %v1582 = vrot.slane %v1457, 6
  %v1584 = vmul.f32 %v1579, %v1582
  %v1585 = vmul.f32 %v1579, %v1580
  %1587 = vrot.lane.b32.xlu0 %v1585, 64
  %v1588 = vpop.permute.xlu0 %1587
  %v1590 = vadd.f32 %v1584, %v1588
  %v1591 = vtanh.pop %v1590
  %v1592 = vmul.f32 %v1580, %v1591
  %1594 = vrot.lane.b32.xlu0 %v1592, 64
  %v1595 = vpop.permute.xlu0 %1594
  %1597 = vst.msk [vmem:[#allocation3] sm:$0xc] %vm436, %v1595
  %1598 = vst.msk [vmem:[#allocation3 + $0xa] sm:$0xc] %vm438, %v1595
  %v1599 = vld [vmem:[%s5] sm:$0xff]
  %v1600 = vld [vmem:[%s5 + $0x8] sm:$0xff]
  %v1601 = vld [vmem:[%s5 + $0x10] sm:$0xff]
  %v1602 = vld [vmem:[%s5 + $0x18] sm:$0xff]
  %v1603 = vld [vmem:[%s5 + $0x20] sm:$0xff]
  %v1604 = vld [vmem:[%s5 + $0x28] sm:$0xff]
  %v1605 = vld [vmem:[%s5 + $0x30] sm:$0xff]
  %v1606 = vld [vmem:[%s5 + $0x38] sm:$0xff]
  %v1607 = vld [vmem:[%s5 + $0x40] sm:$0xff]
  %v1608 = vld [vmem:[%s5 + $0x48] sm:$0xff]
  %v1609 = vld [vmem:[%s5 + $0x50] sm:$0xff]
  %v1610 = vld [vmem:[%s5 + $0x58] sm:$0xff]
  %v1611 = vld [vmem:[%s5 + $0x60] sm:$0xff]
  %v1612 = vld [vmem:[%s5 + $0x68] sm:$0xff]
  %v1613 = vld [vmem:[%s5 + $0x70] sm:$0xff]
  %v1614 = vld [vmem:[%s5 + $0x78] sm:$0xff]
  %v1615 = vrot.slane %v1592, 2
  %1616 = vrot.lane.b32.xlu0 %v1615, 64
  %v1617 = vpop.permute.xlu0 %1616
  %v1618 = vsel %vm199, %v1617, 0
  %1620 = vmatprep.subr.mxu0 0.0
  %1621 = vmatpush1.msra.mxu0 0.0
  %1622 = vmatprep.subr.mxu0 0.0
  %1623 = vmatpush1.msra.mxu0 0.0
  %1624 = vmatprep.subr.mxu0 0.0
  %1625 = vmatpush1.msra.mxu0 0.0
  %1626 = vmatprep.subr.mxu0 0.0
  %1627 = vmatpush1.msra.mxu0 0.0
  %1628 = vmatprep.subr.mxu0 0.0
  %1629 = vmatpush1.msra.mxu0 0.0
  %1630 = vmatprep.subr.mxu0 0.0
  %1631 = vmatpush1.msra.mxu0 0.0
  %1632 = vmatprep.subr.mxu0 0.0
  %1633 = vmatpush1.msra.mxu0 0.0
  %1634 = vmatprep.subr.mxu0 0.0
  %1635 = vmatpush1.msra.mxu0 0.0
  %1636 = vmatprep.subr.mxu0 %v1614
  %1637 = vmatpush1.msra.mxu0 %v1613
  %1638 = vmatprep.subr.mxu0 %v1612
  %1639 = vmatpush1.msra.mxu0 %v1611
  %1640 = vmatprep.subr.mxu0 %v1610
  %1641 = vmatpush1.msra.mxu0 %v1609
  %1642 = vmatprep.subr.mxu0 %v1608
  %1643 = vmatpush1.msra.mxu0 %v1607
  %1644 = vmatprep.subr.mxu0 %v1606
  %1645 = vmatpush1.msra.mxu0 %v1605
  %1646 = vmatprep.subr.mxu0 %v1604
  %1647 = vmatpush1.msra.mxu0 %v1603
  %1648 = vmatprep.subr.mxu0 %v1602
  %1649 = vmatpush1.msra.mxu0 %v1601
  %1650 = vmatprep.subr.mxu0 %v1600
  %1651 = vmatpush1.msra.mxu0 %v1599
  %1652 = vmatprep.subr.mxu0 0.0
  %1653 = vmatpush2.msra.mxu0 0.0
  %1654 = vmatprep.subr.mxu0 0.0
  %1655 = vmatpush2.msra.mxu0 0.0
  %1656 = vmatprep.subr.mxu0 0.0
  %1657 = vmatpush2.msra.mxu0 0.0
  %1658 = vmatprep.subr.mxu0 0.0
  %1659 = vmatpush2.msra.mxu0 0.0
  %1660 = vmatprep.subr.mxu0 0.0
  %1661 = vmatpush2.msra.mxu0 0.0
  %1662 = vmatprep.subr.mxu0 0.0
  %1663 = vmatpush2.msra.mxu0 0.0
  %1664 = vmatprep.subr.mxu0 0.0
  %1665 = vmatpush2.msra.mxu0 0.0
  %1666 = vmatprep.subr.mxu0 0.0
  %1667 = vmatpush2.msra.mxu0 0.0
  %1668 = vmatprep.subr.mxu0 0.0
  %1669 = vmatpush2.msra.mxu0 0.0
  %1670 = vmatprep.subr.mxu0 0.0
  %1671 = vmatpush2.msra.mxu0 0.0
  %1672 = vmatprep.subr.mxu0 0.0
  %1673 = vmatpush2.msra.mxu0 0.0
  %1674 = vmatprep.subr.mxu0 0.0
  %1675 = vmatpush2.msra.mxu0 0.0
  %1676 = vmatprep.subr.mxu0 0.0
  %1677 = vmatpush2.msra.mxu0 0.0
  %1678 = vmatprep.subr.mxu0 0.0
  %1679 = vmatpush2.msra.mxu0 0.0
  %1680 = vmatprep.subr.mxu0 0.0
  %1681 = vmatpush2.msra.mxu0 0.0
  %1682 = vmatprep.subr.mxu0 0.0
  %1683 = vmatpush2.msra.mxu0 0.0
  %1684 = vmatprep.mubr.f32.mxu0 0.0
  %1685 = vmatmul.mubr.f32.gmra.mxu0 %v1618
  %v1686 = vpop.f32.mrf.mxu0
  %v1687 = vadd.f32 0.0, %v1686
  %v1688 = vpop.f32.mrf.mxu0
  %v1689 = vadd.f32 0.0, %v1688
  %1690 = vdwg.mxu0
  %v1693 = vrot.slane %v1687, 4
  %v1694 = vrot.slane %v1689, 4
  %v1697 = vadd.f32 %v1348, %v1693
  %v1698 = vadd.f32 %v1349, %v1694
  %v1699 = vmul.f32 %v1697, 0.5
  %v1700 = vmul.f32 %v1698, 0.5
  %v1701 = vsel %vm41, %v1697, %v1699
  %v1702 = vsel %vm42, %v1698, %v1700
  %v1703 = vtanh.pop %v1701
  %v1704 = vtanh.pop %v1702
  %v1705 = vadd.f32 %v1703, 1.0
  %v1706 = vadd.f32 %v1704, 1.0
  %v1707 = vmul.f32 %v1705, 0.5
  %v1708 = vmul.f32 %v1706, 0.5
  %v1709 = vsel %vm41, %v1703, %v1707
  %v1710 = vsel %vm42, %v1704, %v1708
  %v1712 = vrot.slane %v1590, 6
  %v1714 = vmul.f32 %v1709, %v1712
  %v1715 = vmul.f32 %v1709, %v1710
  %1717 = vrot.lane.b32.xlu0 %v1715, 64
  %v1718 = vpop.permute.xlu0 %1717
  %v1720 = vadd.f32 %v1714, %v1718
  %v1721 = vtanh.pop %v1720
  %v1722 = vmul.f32 %v1710, %v1721
  %1724 = vrot.lane.b32.xlu0 %v1722, 64
  %v1725 = vpop.permute.xlu0 %1724
  %1727 = vst.msk [vmem:[#allocation3] sm:$0x30] %vm568, %v1725
  %1728 = vst.msk [vmem:[#allocation3 + $0x6] sm:$0x30] %vm570, %v1725
  %v1729 = vld [vmem:[%s5] sm:$0xff]
  %v1730 = vld [vmem:[%s5 + $0x8] sm:$0xff]
  %v1731 = vld [vmem:[%s5 + $0x10] sm:$0xff]
  %v1732 = vld [vmem:[%s5 + $0x18] sm:$0xff]
  %v1733 = vld [vmem:[%s5 + $0x20] sm:$0xff]
  %v1734 = vld [vmem:[%s5 + $0x28] sm:$0xff]
  %v1735 = vld [vmem:[%s5 + $0x30] sm:$0xff]
  %v1736 = vld [vmem:[%s5 + $0x38] sm:$0xff]
  %v1737 = vld [vmem:[%s5 + $0x40] sm:$0xff]
  %v1738 = vld [vmem:[%s5 + $0x48] sm:$0xff]
  %v1739 = vld [vmem:[%s5 + $0x50] sm:$0xff]
  %v1740 = vld [vmem:[%s5 + $0x58] sm:$0xff]
  %v1741 = vld [vmem:[%s5 + $0x60] sm:$0xff]
  %v1742 = vld [vmem:[%s5 + $0x68] sm:$0xff]
  %v1743 = vld [vmem:[%s5 + $0x70] sm:$0xff]
  %v1744 = vld [vmem:[%s5 + $0x78] sm:$0xff]
  %v1745 = vrot.slane %v1722, 4
  %1746 = vrot.lane.b32.xlu0 %v1745, 64
  %v1747 = vpop.permute.xlu0 %1746
  %v1748 = vsel %vm199, %v1747, 0
  %1750 = vmatprep.subr.mxu0 0.0
  %1751 = vmatpush1.msra.mxu0 0.0
  %1752 = vmatprep.subr.mxu0 0.0
  %1753 = vmatpush1.msra.mxu0 0.0
  %1754 = vmatprep.subr.mxu0 0.0
  %1755 = vmatpush1.msra.mxu0 0.0
  %1756 = vmatprep.subr.mxu0 0.0
  %1757 = vmatpush1.msra.mxu0 0.0
  %1758 = vmatprep.subr.mxu0 0.0
  %1759 = vmatpush1.msra.mxu0 0.0
  %1760 = vmatprep.subr.mxu0 0.0
  %1761 = vmatpush1.msra.mxu0 0.0
  %1762 = vmatprep.subr.mxu0 0.0
  %1763 = vmatpush1.msra.mxu0 0.0
  %1764 = vmatprep.subr.mxu0 0.0
  %1765 = vmatpush1.msra.mxu0 0.0
  %1766 = vmatprep.subr.mxu0 %v1744
  %1767 = vmatpush1.msra.mxu0 %v1743
  %1768 = vmatprep.subr.mxu0 %v1742
  %1769 = vmatpush1.msra.mxu0 %v1741
  %1770 = vmatprep.subr.mxu0 %v1740
  %1771 = vmatpush1.msra.mxu0 %v1739
  %1772 = vmatprep.subr.mxu0 %v1738
  %1773 = vmatpush1.msra.mxu0 %v1737
  %1774 = vmatprep.subr.mxu0 %v1736
  %1775 = vmatpush1.msra.mxu0 %v1735
  %1776 = vmatprep.subr.mxu0 %v1734
  %1777 = vmatpush1.msra.mxu0 %v1733
  %1778 = vmatprep.subr.mxu0 %v1732
  %1779 = vmatpush1.msra.mxu0 %v1731
  %1780 = vmatprep.subr.mxu0 %v1730
  %1781 = vmatpush1.msra.mxu0 %v1729
  %1782 = vmatprep.subr.mxu0 0.0
  %1783 = vmatpush2.msra.mxu0 0.0
  %1784 = vmatprep.subr.mxu0 0.0
  %1785 = vmatpush2.msra.mxu0 0.0
  %1786 = vmatprep.subr.mxu0 0.0
  %1787 = vmatpush2.msra.mxu0 0.0
  %1788 = vmatprep.subr.mxu0 0.0
  %1789 = vmatpush2.msra.mxu0 0.0
  %1790 = vmatprep.subr.mxu0 0.0
  %1791 = vmatpush2.msra.mxu0 0.0
  %1792 = vmatprep.subr.mxu0 0.0
  %1793 = vmatpush2.msra.mxu0 0.0
  %1794 = vmatprep.subr.mxu0 0.0
  %1795 = vmatpush2.msra.mxu0 0.0
  %1796 = vmatprep.subr.mxu0 0.0
  %1797 = vmatpush2.msra.mxu0 0.0
  %1798 = vmatprep.subr.mxu0 0.0
  %1799 = vmatpush2.msra.mxu0 0.0
  %1800 = vmatprep.subr.mxu0 0.0
  %1801 = vmatpush2.msra.mxu0 0.0
  %1802 = vmatprep.subr.mxu0 0.0
  %1803 = vmatpush2.msra.mxu0 0.0
  %1804 = vmatprep.subr.mxu0 0.0
  %1805 = vmatpush2.msra.mxu0 0.0
  %1806 = vmatprep.subr.mxu0 0.0
  %1807 = vmatpush2.msra.mxu0 0.0
  %1808 = vmatprep.subr.mxu0 0.0
  %1809 = vmatpush2.msra.mxu0 0.0
  %1810 = vmatprep.subr.mxu0 0.0
  %1811 = vmatpush2.msra.mxu0 0.0
  %1812 = vmatprep.subr.mxu0 0.0
  %1813 = vmatpush2.msra.mxu0 0.0
  %1814 = vmatprep.mubr.f32.mxu0 0.0
  %1815 = vmatmul.mubr.f32.gmra.mxu0 %v1748
  %v1816 = vpop.f32.mrf.mxu0
  %v1817 = vadd.f32 0.0, %v1816
  %v1818 = vpop.f32.mrf.mxu0
  %v1819 = vadd.f32 0.0, %v1818
  %1820 = vdwg.mxu0
  %v1823 = vrot.slane %v1817, 2
  %v1824 = vrot.slane %v1819, 2
  %v1827 = vadd.f32 %v1470, %v1823
  %v1828 = vadd.f32 %v1471, %v1824
  %v1829 = vmul.f32 %v1827, 0.5
  %v1830 = vmul.f32 %v1828, 0.5
  %v1831 = vsel %vm41, %v1827, %v1829
  %v1832 = vsel %vm42, %v1828, %v1830
  %v1833 = vtanh.pop %v1831
  %v1834 = vtanh.pop %v1832
  %v1835 = vadd.f32 %v1833, 1.0
  %v1836 = vadd.f32 %v1834, 1.0
  %v1837 = vmul.f32 %v1835, 0.5
  %v1838 = vmul.f32 %v1836, 0.5
  %v1839 = vsel %vm41, %v1833, %v1837
  %v1840 = vsel %vm42, %v1834, %v1838
  %v1842 = vrot.slane %v1720, 6
  %v1844 = vmul.f32 %v1839, %v1842
  %v1845 = vmul.f32 %v1839, %v1840
  %1847 = vrot.lane.b32.xlu0 %v1845, 64
  %v1848 = vpop.permute.xlu0 %1847
  %v1850 = vadd.f32 %v1844, %v1848
  %v1851 = vtanh.pop %v1850
  %v1852 = vmul.f32 %v1840, %v1851
  %1854 = vrot.lane.b32.xlu0 %v1852, 64
  %v1855 = vpop.permute.xlu0 %1854
  %1857 = vst.msk [vmem:[#allocation3] sm:$0xc0] %vm700, %v1855
  %1858 = vst.msk [vmem:[#allocation3 + $0x2] sm:$0xc0] %vm702, %v1855
  %v1861 = vrot.slane %v1332, 6
  %v1862 = vrot.slane %v1334, 6
  %v1865 = vsel %vm67, %v1338, %v1861
  %v1866 = vsel %vm68, %v1340, %v1862
  %v1867 = vld [vmem:[%s5] sm:$0xff]
  %v1868 = vld [vmem:[%s5 + $0x8] sm:$0xff]
  %v1869 = vld [vmem:[%s5 + $0x10] sm:$0xff]
  %v1870 = vld [vmem:[%s5 + $0x18] sm:$0xff]
  %v1871 = vld [vmem:[%s5 + $0x20] sm:$0xff]
  %v1872 = vld [vmem:[%s5 + $0x28] sm:$0xff]
  %v1873 = vld [vmem:[%s5 + $0x30] sm:$0xff]
  %v1874 = vld [vmem:[%s5 + $0x38] sm:$0xff]
  %v1875 = vld [vmem:[%s5 + $0x40] sm:$0xff]
  %v1876 = vld [vmem:[%s5 + $0x48] sm:$0xff]
  %v1877 = vld [vmem:[%s5 + $0x50] sm:$0xff]
  %v1878 = vld [vmem:[%s5 + $0x58] sm:$0xff]
  %v1879 = vld [vmem:[%s5 + $0x60] sm:$0xff]
  %v1880 = vld [vmem:[%s5 + $0x68] sm:$0xff]
  %v1881 = vld [vmem:[%s5 + $0x70] sm:$0xff]
  %v1882 = vld [vmem:[%s5 + $0x78] sm:$0xff]
  %v1883 = vrot.slane %v1852, 6
  %1884 = vrot.lane.b32.xlu0 %v1883, 64
  %v1885 = vpop.permute.xlu0 %1884
  %v1886 = vsel %vm199, %v1885, 0
  %1888 = vmatprep.subr.mxu0 0.0
  %1889 = vmatpush1.msra.mxu0 0.0
  %1890 = vmatprep.subr.mxu0 0.0
  %1891 = vmatpush1.msra.mxu0 0.0
  %1892 = vmatprep.subr.mxu0 0.0
  %1893 = vmatpush1.msra.mxu0 0.0
  %1894 = vmatprep.subr.mxu0 0.0
  %1895 = vmatpush1.msra.mxu0 0.0
  %1896 = vmatprep.subr.mxu0 0.0
  %1897 = vmatpush1.msra.mxu0 0.0
  %1898 = vmatprep.subr.mxu0 0.0
  %1899 = vmatpush1.msra.mxu0 0.0
  %1900 = vmatprep.subr.mxu0 0.0
  %1901 = vmatpush1.msra.mxu0 0.0
  %1902 = vmatprep.subr.mxu0 0.0
  %1903 = vmatpush1.msra.mxu0 0.0
  %1904 = vmatprep.subr.mxu0 %v1882
  %1905 = vmatpush1.msra.mxu0 %v1881
  %1906 = vmatprep.subr.mxu0 %v1880
  %1907 = vmatpush1.msra.mxu0 %v1879
  %1908 = vmatprep.subr.mxu0 %v1878
  %1909 = vmatpush1.msra.mxu0 %v1877
  %1910 = vmatprep.subr.mxu0 %v1876
  %1911 = vmatpush1.msra.mxu0 %v1875
  %1912 = vmatprep.subr.mxu0 %v1874
  %1913 = vmatpush1.msra.mxu0 %v1873
  %1914 = vmatprep.subr.mxu0 %v1872
  %1915 = vmatpush1.msra.mxu0 %v1871
  %1916 = vmatprep.subr.mxu0 %v1870
  %1917 = vmatpush1.msra.mxu0 %v1869
  %1918 = vmatprep.subr.mxu0 %v1868
  %1919 = vmatpush1.msra.mxu0 %v1867
  %1920 = vmatprep.subr.mxu0 0.0
  %1921 = vmatpush2.msra.mxu0 0.0
  %1922 = vmatprep.subr.mxu0 0.0
  %1923 = vmatpush2.msra.mxu0 0.0
  %1924 = vmatprep.subr.mxu0 0.0
  %1925 = vmatpush2.msra.mxu0 0.0
  %1926 = vmatprep.subr.mxu0 0.0
  %1927 = vmatpush2.msra.mxu0 0.0
  %1928 = vmatprep.subr.mxu0 0.0
  %1929 = vmatpush2.msra.mxu0 0.0
  %1930 = vmatprep.subr.mxu0 0.0
  %1931 = vmatpush2.msra.mxu0 0.0
  %1932 = vmatprep.subr.mxu0 0.0
  %1933 = vmatpush2.msra.mxu0 0.0
  %1934 = vmatprep.subr.mxu0 0.0
  %1935 = vmatpush2.msra.mxu0 0.0
  %1936 = vmatprep.subr.mxu0 0.0
  %1937 = vmatpush2.msra.mxu0 0.0
  %1938 = vmatprep.subr.mxu0 0.0
  %1939 = vmatpush2.msra.mxu0 0.0
  %1940 = vmatprep.subr.mxu0 0.0
  %1941 = vmatpush2.msra.mxu0 0.0
  %1942 = vmatprep.subr.mxu0 0.0
  %1943 = vmatpush2.msra.mxu0 0.0
  %1944 = vmatprep.subr.mxu0 0.0
  %1945 = vmatpush2.msra.mxu0 0.0
  %1946 = vmatprep.subr.mxu0 0.0
  %1947 = vmatpush2.msra.mxu0 0.0
  %1948 = vmatprep.subr.mxu0 0.0
  %1949 = vmatpush2.msra.mxu0 0.0
  %1950 = vmatprep.subr.mxu0 0.0
  %1951 = vmatpush2.msra.mxu0 0.0
  %1952 = vmatprep.mubr.f32.mxu0 0.0
  %1953 = vmatmul.mubr.f32.gmra.mxu0 %v1886
  %v1954 = vpop.f32.mrf.mxu0
  %v1955 = vadd.f32 0.0, %v1954
  %v1956 = vpop.f32.mrf.mxu0
  %v1957 = vadd.f32 0.0, %v1956
  %1958 = vdwg.mxu0
  %v1959 = vadd.f32 %v1865, %v1955
  %v1960 = vadd.f32 %v1866, %v1957
  %v1961 = vmul.f32 %v1959, 0.5
  %v1962 = vmul.f32 %v1960, 0.5
  %v1963 = vsel %vm41, %v1959, %v1961
  %v1964 = vsel %vm42, %v1960, %v1962
  %v1965 = vtanh.pop %v1963
  %v1966 = vtanh.pop %v1964
  %v1967 = vadd.f32 %v1965, 1.0
  %v1968 = vadd.f32 %v1966, 1.0
  %v1969 = vmul.f32 %v1967, 0.5
  %v1970 = vmul.f32 %v1968, 0.5
  %v1971 = vsel %vm41, %v1965, %v1969
  %v1972 = vsel %vm42, %v1966, %v1970
  %v1974 = vrot.slane %v1850, 6
  %v1976 = vmul.f32 %v1971, %v1974
  %v1977 = vmul.f32 %v1971, %v1972
  %1979 = vrot.lane.b32.xlu0 %v1977, 64
  %v1980 = vpop.permute.xlu0 %1979
  %v1982 = vadd.f32 %v1976, %v1980
  %v1983 = vtanh.pop %v1982
  %v1984 = vmul.f32 %v1972, %v1983
  %1986 = vrot.lane.b32.xlu0 %v1984, 64
  %v1987 = vpop.permute.xlu0 %1986
  %1989 = vst.msk [vmem:[#allocation3 + $0x8] sm:$0x3] %vm301, %v1987
  %1990 = vst.msk [vmem:[#allocation3 + $0x6] sm:$0x3] %vm303, %v1987
  %v1991 = vrot.slane %v1332, 2
  %v1992 = vrot.slane %v1334, 2
  %v1995 = vsel %vm67, %v1338, %v1991
  %v1996 = vsel %vm68, %v1340, %v1992
  %v1997 = vld [vmem:[%s5] sm:$0xff]
  %v1998 = vld [vmem:[%s5 + $0x8] sm:$0xff]
  %v1999 = vld [vmem:[%s5 + $0x10] sm:$0xff]
  %v2000 = vld [vmem:[%s5 + $0x18] sm:$0xff]
  %v2001 = vld [vmem:[%s5 + $0x20] sm:$0xff]
  %v2002 = vld [vmem:[%s5 + $0x28] sm:$0xff]
  %v2003 = vld [vmem:[%s5 + $0x30] sm:$0xff]
  %v2004 = vld [vmem:[%s5 + $0x38] sm:$0xff]
  %v2005 = vld [vmem:[%s5 + $0x40] sm:$0xff]
  %v2006 = vld [vmem:[%s5 + $0x48] sm:$0xff]
  %v2007 = vld [vmem:[%s5 + $0x50] sm:$0xff]
  %v2008 = vld [vmem:[%s5 + $0x58] sm:$0xff]
  %v2009 = vld [vmem:[%s5 + $0x60] sm:$0xff]
  %v2010 = vld [vmem:[%s5 + $0x68] sm:$0xff]
  %v2011 = vld [vmem:[%s5 + $0x70] sm:$0xff]
  %v2012 = vld [vmem:[%s5 + $0x78] sm:$0xff]
  %v2013 = vsel %vm199, %v1987, 0
  %2015 = vmatprep.subr.mxu0 0.0
  %2016 = vmatpush1.msra.mxu0 0.0
  %2017 = vmatprep.subr.mxu0 0.0
  %2018 = vmatpush1.msra.mxu0 0.0
  %2019 = vmatprep.subr.mxu0 0.0
  %2020 = vmatpush1.msra.mxu0 0.0
  %2021 = vmatprep.subr.mxu0 0.0
  %2022 = vmatpush1.msra.mxu0 0.0
  %2023 = vmatprep.subr.mxu0 0.0
  %2024 = vmatpush1.msra.mxu0 0.0
  %2025 = vmatprep.subr.mxu0 0.0
  %2026 = vmatpush1.msra.mxu0 0.0
  %2027 = vmatprep.subr.mxu0 0.0
  %2028 = vmatpush1.msra.mxu0 0.0
  %2029 = vmatprep.subr.mxu0 0.0
  %2030 = vmatpush1.msra.mxu0 0.0
  %2031 = vmatprep.subr.mxu0 %v2012
  %2032 = vmatpush1.msra.mxu0 %v2011
  %2033 = vmatprep.subr.mxu0 %v2010
  %2034 = vmatpush1.msra.mxu0 %v2009
  %2035 = vmatprep.subr.mxu0 %v2008
  %2036 = vmatpush1.msra.mxu0 %v2007
  %2037 = vmatprep.subr.mxu0 %v2006
  %2038 = vmatpush1.msra.mxu0 %v2005
  %2039 = vmatprep.subr.mxu0 %v2004
  %2040 = vmatpush1.msra.mxu0 %v2003
  %2041 = vmatprep.subr.mxu0 %v2002
  %2042 = vmatpush1.msra.mxu0 %v2001
  %2043 = vmatprep.subr.mxu0 %v2000
  %2044 = vmatpush1.msra.mxu0 %v1999
  %2045 = vmatprep.subr.mxu0 %v1998
  %2046 = vmatpush1.msra.mxu0 %v1997
  %2047 = vmatprep.subr.mxu0 0.0
  %2048 = vmatpush2.msra.mxu0 0.0
  %2049 = vmatprep.subr.mxu0 0.0
  %2050 = vmatpush2.msra.mxu0 0.0
  %2051 = vmatprep.subr.mxu0 0.0
  %2052 = vmatpush2.msra.mxu0 0.0
  %2053 = vmatprep.subr.mxu0 0.0
  %2054 = vmatpush2.msra.mxu0 0.0
  %2055 = vmatprep.subr.mxu0 0.0
  %2056 = vmatpush2.msra.mxu0 0.0
  %2057 = vmatprep.subr.mxu0 0.0
  %2058 = vmatpush2.msra.mxu0 0.0
  %2059 = vmatprep.subr.mxu0 0.0
  %2060 = vmatpush2.msra.mxu0 0.0
  %2061 = vmatprep.subr.mxu0 0.0
  %2062 = vmatpush2.msra.mxu0 0.0
  %2063 = vmatprep.subr.mxu0 0.0
  %2064 = vmatpush2.msra.mxu0 0.0
  %2065 = vmatprep.subr.mxu0 0.0
  %2066 = vmatpush2.msra.mxu0 0.0
  %2067 = vmatprep.subr.mxu0 0.0
  %2068 = vmatpush2.msra.mxu0 0.0
  %2069 = vmatprep.subr.mxu0 0.0
  %2070 = vmatpush2.msra.mxu0 0.0
  %2071 = vmatprep.subr.mxu0 0.0
  %2072 = vmatpush2.msra.mxu0 0.0
  %2073 = vmatprep.subr.mxu0 0.0
  %2074 = vmatpush2.msra.mxu0 0.0
  %2075 = vmatprep.subr.mxu0 0.0
  %2076 = vmatpush2.msra.mxu0 0.0
  %2077 = vmatprep.subr.mxu0 0.0
  %2078 = vmatpush2.msra.mxu0 0.0
  %2079 = vmatprep.mubr.f32.mxu0 0.0
  %2080 = vmatmul.mubr.f32.gmra.mxu0 %v2013
  %v2081 = vpop.f32.mrf.mxu0
  %v2082 = vadd.f32 0.0, %v2081
  %v2083 = vpop.f32.mrf.mxu0
  %v2084 = vadd.f32 0.0, %v2083
  %2085 = vdwg.mxu0
  %v2088 = vrot.slane %v2082, 6
  %v2089 = vrot.slane %v2084, 6
  %v2092 = vadd.f32 %v1995, %v2088
  %v2093 = vadd.f32 %v1996, %v2089
  %v2094 = vmul.f32 %v2092, 0.5
  %v2095 = vmul.f32 %v2093, 0.5
  %v2096 = vsel %vm41, %v2092, %v2094
  %v2097 = vsel %vm42, %v2093, %v2095
  %v2098 = vtanh.pop %v2096
  %v2099 = vtanh.pop %v2097
  %v2100 = vadd.f32 %v2098, 1.0
  %v2101 = vadd.f32 %v2099, 1.0
  %v2102 = vmul.f32 %v2100, 0.5
  %v2103 = vmul.f32 %v2101, 0.5
  %v2104 = vsel %vm41, %v2098, %v2102
  %v2105 = vsel %vm42, %v2099, %v2103
  %v2107 = vrot.slane %v1982, 6
  %v2109 = vmul.f32 %v2104, %v2107
  %v2110 = vmul.f32 %v2104, %v2105
  %2112 = vrot.lane.b32.xlu0 %v2110, 64
  %v2113 = vpop.permute.xlu0 %2112
  %v2115 = vadd.f32 %v2109, %v2113
  %v2116 = vtanh.pop %v2115
  %v2117 = vmul.f32 %v2105, %v2116
  %2119 = vrot.lane.b32.xlu0 %v2117, 64
  %v2120 = vpop.permute.xlu0 %2119
  %2122 = vst.msk [vmem:[#allocation3 + $0x8] sm:$0xc] %vm436, %v2120
  %2123 = vst.msk [vmem:[#allocation3 + $0x2] sm:$0xc] %vm438, %v2120
  %v2124 = vld [vmem:[%s5] sm:$0xff]
  %v2125 = vld [vmem:[%s5 + $0x8] sm:$0xff]
  %v2126 = vld [vmem:[%s5 + $0x10] sm:$0xff]
  %v2127 = vld [vmem:[%s5 + $0x18] sm:$0xff]
  %v2128 = vld [vmem:[%s5 + $0x20] sm:$0xff]
  %v2129 = vld [vmem:[%s5 + $0x28] sm:$0xff]
  %v2130 = vld [vmem:[%s5 + $0x30] sm:$0xff]
  %v2131 = vld [vmem:[%s5 + $0x38] sm:$0xff]
  %v2132 = vld [vmem:[%s5 + $0x40] sm:$0xff]
  %v2133 = vld [vmem:[%s5 + $0x48] sm:$0xff]
  %v2134 = vld [vmem:[%s5 + $0x50] sm:$0xff]
  %v2135 = vld [vmem:[%s5 + $0x58] sm:$0xff]
  %v2136 = vld [vmem:[%s5 + $0x60] sm:$0xff]
  %v2137 = vld [vmem:[%s5 + $0x68] sm:$0xff]
  %v2138 = vld [vmem:[%s5 + $0x70] sm:$0xff]
  %v2139 = vld [vmem:[%s5 + $0x78] sm:$0xff]
  %v2140 = vrot.slane %v2117, 2
  %2141 = vrot.lane.b32.xlu0 %v2140, 64
  %v2142 = vpop.permute.xlu0 %2141
  %v2143 = vsel %vm199, %v2142, 0
  %2145 = vmatprep.subr.mxu0 0.0
  %2146 = vmatpush1.msra.mxu0 0.0
  %2147 = vmatprep.subr.mxu0 0.0
  %2148 = vmatpush1.msra.mxu0 0.0
  %2149 = vmatprep.subr.mxu0 0.0
  %2150 = vmatpush1.msra.mxu0 0.0
  %2151 = vmatprep.subr.mxu0 0.0
  %2152 = vmatpush1.msra.mxu0 0.0
  %2153 = vmatprep.subr.mxu0 0.0
  %2154 = vmatpush1.msra.mxu0 0.0
  %2155 = vmatprep.subr.mxu0 0.0
  %2156 = vmatpush1.msra.mxu0 0.0
  %2157 = vmatprep.subr.mxu0 0.0
  %2158 = vmatpush1.msra.mxu0 0.0
  %2159 = vmatprep.subr.mxu0 0.0
  %2160 = vmatpush1.msra.mxu0 0.0
  %2161 = vmatprep.subr.mxu0 %v2139
  %2162 = vmatpush1.msra.mxu0 %v2138
  %2163 = vmatprep.subr.mxu0 %v2137
  %2164 = vmatpush1.msra.mxu0 %v2136
  %2165 = vmatprep.subr.mxu0 %v2135
  %2166 = vmatpush1.msra.mxu0 %v2134
  %2167 = vmatprep.subr.mxu0 %v2133
  %2168 = vmatpush1.msra.mxu0 %v2132
  %2169 = vmatprep.subr.mxu0 %v2131
  %2170 = vmatpush1.msra.mxu0 %v2130
  %2171 = vmatprep.subr.mxu0 %v2129
  %2172 = vmatpush1.msra.mxu0 %v2128
  %2173 = vmatprep.subr.mxu0 %v2127
  %2174 = vmatpush1.msra.mxu0 %v2126
  %2175 = vmatprep.subr.mxu0 %v2125
  %2176 = vmatpush1.msra.mxu0 %v2124
  %2177 = vmatprep.subr.mxu0 0.0
  %2178 = vmatpush2.msra.mxu0 0.0
  %2179 = vmatprep.subr.mxu0 0.0
  %2180 = vmatpush2.msra.mxu0 0.0
  %2181 = vmatprep.subr.mxu0 0.0
  %2182 = vmatpush2.msra.mxu0 0.0
  %2183 = vmatprep.subr.mxu0 0.0
  %2184 = vmatpush2.msra.mxu0 0.0
  %2185 = vmatprep.subr.mxu0 0.0
  %2186 = vmatpush2.msra.mxu0 0.0
  %2187 = vmatprep.subr.mxu0 0.0
  %2188 = vmatpush2.msra.mxu0 0.0
  %2189 = vmatprep.subr.mxu0 0.0
  %2190 = vmatpush2.msra.mxu0 0.0
  %2191 = vmatprep.subr.mxu0 0.0
  %2192 = vmatpush2.msra.mxu0 0.0
  %2193 = vmatprep.subr.mxu0 0.0
  %2194 = vmatpush2.msra.mxu0 0.0
  %2195 = vmatprep.subr.mxu0 0.0
  %2196 = vmatpush2.msra.mxu0 0.0
  %2197 = vmatprep.subr.mxu0 0.0
  %2198 = vmatpush2.msra.mxu0 0.0
  %2199 = vmatprep.subr.mxu0 0.0
  %2200 = vmatpush2.msra.mxu0 0.0
  %2201 = vmatprep.subr.mxu0 0.0
  %2202 = vmatpush2.msra.mxu0 0.0
  %2203 = vmatprep.subr.mxu0 0.0
  %2204 = vmatpush2.msra.mxu0 0.0
  %2205 = vmatprep.subr.mxu0 0.0
  %2206 = vmatpush2.msra.mxu0 0.0
  %2207 = vmatprep.subr.mxu0 0.0
  %2208 = vmatpush2.msra.mxu0 0.0
  %2209 = vmatprep.mubr.f32.mxu0 0.0
  %2210 = vmatmul.mubr.f32.gmra.mxu0 %v2143
  %v2211 = vpop.f32.mrf.mxu0
  %v2212 = vadd.f32 0.0, %v2211
  %v2213 = vpop.f32.mrf.mxu0
  %v2214 = vadd.f32 0.0, %v2213
  %2215 = vdwg.mxu0
  %v2218 = vrot.slane %v2212, 4
  %v2219 = vrot.slane %v2214, 4
  %v2222 = vadd.f32 %v1865, %v2218
  %v2223 = vadd.f32 %v1866, %v2219
  %v2224 = vmul.f32 %v2222, 0.5
  %v2225 = vmul.f32 %v2223, 0.5
  %v2226 = vsel %vm41, %v2222, %v2224
  %v2227 = vsel %vm42, %v2223, %v2225
  %v2228 = vtanh.pop %v2226
  %v2229 = vtanh.pop %v2227
  %v2230 = vadd.f32 %v2228, 1.0
  %v2231 = vadd.f32 %v2229, 1.0
  %v2232 = vmul.f32 %v2230, 0.5
  %v2233 = vmul.f32 %v2231, 0.5
  %v2234 = vsel %vm41, %v2228, %v2232
  %v2235 = vsel %vm42, %v2229, %v2233
  %v2237 = vrot.slane %v2115, 6
  %v2239 = vmul.f32 %v2234, %v2237
  %v2240 = vmul.f32 %v2234, %v2235
  %2242 = vrot.lane.b32.xlu0 %v2240, 64
  %v2243 = vpop.permute.xlu0 %2242
  %v2245 = vadd.f32 %v2239, %v2243
  %v2246 = vtanh.pop %v2245
  %v2247 = vmul.f32 %v2235, %v2246
  %2249 = vrot.lane.b32.xlu0 %v2247, 64
  %v2250 = vpop.permute.xlu0 %2249
  %2252 = vst.msk [vmem:[#allocation3 + $0x8] sm:$0x30] %vm568, %v2250
  %2253 = vst.msk [vmem:[#allocation3 - $0x2] sm:$0x30] %vm570, %v2250
  %v2254 = vld [vmem:[%s5] sm:$0xff]
  %v2255 = vld [vmem:[%s5 + $0x8] sm:$0xff]
  %v2256 = vld [vmem:[%s5 + $0x10] sm:$0xff]
  %v2257 = vld [vmem:[%s5 + $0x18] sm:$0xff]
  %v2258 = vld [vmem:[%s5 + $0x20] sm:$0xff]
  %v2259 = vld [vmem:[%s5 + $0x28] sm:$0xff]
  %v2260 = vld [vmem:[%s5 + $0x30] sm:$0xff]
  %v2261 = vld [vmem:[%s5 + $0x38] sm:$0xff]
  %v2262 = vld [vmem:[%s5 + $0x40] sm:$0xff]
  %v2263 = vld [vmem:[%s5 + $0x48] sm:$0xff]
  %v2264 = vld [vmem:[%s5 + $0x50] sm:$0xff]
  %v2265 = vld [vmem:[%s5 + $0x58] sm:$0xff]
  %v2266 = vld [vmem:[%s5 + $0x60] sm:$0xff]
  %v2267 = vld [vmem:[%s5 + $0x68] sm:$0xff]
  %v2268 = vld [vmem:[%s5 + $0x70] sm:$0xff]
  %v2269 = vld [vmem:[%s5 + $0x78] sm:$0xff]
  %v2270 = vrot.slane %v2247, 4
  %2271 = vrot.lane.b32.xlu0 %v2270, 64
  %v2272 = vpop.permute.xlu0 %2271
  %v2273 = vsel %vm199, %v2272, 0
  %2275 = vmatprep.subr.mxu0 0.0
  %2276 = vmatpush1.msra.mxu0 0.0
  %2277 = vmatprep.subr.mxu0 0.0
  %2278 = vmatpush1.msra.mxu0 0.0
  %2279 = vmatprep.subr.mxu0 0.0
  %2280 = vmatpush1.msra.mxu0 0.0
  %2281 = vmatprep.subr.mxu0 0.0
  %2282 = vmatpush1.msra.mxu0 0.0
  %2283 = vmatprep.subr.mxu0 0.0
  %2284 = vmatpush1.msra.mxu0 0.0
  %2285 = vmatprep.subr.mxu0 0.0
  %2286 = vmatpush1.msra.mxu0 0.0
  %2287 = vmatprep.subr.mxu0 0.0
  %2288 = vmatpush1.msra.mxu0 0.0
  %2289 = vmatprep.subr.mxu0 0.0
  %2290 = vmatpush1.msra.mxu0 0.0
  %2291 = vmatprep.subr.mxu0 %v2269
  %2292 = vmatpush1.msra.mxu0 %v2268
  %2293 = vmatprep.subr.mxu0 %v2267
  %2294 = vmatpush1.msra.mxu0 %v2266
  %2295 = vmatprep.subr.mxu0 %v2265
  %2296 = vmatpush1.msra.mxu0 %v2264
  %2297 = vmatprep.subr.mxu0 %v2263
  %2298 = vmatpush1.msra.mxu0 %v2262
  %2299 = vmatprep.subr.mxu0 %v2261
  %2300 = vmatpush1.msra.mxu0 %v2260
  %2301 = vmatprep.subr.mxu0 %v2259
  %2302 = vmatpush1.msra.mxu0 %v2258
  %2303 = vmatprep.subr.mxu0 %v2257
  %2304 = vmatpush1.msra.mxu0 %v2256
  %2305 = vmatprep.subr.mxu0 %v2255
  %2306 = vmatpush1.msra.mxu0 %v2254
  %2307 = vmatprep.subr.mxu0 0.0
  %2308 = vmatpush2.msra.mxu0 0.0
  %2309 = vmatprep.subr.mxu0 0.0
  %2310 = vmatpush2.msra.mxu0 0.0
  %2311 = vmatprep.subr.mxu0 0.0
  %2312 = vmatpush2.msra.mxu0 0.0
  %2313 = vmatprep.subr.mxu0 0.0
  %2314 = vmatpush2.msra.mxu0 0.0
  %2315 = vmatprep.subr.mxu0 0.0
  %2316 = vmatpush2.msra.mxu0 0.0
  %2317 = vmatprep.subr.mxu0 0.0
  %2318 = vmatpush2.msra.mxu0 0.0
  %2319 = vmatprep.subr.mxu0 0.0
  %2320 = vmatpush2.msra.mxu0 0.0
  %2321 = vmatprep.subr.mxu0 0.0
  %2322 = vmatpush2.msra.mxu0 0.0
  %2323 = vmatprep.subr.mxu0 0.0
  %2324 = vmatpush2.msra.mxu0 0.0
  %2325 = vmatprep.subr.mxu0 0.0
  %2326 = vmatpush2.msra.mxu0 0.0
  %2327 = vmatprep.subr.mxu0 0.0
  %2328 = vmatpush2.msra.mxu0 0.0
  %2329 = vmatprep.subr.mxu0 0.0
  %2330 = vmatpush2.msra.mxu0 0.0
  %2331 = vmatprep.subr.mxu0 0.0
  %2332 = vmatpush2.msra.mxu0 0.0
  %2333 = vmatprep.subr.mxu0 0.0
  %2334 = vmatpush2.msra.mxu0 0.0
  %2335 = vmatprep.subr.mxu0 0.0
  %2336 = vmatpush2.msra.mxu0 0.0
  %2337 = vmatprep.subr.mxu0 0.0
  %2338 = vmatpush2.msra.mxu0 0.0
  %2339 = vmatprep.mubr.f32.mxu0 0.0
  %2340 = vmatmul.mubr.f32.gmra.mxu0 %v2273
  %v2341 = vpop.f32.mrf.mxu0
  %v2342 = vadd.f32 0.0, %v2341
  %v2343 = vpop.f32.mrf.mxu0
  %v2344 = vadd.f32 0.0, %v2343
  %2345 = vdwg.mxu0
  %v2348 = vrot.slane %v2342, 2
  %v2349 = vrot.slane %v2344, 2
  %v2352 = vadd.f32 %v1995, %v2348
  %v2353 = vadd.f32 %v1996, %v2349
  %v2354 = vmul.f32 %v2352, 0.5
  %v2355 = vmul.f32 %v2353, 0.5
  %v2356 = vsel %vm41, %v2352, %v2354
  %v2357 = vsel %vm42, %v2353, %v2355
  %v2358 = vtanh.pop %v2356
  %v2359 = vtanh.pop %v2357
  %v2360 = vadd.f32 %v2358, 1.0
  %v2361 = vadd.f32 %v2359, 1.0
  %v2362 = vmul.f32 %v2360, 0.5
  %v2363 = vmul.f32 %v2361, 0.5
  %v2364 = vsel %vm41, %v2358, %v2362
  %v2365 = vsel %vm42, %v2359, %v2363
  %v2367 = vrot.slane %v2245, 6
  %v2369 = vmul.f32 %v2364, %v2367
  %v2370 = vmul.f32 %v2364, %v2365
  %2372 = vrot.lane.b32.xlu0 %v2370, 64
  %v2373 = vpop.permute.xlu0 %2372
  %v2375 = vadd.f32 %v2369, %v2373
  %v2376 = vtanh.pop %v2375
  %v2377 = vmul.f32 %v2365, %v2376
  %2379 = vrot.lane.b32.xlu0 %v2377, 64
  %v2380 = vpop.permute.xlu0 %2379
  %2382 = vst.msk [vmem:[#allocation3 + $0x8] sm:$0xc0] %vm700, %v2380
  %2383 = vst.msk [vmem:[#allocation3 - $0x6] sm:$0xc0] %vm702, %v2380
  %v2384 = vld [vmem:[#allocation3] sm:$0xff]
  %v2385 = vld [vmem:[#allocation3 + $0x8] sm:$0xff]
  %v2386 = vld [vmem:[%s7] sm:$0x1]
  %v2388 = vlaneseq
  %v2389 = vshrl.u32 %v2388, 7
  %v2390 = vsub.s32 0, %v2389
  %v2391 = vrot.slane %v2386, %v2390
  %v2393 = vmul.f32 %v2384, %v2391
  %v2394 = vmul.f32 %v2385, %v2391
  %v2395 = vsel %vm199, %v2393, 0.0
  %2396 = vadd.xlane.f32.xlu0 %v2395
  %v2397 = vpop.xlane.xlu0 %2396
  %v2398 = vsel %vm199, %v2394, 0.0
  %2399 = vadd.xlane.f32.xlu0 %v2398
  %v2400 = vpop.xlane.xlu0 %2399
  %v2401 = vld [vmem:[#allocation4] sm:$0x1]
  %2403 = vset.pattern.permute.xlu0 0
  %2404 = vperm.xlu0 %2403, %v2401
  %v2405 = vpop.permute.xlu0 %2404
  %v2407 = vlaneseq
  %v2408 = vshrl.u32 %v2407, 7
  %v2409 = vsub.s32 0, %v2408
  %v2410 = vrot.slane %v2405, %v2409
  %v2411 = vadd.f32 %v2397, %v2410
  %v2412 = vadd.f32 %v2400, %v2410
  %v2413 = vxor.u32 %v2411, 2147483648
  %v2414 = vxor.u32 %v2412, 2147483648
  %v2415 = vmul.f32 %v2413, 1.442695
  %v2416 = vpow.pop %v2415
  %v2417 = vmul.f32 %v2414, 1.442695
  %v2418 = vpow.pop %v2417
  %v2419 = vadd.f32 %v2416, 1.0
  %v2420 = vadd.f32 %v2418, 1.0
  %v2421 = vrcp.pop %v2419
  %v2422 = vmul.f32 1.0, %v2421
  %v2423 = vrcp.pop %v2420
  %v2424 = vmul.f32 1.0, %v2423
  %v2425 = vmul.f32 %v2422, 3.0
  %v2426 = vmul.f32 %v2424, 3.0
  %v2429 = vlaneseq
  %v2430 = vshrl.u32 %v2429, 7
  %v2431 = vsub.s32 %v35, %v2430
  %v2432 = vrot.slane %v2425, %v2431
  %v2433 = vadd.s32 %v35, 4294967288
  %v2434 = vlaneseq
  %v2435 = vshrl.u32 %v2434, 7
  %v2436 = vsub.s32 %v2433, %v2435
  %v2437 = vrot.slane %v2426, %v2436
  %vm2438 = vcmask 130112
  %v2439 = vsel %vm2438, %v2437, %v2432
  %vm2441 = vcmask 122880
  %2442 = vst.msk [vmem:[%s9] sm:$0x1] %vm2441, %v2439
  // Predicated region
  $region38: #{_bilstm_regressor_forward.1} parent=0 // pred_check
    _
  $region39: #{_bilstm_regressor_forward.1} parent=0 // pred_check_branch
    %2444 = sbr.rel (0) target = $region41
  $region40: #{_bilstm_regressor_forward.1} parent=0 // pred_region
    _
  $region41: #{_bilstm_regressor_forward.1} parent=0 // pred_fallthru
    _
  // Predicated region
  $region42: #{_bilstm_regressor_forward.1} parent=0 // pred_check
    _
  $region43: #{_bilstm_regressor_forward.1} parent=0 // pred_check_branch
    %2446 = sbr.rel (0) target = $region45
  $region44: #{_bilstm_regressor_forward.1} parent=0 // pred_region
    _
  $region45: #{_bilstm_regressor_forward.1} parent=0 // pred_fallthru
    _

</llo_original>
